<compile_context>
chip_gen: v5e
topology: v5e:2x2
jax: 0.10.0
libtpu: 0.0.40
codegen_flags: <defaults>
</compile_context>

<pallas_src>
import jax
import jax.numpy as jnp
from jax.experimental import pallas as pl
from jax.experimental.pallas import tpu as pltpu

# ----------------------------- model dims (small) ---------------------------
BATCH = 2
IMG_C, IMG_H, IMG_W = 3, 16, 16
FEAT_DIM = 64        # backbone feature dim (resnet18 fc.in_features analogue)
PROJ_DIM = 256       # analogue of 2048
PRED_HID = 128       # analogue of 512
BN_EPS = 1e-5
K_RAW = 9 * IMG_C    # 27
K_PAD = 32           # lane-pad the im2col contraction dim


# ------------------------------- Pallas kernel -------------------------------
def simsiam_kernel(
    patches_ref, conv_w_ref, bn2d_g_ref, bn2d_b_ref,
    pw1_ref, pb1_ref, pg1_ref, pbe1_ref,
    pw2_ref, pb2_ref, pg2_ref, pbe2_ref,
    qw1_ref, qb1_ref, qg1_ref, qbe1_ref,
    qw2_ref, qb2_ref,
    loss_ref,
):
    """Both views (encoder + projector + predictor) and the negcos loss."""
    n = BATCH

    # Training-mode BatchNorm with biased variance (one-pass E[x^2]-E[x]^2).
    def bn(h, g, b):
        m = jnp.mean(h, axis=0, keepdims=True)
        v = jnp.mean(h * h, axis=0, keepdims=True) - m * m
        return (h - m) * jax.lax.rsqrt(v + BN_EPS) * g + b

    def linear_bn(x, w_ref, b_ref, g_ref, be_ref, relu):
        h = jnp.dot(x.astype(jnp.bfloat16), w_ref[...],
                    preferred_element_type=jnp.float32) + b_ref[...]
        h = bn(h, g_ref[...], be_ref[...])
        return jnp.maximum(h, 0.0) if relu else h

    def encode(view):
        # conv3x3 (no bias) as one flat matmul: (N*HW, Kp) x (Kp, F) -> f32
        conv = jnp.dot(patches_ref[view], conv_w_ref[...],
                       preferred_element_type=jnp.float32)
        # BatchNorm2d (stats over N and HW) + ReLU
        y = jnp.maximum(bn(conv, bn2d_g_ref[...], bn2d_b_ref[...]), 0.0)
        # global average pool per sample (static row-block slices)
        hw = y.shape[0] // n
        feats = jnp.concatenate(
            [jnp.mean(y[i * hw:(i + 1) * hw], axis=0, keepdims=True)
             for i in range(n)],
            axis=0,
        )                                                        # (N, F) f32
        # projector (enc.fc): Linear->BN->ReLU->Linear->BN
        h1 = linear_bn(feats, pw1_ref, pb1_ref, pg1_ref, pbe1_ref, relu=True)
        z = linear_bn(h1, pw2_ref, pb2_ref, pg2_ref, pbe2_ref, relu=False)
        # predictor: Linear->BN->ReLU->Linear
        g1 = linear_bn(z, qw1_ref, qb1_ref, qg1_ref, qbe1_ref, relu=True)
        p = jnp.dot(g1.astype(jnp.bfloat16), qw2_ref[...],
                    preferred_element_type=jnp.float32) + qb2_ref[...]
        return z, p

    z1, p1 = encode(0)
    z2, p2 = encode(1)

    # F.normalize(dim=1, eps=1e-12): rsqrt(max(sumsq, eps^2)) == 1/max(||x||, eps)
    def _norm(x):
        ss = jnp.sum(x * x, axis=1, keepdims=True)
        return x * jax.lax.rsqrt(jnp.maximum(ss, 1e-24))

    # z.detach() only affects gradients; forward value is identical.
    s = (jnp.sum(_norm(p1) * _norm(z2), axis=1, keepdims=True)
         + jnp.sum(_norm(p2) * _norm(z1), axis=1, keepdims=True))   # (N, 1)
    loss_ref[...] = (-0.5 / n) * jnp.sum(s, axis=0, keepdims=True)  # (1, 1)


# ------------------------------- Pallas wrapper ------------------------------
def simsiam_fused(patches, conv_w, params):
    # patches: (2, N*HW, K_PAD) bf16; conv_w: (K_PAD, FEAT) bf16.
    # No grid: everything (< 1 MiB of weights + patches) sits in VMEM for the
    # single invocation; the only HBM output is the (1, 1) loss.
    loss = pl.pallas_call(
        simsiam_kernel,
        out_shape=jax.ShapeDtypeStruct((1, 1), jnp.float32),
    )(
        patches, conv_w,
        params["bn2d_g"].reshape(1, FEAT_DIM), params["bn2d_b"].reshape(1, FEAT_DIM),
        params["proj_w1"].astype(jnp.bfloat16), params["proj_b1"],
        params["proj_g1"], params["proj_be1"],
        params["proj_w2"].astype(jnp.bfloat16), params["proj_b2"],
        params["proj_g2"], params["proj_be2"],
        params["pred_w1"].astype(jnp.bfloat16), params["pred_b1"],
        params["pred_g1"], params["pred_be1"],
        params["pred_w2"].astype(jnp.bfloat16), params["pred_b2"],
    )
    return loss[0, 0]


# ------------------------------- model glue ----------------------------------
def _im2col(x_nhwc):
    # 3x3 conv, stride 1, pad 1 -> patches (N*H*W, K_PAD) in (kh, kw, Cin) order,
    # contraction dim zero-padded from 27 to 32 for lane packing.
    N, H, W, Cin = x_nhwc.shape
    xp = jnp.pad(x_nhwc, ((0, 0), (1, 1), (1, 1), (0, 0)))
    patches = jnp.concatenate(
        [xp[:, di:di + H, dj:dj + W, :] for di in range(3) for dj in range(3)],
        axis=-1,
    ).reshape(N, H * W, 9 * Cin)
    patches = jnp.pad(patches, ((0, 0), (0, 0), (0, K_PAD - 9 * Cin)))
    return patches.reshape(N * H * W, K_PAD)


def simsiam_forward(x1, x2, params):
    # TODO(synk): ResNet18 residual stages (layer1-layer4) are omitted; the
    # backbone here is reduced to its cifar conv stem + BN + ReLU + global avg pool.
    patches = jnp.stack(
        [_im2col(jnp.transpose(x, (0, 2, 3, 1))) for x in (x1, x2)], axis=0
    ).astype(jnp.bfloat16)                                       # (2, N*HW, K_PAD)
    conv_w = jnp.pad(
        params["conv_w"], ((0, K_PAD - K_RAW), (0, 0))
    ).astype(jnp.bfloat16)                                       # (K_PAD, FEAT)
    return simsiam_fused(patches, conv_w, params)


# ------------------------------- param init ----------------------------------
def _linear_init(key, fan_in, fan_out):
    kw, kb = jax.random.split(key)
    bound = 1.0 / jnp.sqrt(jnp.asarray(fan_in, jnp.float32))
    w = jax.random.uniform(kw, (fan_in, fan_out), jnp.float32, -bound, bound)
    b = jax.random.uniform(kb, (1, fan_out), jnp.float32, -bound, bound)
    return w, b


def init_params(key):
    ks = jax.random.split(key, 8)
    params = {}
    # conv1: Conv2d(3, FEAT_DIM, 3, 1, 1, bias=False) as (9*Cin, Cout) matrix
    params["conv_w"] = (
        jax.random.normal(ks[0], (K_RAW, FEAT_DIM), jnp.float32)
        * jnp.sqrt(2.0 / K_RAW)
    )
    params["bn2d_g"] = jnp.ones((FEAT_DIM,), jnp.float32)
    params["bn2d_b"] = jnp.zeros((FEAT_DIM,), jnp.float32)

    # projector (enc.fc): Linear -> BN -> ReLU -> Linear -> BN
    params["proj_w1"], params["proj_b1"] = _linear_init(ks[1], FEAT_DIM, PROJ_DIM)
    params["proj_g1"] = jnp.ones((1, PROJ_DIM), jnp.float32)
    params["proj_be1"] = jnp.zeros((1, PROJ_DIM), jnp.float32)
    params["proj_w2"], params["proj_b2"] = _linear_init(ks[2], PROJ_DIM, PROJ_DIM)
    params["proj_g2"] = jnp.ones((1, PROJ_DIM), jnp.float32)
    params["proj_be2"] = jnp.zeros((1, PROJ_DIM), jnp.float32)

    # predictor: Linear -> BN -> ReLU -> Linear
    params["pred_w1"], params["pred_b1"] = _linear_init(ks[3], PROJ_DIM, PRED_HID)
    params["pred_g1"] = jnp.ones((1, PRED_HID), jnp.float32)
    params["pred_be1"] = jnp.zeros((1, PRED_HID), jnp.float32)
    params["pred_w2"], params["pred_b2"] = _linear_init(ks[4], PRED_HID, PROJ_DIM)
    return params


# ----------------------------------- main -------------------------------------
if __name__ == "__main__":
    key = jax.random.PRNGKey(0)
    k1, k2, kp = jax.random.split(key, 3)
    x1 = jax.random.normal(k1, (BATCH, IMG_C, IMG_H, IMG_W), jnp.float32)
    x2 = jax.random.normal(k2, (BATCH, IMG_C, IMG_H, IMG_W), jnp.float32)
    params = init_params(kp)

    loss = jax.jit(simsiam_forward)(x1, x2, params)
    jax.block_until_ready(loss)
    assert loss.shape == () and jnp.isfinite(loss)
    print("KERNEL_OK")
</pallas_src>

<mosaic_0001>
module attributes {stable_mosaic.version = 11 : i64} {
  func.func @simsiam_kernel(%arg0: memref<2x512x32xbf16, #tpu.memory_space<vmem>>, %arg1: memref<32x64xbf16, #tpu.memory_space<vmem>>, %arg2: memref<1x64xf32, #tpu.memory_space<vmem>>, %arg3: memref<1x64xf32, #tpu.memory_space<vmem>>, %arg4: memref<64x256xbf16, #tpu.memory_space<vmem>>, %arg5: memref<1x256xf32, #tpu.memory_space<vmem>>, %arg6: memref<1x256xf32, #tpu.memory_space<vmem>>, %arg7: memref<1x256xf32, #tpu.memory_space<vmem>>, %arg8: memref<256x256xbf16, #tpu.memory_space<vmem>>, %arg9: memref<1x256xf32, #tpu.memory_space<vmem>>, %arg10: memref<1x256xf32, #tpu.memory_space<vmem>>, %arg11: memref<1x256xf32, #tpu.memory_space<vmem>>, %arg12: memref<256x128xbf16, #tpu.memory_space<vmem>>, %arg13: memref<1x128xf32, #tpu.memory_space<vmem>>, %arg14: memref<1x128xf32, #tpu.memory_space<vmem>>, %arg15: memref<1x128xf32, #tpu.memory_space<vmem>>, %arg16: memref<128x256xbf16, #tpu.memory_space<vmem>>, %arg17: memref<1x256xf32, #tpu.memory_space<vmem>>, %arg18: memref<1x1xf32, #tpu.memory_space<vmem>>) attributes {dimension_semantics = [], scalar_prefetch = 0 : i64, scratch_operands = 0 : i64, tpu.core_type = #tpu.core_type<tc>} {
    %c0 = arith.constant 0 : index
    %c0_0 = arith.constant 0 : index
    %c0_1 = arith.constant 0 : index
    %0 = vector.load %arg0[%c0, %c0_0, %c0_1] : memref<2x512x32xbf16, #tpu.memory_space<vmem>>, vector<1x512x32xbf16>
    %1 = vector.shape_cast %0 : vector<1x512x32xbf16> to vector<512x32xbf16>
    %c0_2 = arith.constant 0 : index
    %c0_3 = arith.constant 0 : index
    %2 = vector.load %arg1[%c0_2, %c0_3] : memref<32x64xbf16, #tpu.memory_space<vmem>>, vector<32x64xbf16>
    %cst = arith.constant dense<0.000000e+00> : vector<512x64xf32>
    %3 = tpu.matmul %1, %2, %cst {dimension_numbers = #tpu.dot_dimension_numbers<[1], [0], [0], [1], [0, 0, 1, 1], [], []>} : vector<512x32xbf16>, vector<32x64xbf16>, vector<512x64xf32> -> vector<512x64xf32>
    %c0_4 = arith.constant 0 : index
    %c0_5 = arith.constant 0 : index
    %4 = vector.load %arg2[%c0_4, %c0_5] : memref<1x64xf32, #tpu.memory_space<vmem>>, vector<1x64xf32>
    %c0_6 = arith.constant 0 : index
    %c0_7 = arith.constant 0 : index
    %5 = vector.load %arg3[%c0_6, %c0_7] : memref<1x64xf32, #tpu.memory_space<vmem>>, vector<1x64xf32>
    %cst_8 = arith.constant dense<0.000000e+00> : vector<64xf32>
    %6 = vector.multi_reduction <add>, %3, %cst_8 [0] : vector<512x64xf32> to vector<64xf32>
    %7 = vector.shape_cast %6 : vector<64xf32> to vector<1x64xf32>
    %cst_9 = arith.constant 5.120000e+02 : f32
    %8 = vector.broadcast %cst_9 : f32 to vector<1x64xf32>
    %9 = arith.divf %7, %8 : vector<1x64xf32>
    %10 = arith.mulf %3, %3 : vector<512x64xf32>
    %cst_10 = arith.constant dense<0.000000e+00> : vector<64xf32>
    %11 = vector.multi_reduction <add>, %10, %cst_10 [0] : vector<512x64xf32> to vector<64xf32>
    %12 = vector.shape_cast %11 : vector<64xf32> to vector<1x64xf32>
    %cst_11 = arith.constant 5.120000e+02 : f32
    %13 = vector.broadcast %cst_11 : f32 to vector<1x64xf32>
    %14 = arith.divf %12, %13 : vector<1x64xf32>
    %15 = arith.mulf %9, %9 : vector<1x64xf32>
    %16 = arith.subf %14, %15 : vector<1x64xf32>
    %17 = vector.broadcast %9 : vector<1x64xf32> to vector<512x64xf32>
    %18 = arith.subf %3, %17 : vector<512x64xf32>
    %cst_12 = arith.constant 9.99999974E-6 : f32
    %19 = vector.broadcast %cst_12 : f32 to vector<1x64xf32>
    %20 = arith.addf %16, %19 : vector<1x64xf32>
    %21 = math.rsqrt %20 : vector<1x64xf32>
    %22 = vector.broadcast %21 : vector<1x64xf32> to vector<512x64xf32>
    %23 = arith.mulf %18, %22 : vector<512x64xf32>
    %24 = vector.broadcast %4 : vector<1x64xf32> to vector<512x64xf32>
    %25 = arith.mulf %23, %24 : vector<512x64xf32>
    %26 = vector.broadcast %5 : vector<1x64xf32> to vector<512x64xf32>
    %27 = arith.addf %25, %26 : vector<512x64xf32>
    %cst_13 = arith.constant 0.000000e+00 : f32
    %28 = vector.broadcast %cst_13 : f32 to vector<512x64xf32>
    %29 = arith.maximumf %27, %28 : vector<512x64xf32>
    %30 = vector.extract_strided_slice %29 {offsets = [0, 0], sizes = [256, 64], strides = [1, 1]} : vector<512x64xf32> to vector<256x64xf32>
    %cst_14 = arith.constant dense<0.000000e+00> : vector<64xf32>
    %31 = vector.multi_reduction <add>, %30, %cst_14 [0] : vector<256x64xf32> to vector<64xf32>
    %32 = vector.shape_cast %31 : vector<64xf32> to vector<1x64xf32>
    %cst_15 = arith.constant 2.560000e+02 : f32
    %33 = vector.broadcast %cst_15 : f32 to vector<1x64xf32>
    %34 = arith.divf %32, %33 : vector<1x64xf32>
    %35 = vector.extract_strided_slice %29 {offsets = [256, 0], sizes = [256, 64], strides = [1, 1]} : vector<512x64xf32> to vector<256x64xf32>
    %cst_16 = arith.constant dense<0.000000e+00> : vector<64xf32>
    %36 = vector.multi_reduction <add>, %35, %cst_16 [0] : vector<256x64xf32> to vector<64xf32>
    %37 = vector.shape_cast %36 : vector<64xf32> to vector<1x64xf32>
    %cst_17 = arith.constant 2.560000e+02 : f32
    %38 = vector.broadcast %cst_17 : f32 to vector<1x64xf32>
    %39 = arith.divf %37, %38 : vector<1x64xf32>
    %40 = tpu.concatenate %34, %39 in 0 : vector<1x64xf32>, vector<1x64xf32> -> vector<2x64xf32>
    %41 = arith.truncf %40 : vector<2x64xf32> to vector<2x64xbf16>
    %c0_18 = arith.constant 0 : index
    %c0_19 = arith.constant 0 : index
    %42 = vector.load %arg4[%c0_18, %c0_19] : memref<64x256xbf16, #tpu.memory_space<vmem>>, vector<64x256xbf16>
    %cst_20 = arith.constant dense<0.000000e+00> : vector<2x256xf32>
    %43 = tpu.matmul %41, %42, %cst_20 {dimension_numbers = #tpu.dot_dimension_numbers<[1], [0], [0], [1], [0, 0, 1, 1], [], []>} : vector<2x64xbf16>, vector<64x256xbf16>, vector<2x256xf32> -> vector<2x256xf32>
    %c0_21 = arith.constant 0 : index
    %c0_22 = arith.constant 0 : index
    %44 = vector.load %arg5[%c0_21, %c0_22] : memref<1x256xf32, #tpu.memory_space<vmem>>, vector<1x256xf32>
    %45 = vector.broadcast %44 : vector<1x256xf32> to vector<2x256xf32>
    %46 = arith.addf %43, %45 : vector<2x256xf32>
    %c0_23 = arith.constant 0 : index
    %c0_24 = arith.constant 0 : index
    %47 = vector.load %arg6[%c0_23, %c0_24] : memref<1x256xf32, #tpu.memory_space<vmem>>, vector<1x256xf32>
    %c0_25 = arith.constant 0 : index
    %c0_26 = arith.constant 0 : index
    %48 = vector.load %arg7[%c0_25, %c0_26] : memref<1x256xf32, #tpu.memory_space<vmem>>, vector<1x256xf32>
    %cst_27 = arith.constant dense<0.000000e+00> : vector<256xf32>
    %49 = vector.multi_reduction <add>, %46, %cst_27 [0] : vector<2x256xf32> to vector<256xf32>
    %50 = vector.shape_cast %49 : vector<256xf32> to vector<1x256xf32>
    %cst_28 = arith.constant 2.000000e+00 : f32
    %51 = vector.broadcast %cst_28 : f32 to vector<1x256xf32>
    %52 = arith.divf %50, %51 : vector<1x256xf32>
    %53 = arith.mulf %46, %46 : vector<2x256xf32>
    %cst_29 = arith.constant dense<0.000000e+00> : vector<256xf32>
    %54 = vector.multi_reduction <add>, %53, %cst_29 [0] : vector<2x256xf32> to vector<256xf32>
    %55 = vector.shape_cast %54 : vector<256xf32> to vector<1x256xf32>
    %cst_30 = arith.constant 2.000000e+00 : f32
    %56 = vector.broadcast %cst_30 : f32 to vector<1x256xf32>
    %57 = arith.divf %55, %56 : vector<1x256xf32>
    %58 = arith.mulf %52, %52 : vector<1x256xf32>
    %59 = arith.subf %57, %58 : vector<1x256xf32>
    %60 = vector.broadcast %52 : vector<1x256xf32> to vector<2x256xf32>
    %61 = arith.subf %46, %60 : vector<2x256xf32>
    %cst_31 = arith.constant 9.99999974E-6 : f32
    %62 = vector.broadcast %cst_31 : f32 to vector<1x256xf32>
    %63 = arith.addf %59, %62 : vector<1x256xf32>
    %64 = math.rsqrt %63 : vector<1x256xf32>
    %65 = vector.broadcast %64 : vector<1x256xf32> to vector<2x256xf32>
    %66 = arith.mulf %61, %65 : vector<2x256xf32>
    %67 = vector.broadcast %47 : vector<1x256xf32> to vector<2x256xf32>
    %68 = arith.mulf %66, %67 : vector<2x256xf32>
    %69 = vector.broadcast %48 : vector<1x256xf32> to vector<2x256xf32>
    %70 = arith.addf %68, %69 : vector<2x256xf32>
    %cst_32 = arith.constant 0.000000e+00 : f32
    %71 = vector.broadcast %cst_32 : f32 to vector<2x256xf32>
    %72 = arith.maximumf %70, %71 : vector<2x256xf32>
    %73 = arith.truncf %72 : vector<2x256xf32> to vector<2x256xbf16>
    %c0_33 = arith.constant 0 : index
    %c0_34 = arith.constant 0 : index
    %74 = vector.load %arg8[%c0_33, %c0_34] : memref<256x256xbf16, #tpu.memory_space<vmem>>, vector<256x256xbf16>
    %cst_35 = arith.constant dense<0.000000e+00> : vector<2x256xf32>
    %75 = tpu.matmul %73, %74, %cst_35 {dimension_numbers = #tpu.dot_dimension_numbers<[1], [0], [0], [1], [0, 0, 1, 1], [], []>} : vector<2x256xbf16>, vector<256x256xbf16>, vector<2x256xf32> -> vector<2x256xf32>
    %c0_36 = arith.constant 0 : index
    %c0_37 = arith.constant 0 : index
    %76 = vector.load %arg9[%c0_36, %c0_37] : memref<1x256xf32, #tpu.memory_space<vmem>>, vector<1x256xf32>
    %77 = vector.broadcast %76 : vector<1x256xf32> to vector<2x256xf32>
    %78 = arith.addf %75, %77 : vector<2x256xf32>
    %c0_38 = arith.constant 0 : index
    %c0_39 = arith.constant 0 : index
    %79 = vector.load %arg10[%c0_38, %c0_39] : memref<1x256xf32, #tpu.memory_space<vmem>>, vector<1x256xf32>
    %c0_40 = arith.constant 0 : index
    %c0_41 = arith.constant 0 : index
    %80 = vector.load %arg11[%c0_40, %c0_41] : memref<1x256xf32, #tpu.memory_space<vmem>>, vector<1x256xf32>
    %cst_42 = arith.constant dense<0.000000e+00> : vector<256xf32>
    %81 = vector.multi_reduction <add>, %78, %cst_42 [0] : vector<2x256xf32> to vector<256xf32>
    %82 = vector.shape_cast %81 : vector<256xf32> to vector<1x256xf32>
    %cst_43 = arith.constant 2.000000e+00 : f32
    %83 = vector.broadcast %cst_43 : f32 to vector<1x256xf32>
    %84 = arith.divf %82, %83 : vector<1x256xf32>
    %85 = arith.mulf %78, %78 : vector<2x256xf32>
    %cst_44 = arith.constant dense<0.000000e+00> : vector<256xf32>
    %86 = vector.multi_reduction <add>, %85, %cst_44 [0] : vector<2x256xf32> to vector<256xf32>
    %87 = vector.shape_cast %86 : vector<256xf32> to vector<1x256xf32>
    %cst_45 = arith.constant 2.000000e+00 : f32
    %88 = vector.broadcast %cst_45 : f32 to vector<1x256xf32>
    %89 = arith.divf %87, %88 : vector<1x256xf32>
    %90 = arith.mulf %84, %84 : vector<1x256xf32>
    %91 = arith.subf %89, %90 : vector<1x256xf32>
    %92 = vector.broadcast %84 : vector<1x256xf32> to vector<2x256xf32>
    %93 = arith.subf %78, %92 : vector<2x256xf32>
    %cst_46 = arith.constant 9.99999974E-6 : f32
    %94 = vector.broadcast %cst_46 : f32 to vector<1x256xf32>
    %95 = arith.addf %91, %94 : vector<1x256xf32>
    %96 = math.rsqrt %95 : vector<1x256xf32>
    %97 = vector.broadcast %96 : vector<1x256xf32> to vector<2x256xf32>
    %98 = arith.mulf %93, %97 : vector<2x256xf32>
    %99 = vector.broadcast %79 : vector<1x256xf32> to vector<2x256xf32>
    %100 = arith.mulf %98, %99 : vector<2x256xf32>
    %101 = vector.broadcast %80 : vector<1x256xf32> to vector<2x256xf32>
    %102 = arith.addf %100, %101 : vector<2x256xf32>
    %103 = arith.truncf %102 : vector<2x256xf32> to vector<2x256xbf16>
    %c0_47 = arith.constant 0 : index
    %c0_48 = arith.constant 0 : index
    %104 = vector.load %arg12[%c0_47, %c0_48] : memref<256x128xbf16, #tpu.memory_space<vmem>>, vector<256x128xbf16>
    %cst_49 = arith.constant dense<0.000000e+00> : vector<2x128xf32>
    %105 = tpu.matmul %103, %104, %cst_49 {dimension_numbers = #tpu.dot_dimension_numbers<[1], [0], [0], [1], [0, 0, 1, 1], [], []>} : vector<2x256xbf16>, vector<256x128xbf16>, vector<2x128xf32> -> vector<2x128xf32>
    %c0_50 = arith.constant 0 : index
    %c0_51 = arith.constant 0 : index
    %106 = vector.load %arg13[%c0_50, %c0_51] : memref<1x128xf32, #tpu.memory_space<vmem>>, vector<1x128xf32>
    %107 = vector.broadcast %106 : vector<1x128xf32> to vector<2x128xf32>
    %108 = arith.addf %105, %107 : vector<2x128xf32>
    %c0_52 = arith.constant 0 : index
    %c0_53 = arith.constant 0 : index
    %109 = vector.load %arg14[%c0_52, %c0_53] : memref<1x128xf32, #tpu.memory_space<vmem>>, vector<1x128xf32>
    %c0_54 = arith.constant 0 : index
    %c0_55 = arith.constant 0 : index
    %110 = vector.load %arg15[%c0_54, %c0_55] : memref<1x128xf32, #tpu.memory_space<vmem>>, vector<1x128xf32>
    %cst_56 = arith.constant dense<0.000000e+00> : vector<128xf32>
    %111 = vector.multi_reduction <add>, %108, %cst_56 [0] : vector<2x128xf32> to vector<128xf32>
    %112 = vector.shape_cast %111 : vector<128xf32> to vector<1x128xf32>
    %cst_57 = arith.constant 2.000000e+00 : f32
    %113 = vector.broadcast %cst_57 : f32 to vector<1x128xf32>
    %114 = arith.divf %112, %113 : vector<1x128xf32>
    %115 = arith.mulf %108, %108 : vector<2x128xf32>
    %cst_58 = arith.constant dense<0.000000e+00> : vector<128xf32>
    %116 = vector.multi_reduction <add>, %115, %cst_58 [0] : vector<2x128xf32> to vector<128xf32>
    %117 = vector.shape_cast %116 : vector<128xf32> to vector<1x128xf32>
    %cst_59 = arith.constant 2.000000e+00 : f32
    %118 = vector.broadcast %cst_59 : f32 to vector<1x128xf32>
    %119 = arith.divf %117, %118 : vector<1x128xf32>
    %120 = arith.mulf %114, %114 : vector<1x128xf32>
    %121 = arith.subf %119, %120 : vector<1x128xf32>
    %122 = vector.broadcast %114 : vector<1x128xf32> to vector<2x128xf32>
    %123 = arith.subf %108, %122 : vector<2x128xf32>
    %cst_60 = arith.constant 9.99999974E-6 : f32
    %124 = vector.broadcast %cst_60 : f32 to vector<1x128xf32>
    %125 = arith.addf %121, %124 : vector<1x128xf32>
    %126 = math.rsqrt %125 : vector<1x128xf32>
    %127 = vector.broadcast %126 : vector<1x128xf32> to vector<2x128xf32>
    %128 = arith.mulf %123, %127 : vector<2x128xf32>
    %129 = vector.broadcast %109 : vector<1x128xf32> to vector<2x128xf32>
    %130 = arith.mulf %128, %129 : vector<2x128xf32>
    %131 = vector.broadcast %110 : vector<1x128xf32> to vector<2x128xf32>
    %132 = arith.addf %130, %131 : vector<2x128xf32>
    %cst_61 = arith.constant 0.000000e+00 : f32
    %133 = vector.broadcast %cst_61 : f32 to vector<2x128xf32>
    %134 = arith.maximumf %132, %133 : vector<2x128xf32>
    %135 = arith.truncf %134 : vector<2x128xf32> to vector<2x128xbf16>
    %c0_62 = arith.constant 0 : index
    %c0_63 = arith.constant 0 : index
    %136 = vector.load %arg16[%c0_62, %c0_63] : memref<128x256xbf16, #tpu.memory_space<vmem>>, vector<128x256xbf16>
    %cst_64 = arith.constant dense<0.000000e+00> : vector<2x256xf32>
    %137 = tpu.matmul %135, %136, %cst_64 {dimension_numbers = #tpu.dot_dimension_numbers<[1], [0], [0], [1], [0, 0, 1, 1], [], []>} : vector<2x128xbf16>, vector<128x256xbf16>, vector<2x256xf32> -> vector<2x256xf32>
    %c0_65 = arith.constant 0 : index
    %c0_66 = arith.constant 0 : index
    %138 = vector.load %arg17[%c0_65, %c0_66] : memref<1x256xf32, #tpu.memory_space<vmem>>, vector<1x256xf32>
    %139 = vector.broadcast %138 : vector<1x256xf32> to vector<2x256xf32>
    %140 = arith.addf %137, %139 : vector<2x256xf32>
    %c1 = arith.constant 1 : index
    %c0_67 = arith.constant 0 : index
    %c0_68 = arith.constant 0 : index
    %141 = vector.load %arg0[%c1, %c0_67, %c0_68] : memref<2x512x32xbf16, #tpu.memory_space<vmem>>, vector<1x512x32xbf16>
    %142 = vector.shape_cast %141 : vector<1x512x32xbf16> to vector<512x32xbf16>
    %c0_69 = arith.constant 0 : index
    %c0_70 = arith.constant 0 : index
    %143 = vector.load %arg1[%c0_69, %c0_70] : memref<32x64xbf16, #tpu.memory_space<vmem>>, vector<32x64xbf16>
    %cst_71 = arith.constant dense<0.000000e+00> : vector<512x64xf32>
    %144 = tpu.matmul %142, %143, %cst_71 {dimension_numbers = #tpu.dot_dimension_numbers<[1], [0], [0], [1], [0, 0, 1, 1], [], []>} : vector<512x32xbf16>, vector<32x64xbf16>, vector<512x64xf32> -> vector<512x64xf32>
    %c0_72 = arith.constant 0 : index
    %c0_73 = arith.constant 0 : index
    %145 = vector.load %arg2[%c0_72, %c0_73] : memref<1x64xf32, #tpu.memory_space<vmem>>, vector<1x64xf32>
    %c0_74 = arith.constant 0 : index
    %c0_75 = arith.constant 0 : index
    %146 = vector.load %arg3[%c0_74, %c0_75] : memref<1x64xf32, #tpu.memory_space<vmem>>, vector<1x64xf32>
    %cst_76 = arith.constant dense<0.000000e+00> : vector<64xf32>
    %147 = vector.multi_reduction <add>, %144, %cst_76 [0] : vector<512x64xf32> to vector<64xf32>
    %148 = vector.shape_cast %147 : vector<64xf32> to vector<1x64xf32>
    %cst_77 = arith.constant 5.120000e+02 : f32
    %149 = vector.broadcast %cst_77 : f32 to vector<1x64xf32>
    %150 = arith.divf %148, %149 : vector<1x64xf32>
    %151 = arith.mulf %144, %144 : vector<512x64xf32>
    %cst_78 = arith.constant dense<0.000000e+00> : vector<64xf32>
    %152 = vector.multi_reduction <add>, %151, %cst_78 [0] : vector<512x64xf32> to vector<64xf32>
    %153 = vector.shape_cast %152 : vector<64xf32> to vector<1x64xf32>
    %cst_79 = arith.constant 5.120000e+02 : f32
    %154 = vector.broadcast %cst_79 : f32 to vector<1x64xf32>
    %155 = arith.divf %153, %154 : vector<1x64xf32>
    %156 = arith.mulf %150, %150 : vector<1x64xf32>
    %157 = arith.subf %155, %156 : vector<1x64xf32>
    %158 = vector.broadcast %150 : vector<1x64xf32> to vector<512x64xf32>
    %159 = arith.subf %144, %158 : vector<512x64xf32>
    %cst_80 = arith.constant 9.99999974E-6 : f32
    %160 = vector.broadcast %cst_80 : f32 to vector<1x64xf32>
    %161 = arith.addf %157, %160 : vector<1x64xf32>
    %162 = math.rsqrt %161 : vector<1x64xf32>
    %163 = vector.broadcast %162 : vector<1x64xf32> to vector<512x64xf32>
    %164 = arith.mulf %159, %163 : vector<512x64xf32>
    %165 = vector.broadcast %145 : vector<1x64xf32> to vector<512x64xf32>
    %166 = arith.mulf %164, %165 : vector<512x64xf32>
    %167 = vector.broadcast %146 : vector<1x64xf32> to vector<512x64xf32>
    %168 = arith.addf %166, %167 : vector<512x64xf32>
    %cst_81 = arith.constant 0.000000e+00 : f32
    %169 = vector.broadcast %cst_81 : f32 to vector<512x64xf32>
    %170 = arith.maximumf %168, %169 : vector<512x64xf32>
    %171 = vector.extract_strided_slice %170 {offsets = [0, 0], sizes = [256, 64], strides = [1, 1]} : vector<512x64xf32> to vector<256x64xf32>
    %cst_82 = arith.constant dense<0.000000e+00> : vector<64xf32>
    %172 = vector.multi_reduction <add>, %171, %cst_82 [0] : vector<256x64xf32> to vector<64xf32>
    %173 = vector.shape_cast %172 : vector<64xf32> to vector<1x64xf32>
    %cst_83 = arith.constant 2.560000e+02 : f32
    %174 = vector.broadcast %cst_83 : f32 to vector<1x64xf32>
    %175 = arith.divf %173, %174 : vector<1x64xf32>
    %176 = vector.extract_strided_slice %170 {offsets = [256, 0], sizes = [256, 64], strides = [1, 1]} : vector<512x64xf32> to vector<256x64xf32>
    %cst_84 = arith.constant dense<0.000000e+00> : vector<64xf32>
    %177 = vector.multi_reduction <add>, %176, %cst_84 [0] : vector<256x64xf32> to vector<64xf32>
    %178 = vector.shape_cast %177 : vector<64xf32> to vector<1x64xf32>
    %cst_85 = arith.constant 2.560000e+02 : f32
    %179 = vector.broadcast %cst_85 : f32 to vector<1x64xf32>
    %180 = arith.divf %178, %179 : vector<1x64xf32>
    %181 = tpu.concatenate %175, %180 in 0 : vector<1x64xf32>, vector<1x64xf32> -> vector<2x64xf32>
    %182 = arith.truncf %181 : vector<2x64xf32> to vector<2x64xbf16>
    %c0_86 = arith.constant 0 : index
    %c0_87 = arith.constant 0 : index
    %183 = vector.load %arg4[%c0_86, %c0_87] : memref<64x256xbf16, #tpu.memory_space<vmem>>, vector<64x256xbf16>
    %cst_88 = arith.constant dense<0.000000e+00> : vector<2x256xf32>
    %184 = tpu.matmul %182, %183, %cst_88 {dimension_numbers = #tpu.dot_dimension_numbers<[1], [0], [0], [1], [0, 0, 1, 1], [], []>} : vector<2x64xbf16>, vector<64x256xbf16>, vector<2x256xf32> -> vector<2x256xf32>
    %c0_89 = arith.constant 0 : index
    %c0_90 = arith.constant 0 : index
    %185 = vector.load %arg5[%c0_89, %c0_90] : memref<1x256xf32, #tpu.memory_space<vmem>>, vector<1x256xf32>
    %186 = vector.broadcast %185 : vector<1x256xf32> to vector<2x256xf32>
    %187 = arith.addf %184, %186 : vector<2x256xf32>
    %c0_91 = arith.constant 0 : index
    %c0_92 = arith.constant 0 : index
    %188 = vector.load %arg6[%c0_91, %c0_92] : memref<1x256xf32, #tpu.memory_space<vmem>>, vector<1x256xf32>
    %c0_93 = arith.constant 0 : index
    %c0_94 = arith.constant 0 : index
    %189 = vector.load %arg7[%c0_93, %c0_94] : memref<1x256xf32, #tpu.memory_space<vmem>>, vector<1x256xf32>
    %cst_95 = arith.constant dense<0.000000e+00> : vector<256xf32>
    %190 = vector.multi_reduction <add>, %187, %cst_95 [0] : vector<2x256xf32> to vector<256xf32>
    %191 = vector.shape_cast %190 : vector<256xf32> to vector<1x256xf32>
    %cst_96 = arith.constant 2.000000e+00 : f32
    %192 = vector.broadcast %cst_96 : f32 to vector<1x256xf32>
    %193 = arith.divf %191, %192 : vector<1x256xf32>
    %194 = arith.mulf %187, %187 : vector<2x256xf32>
    %cst_97 = arith.constant dense<0.000000e+00> : vector<256xf32>
    %195 = vector.multi_reduction <add>, %194, %cst_97 [0] : vector<2x256xf32> to vector<256xf32>
    %196 = vector.shape_cast %195 : vector<256xf32> to vector<1x256xf32>
    %cst_98 = arith.constant 2.000000e+00 : f32
    %197 = vector.broadcast %cst_98 : f32 to vector<1x256xf32>
    %198 = arith.divf %196, %197 : vector<1x256xf32>
    %199 = arith.mulf %193, %193 : vector<1x256xf32>
    %200 = arith.subf %198, %199 : vector<1x256xf32>
    %201 = vector.broadcast %193 : vector<1x256xf32> to vector<2x256xf32>
    %202 = arith.subf %187, %201 : vector<2x256xf32>
    %cst_99 = arith.constant 9.99999974E-6 : f32
    %203 = vector.broadcast %cst_99 : f32 to vector<1x256xf32>
    %204 = arith.addf %200, %203 : vector<1x256xf32>
    %205 = math.rsqrt %204 : vector<1x256xf32>
    %206 = vector.broadcast %205 : vector<1x256xf32> to vector<2x256xf32>
    %207 = arith.mulf %202, %206 : vector<2x256xf32>
    %208 = vector.broadcast %188 : vector<1x256xf32> to vector<2x256xf32>
    %209 = arith.mulf %207, %208 : vector<2x256xf32>
    %210 = vector.broadcast %189 : vector<1x256xf32> to vector<2x256xf32>
    %211 = arith.addf %209, %210 : vector<2x256xf32>
    %cst_100 = arith.constant 0.000000e+00 : f32
    %212 = vector.broadcast %cst_100 : f32 to vector<2x256xf32>
    %213 = arith.maximumf %211, %212 : vector<2x256xf32>
    %214 = arith.truncf %213 : vector<2x256xf32> to vector<2x256xbf16>
    %c0_101 = arith.constant 0 : index
    %c0_102 = arith.constant 0 : index
    %215 = vector.load %arg8[%c0_101, %c0_102] : memref<256x256xbf16, #tpu.memory_space<vmem>>, vector<256x256xbf16>
    %cst_103 = arith.constant dense<0.000000e+00> : vector<2x256xf32>
    %216 = tpu.matmul %214, %215, %cst_103 {dimension_numbers = #tpu.dot_dimension_numbers<[1], [0], [0], [1], [0, 0, 1, 1], [], []>} : vector<2x256xbf16>, vector<256x256xbf16>, vector<2x256xf32> -> vector<2x256xf32>
    %c0_104 = arith.constant 0 : index
    %c0_105 = arith.constant 0 : index
    %217 = vector.load %arg9[%c0_104, %c0_105] : memref<1x256xf32, #tpu.memory_space<vmem>>, vector<1x256xf32>
    %218 = vector.broadcast %217 : vector<1x256xf32> to vector<2x256xf32>
    %219 = arith.addf %216, %218 : vector<2x256xf32>
    %c0_106 = arith.constant 0 : index
    %c0_107 = arith.constant 0 : index
    %220 = vector.load %arg10[%c0_106, %c0_107] : memref<1x256xf32, #tpu.memory_space<vmem>>, vector<1x256xf32>
    %c0_108 = arith.constant 0 : index
    %c0_109 = arith.constant 0 : index
    %221 = vector.load %arg11[%c0_108, %c0_109] : memref<1x256xf32, #tpu.memory_space<vmem>>, vector<1x256xf32>
    %cst_110 = arith.constant dense<0.000000e+00> : vector<256xf32>
    %222 = vector.multi_reduction <add>, %219, %cst_110 [0] : vector<2x256xf32> to vector<256xf32>
    %223 = vector.shape_cast %222 : vector<256xf32> to vector<1x256xf32>
    %cst_111 = arith.constant 2.000000e+00 : f32
    %224 = vector.broadcast %cst_111 : f32 to vector<1x256xf32>
    %225 = arith.divf %223, %224 : vector<1x256xf32>
    %226 = arith.mulf %219, %219 : vector<2x256xf32>
    %cst_112 = arith.constant dense<0.000000e+00> : vector<256xf32>
    %227 = vector.multi_reduction <add>, %226, %cst_112 [0] : vector<2x256xf32> to vector<256xf32>
    %228 = vector.shape_cast %227 : vector<256xf32> to vector<1x256xf32>
    %cst_113 = arith.constant 2.000000e+00 : f32
    %229 = vector.broadcast %cst_113 : f32 to vector<1x256xf32>
    %230 = arith.divf %228, %229 : vector<1x256xf32>
    %231 = arith.mulf %225, %225 : vector<1x256xf32>
    %232 = arith.subf %230, %231 : vector<1x256xf32>
    %233 = vector.broadcast %225 : vector<1x256xf32> to vector<2x256xf32>
    %234 = arith.subf %219, %233 : vector<2x256xf32>
    %cst_114 = arith.constant 9.99999974E-6 : f32
    %235 = vector.broadcast %cst_114 : f32 to vector<1x256xf32>
    %236 = arith.addf %232, %235 : vector<1x256xf32>
    %237 = math.rsqrt %236 : vector<1x256xf32>
    %238 = vector.broadcast %237 : vector<1x256xf32> to vector<2x256xf32>
    %239 = arith.mulf %234, %238 : vector<2x256xf32>
    %240 = vector.broadcast %220 : vector<1x256xf32> to vector<2x256xf32>
    %241 = arith.mulf %239, %240 : vector<2x256xf32>
    %242 = vector.broadcast %221 : vector<1x256xf32> to vector<2x256xf32>
    %243 = arith.addf %241, %242 : vector<2x256xf32>
    %244 = arith.truncf %243 : vector<2x256xf32> to vector<2x256xbf16>
    %c0_115 = arith.constant 0 : index
    %c0_116 = arith.constant 0 : index
    %245 = vector.load %arg12[%c0_115, %c0_116] : memref<256x128xbf16, #tpu.memory_space<vmem>>, vector<256x128xbf16>
    %cst_117 = arith.constant dense<0.000000e+00> : vector<2x128xf32>
    %246 = tpu.matmul %244, %245, %cst_117 {dimension_numbers = #tpu.dot_dimension_numbers<[1], [0], [0], [1], [0, 0, 1, 1], [], []>} : vector<2x256xbf16>, vector<256x128xbf16>, vector<2x128xf32> -> vector<2x128xf32>
    %c0_118 = arith.constant 0 : index
    %c0_119 = arith.constant 0 : index
    %247 = vector.load %arg13[%c0_118, %c0_119] : memref<1x128xf32, #tpu.memory_space<vmem>>, vector<1x128xf32>
    %248 = vector.broadcast %247 : vector<1x128xf32> to vector<2x128xf32>
    %249 = arith.addf %246, %248 : vector<2x128xf32>
    %c0_120 = arith.constant 0 : index
    %c0_121 = arith.constant 0 : index
    %250 = vector.load %arg14[%c0_120, %c0_121] : memref<1x128xf32, #tpu.memory_space<vmem>>, vector<1x128xf32>
    %c0_122 = arith.constant 0 : index
    %c0_123 = arith.constant 0 : index
    %251 = vector.load %arg15[%c0_122, %c0_123] : memref<1x128xf32, #tpu.memory_space<vmem>>, vector<1x128xf32>
    %cst_124 = arith.constant dense<0.000000e+00> : vector<128xf32>
    %252 = vector.multi_reduction <add>, %249, %cst_124 [0] : vector<2x128xf32> to vector<128xf32>
    %253 = vector.shape_cast %252 : vector<128xf32> to vector<1x128xf32>
    %cst_125 = arith.constant 2.000000e+00 : f32
    %254 = vector.broadcast %cst_125 : f32 to vector<1x128xf32>
    %255 = arith.divf %253, %254 : vector<1x128xf32>
    %256 = arith.mulf %249, %249 : vector<2x128xf32>
    %cst_126 = arith.constant dense<0.000000e+00> : vector<128xf32>
    %257 = vector.multi_reduction <add>, %256, %cst_126 [0] : vector<2x128xf32> to vector<128xf32>
    %258 = vector.shape_cast %257 : vector<128xf32> to vector<1x128xf32>
    %cst_127 = arith.constant 2.000000e+00 : f32
    %259 = vector.broadcast %cst_127 : f32 to vector<1x128xf32>
    %260 = arith.divf %258, %259 : vector<1x128xf32>
    %261 = arith.mulf %255, %255 : vector<1x128xf32>
    %262 = arith.subf %260, %261 : vector<1x128xf32>
    %263 = vector.broadcast %255 : vector<1x128xf32> to vector<2x128xf32>
    %264 = arith.subf %249, %263 : vector<2x128xf32>
    %cst_128 = arith.constant 9.99999974E-6 : f32
    %265 = vector.broadcast %cst_128 : f32 to vector<1x128xf32>
    %266 = arith.addf %262, %265 : vector<1x128xf32>
    %267 = math.rsqrt %266 : vector<1x128xf32>
    %268 = vector.broadcast %267 : vector<1x128xf32> to vector<2x128xf32>
    %269 = arith.mulf %264, %268 : vector<2x128xf32>
    %270 = vector.broadcast %250 : vector<1x128xf32> to vector<2x128xf32>
    %271 = arith.mulf %269, %270 : vector<2x128xf32>
    %272 = vector.broadcast %251 : vector<1x128xf32> to vector<2x128xf32>
    %273 = arith.addf %271, %272 : vector<2x128xf32>
    %cst_129 = arith.constant 0.000000e+00 : f32
    %274 = vector.broadcast %cst_129 : f32 to vector<2x128xf32>
    %275 = arith.maximumf %273, %274 : vector<2x128xf32>
    %276 = arith.truncf %275 : vector<2x128xf32> to vector<2x128xbf16>
    %c0_130 = arith.constant 0 : index
    %c0_131 = arith.constant 0 : index
    %277 = vector.load %arg16[%c0_130, %c0_131] : memref<128x256xbf16, #tpu.memory_space<vmem>>, vector<128x256xbf16>
    %cst_132 = arith.constant dense<0.000000e+00> : vector<2x256xf32>
    %278 = tpu.matmul %276, %277, %cst_132 {dimension_numbers = #tpu.dot_dimension_numbers<[1], [0], [0], [1], [0, 0, 1, 1], [], []>} : vector<2x128xbf16>, vector<128x256xbf16>, vector<2x256xf32> -> vector<2x256xf32>
    %c0_133 = arith.constant 0 : index
    %c0_134 = arith.constant 0 : index
    %279 = vector.load %arg17[%c0_133, %c0_134] : memref<1x256xf32, #tpu.memory_space<vmem>>, vector<1x256xf32>
    %280 = vector.broadcast %279 : vector<1x256xf32> to vector<2x256xf32>
    %281 = arith.addf %278, %280 : vector<2x256xf32>
    %282 = arith.mulf %140, %140 : vector<2x256xf32>
    %cst_135 = arith.constant dense<0.000000e+00> : vector<2xf32>
    %283 = vector.multi_reduction <add>, %282, %cst_135 [1] : vector<2x256xf32> to vector<2xf32>
    %284 = vector.shape_cast %283 : vector<2xf32> to vector<2x1xf32>
    %cst_136 = arith.constant 1.000000e-24 : f32
    %285 = vector.broadcast %cst_136 : f32 to vector<2x1xf32>
    %286 = arith.maximumf %284, %285 : vector<2x1xf32>
    %287 = math.rsqrt %286 : vector<2x1xf32>
    %288 = vector.broadcast %287 : vector<2x1xf32> to vector<2x256xf32>
    %289 = arith.mulf %140, %288 : vector<2x256xf32>
    %290 = arith.mulf %243, %243 : vector<2x256xf32>
    %cst_137 = arith.constant dense<0.000000e+00> : vector<2xf32>
    %291 = vector.multi_reduction <add>, %290, %cst_137 [1] : vector<2x256xf32> to vector<2xf32>
    %292 = vector.shape_cast %291 : vector<2xf32> to vector<2x1xf32>
    %cst_138 = arith.constant 1.000000e-24 : f32
    %293 = vector.broadcast %cst_138 : f32 to vector<2x1xf32>
    %294 = arith.maximumf %292, %293 : vector<2x1xf32>
    %295 = math.rsqrt %294 : vector<2x1xf32>
    %296 = vector.broadcast %295 : vector<2x1xf32> to vector<2x256xf32>
    %297 = arith.mulf %243, %296 : vector<2x256xf32>
    %298 = arith.mulf %289, %297 : vector<2x256xf32>
    %cst_139 = arith.constant dense<0.000000e+00> : vector<2xf32>
    %299 = vector.multi_reduction <add>, %298, %cst_139 [1] : vector<2x256xf32> to vector<2xf32>
    %300 = vector.shape_cast %299 : vector<2xf32> to vector<2x1xf32>
    %301 = arith.mulf %281, %281 : vector<2x256xf32>
    %cst_140 = arith.constant dense<0.000000e+00> : vector<2xf32>
    %302 = vector.multi_reduction <add>, %301, %cst_140 [1] : vector<2x256xf32> to vector<2xf32>
    %303 = vector.shape_cast %302 : vector<2xf32> to vector<2x1xf32>
    %cst_141 = arith.constant 1.000000e-24 : f32
    %304 = vector.broadcast %cst_141 : f32 to vector<2x1xf32>
    %305 = arith.maximumf %303, %304 : vector<2x1xf32>
    %306 = math.rsqrt %305 : vector<2x1xf32>
    %307 = vector.broadcast %306 : vector<2x1xf32> to vector<2x256xf32>
    %308 = arith.mulf %281, %307 : vector<2x256xf32>
    %309 = arith.mulf %102, %102 : vector<2x256xf32>
    %cst_142 = arith.constant dense<0.000000e+00> : vector<2xf32>
    %310 = vector.multi_reduction <add>, %309, %cst_142 [1] : vector<2x256xf32> to vector<2xf32>
    %311 = vector.shape_cast %310 : vector<2xf32> to vector<2x1xf32>
    %cst_143 = arith.constant 1.000000e-24 : f32
    %312 = vector.broadcast %cst_143 : f32 to vector<2x1xf32>
    %313 = arith.maximumf %311, %312 : vector<2x1xf32>
    %314 = math.rsqrt %313 : vector<2x1xf32>
    %315 = vector.broadcast %314 : vector<2x1xf32> to vector<2x256xf32>
    %316 = arith.mulf %102, %315 : vector<2x256xf32>
    %317 = arith.mulf %308, %316 : vector<2x256xf32>
    %cst_144 = arith.constant dense<0.000000e+00> : vector<2xf32>
    %318 = vector.multi_reduction <add>, %317, %cst_144 [1] : vector<2x256xf32> to vector<2xf32>
    %319 = vector.shape_cast %318 : vector<2xf32> to vector<2x1xf32>
    %320 = arith.addf %300, %319 : vector<2x1xf32>
    %cst_145 = arith.constant dense<0.000000e+00> : vector<1xf32>
    %321 = vector.multi_reduction <add>, %320, %cst_145 [0] : vector<2x1xf32> to vector<1xf32>
    %322 = vector.shape_cast %321 : vector<1xf32> to vector<1x1xf32>
    %cst_146 = arith.constant -2.500000e-01 : f32
    %323 = vector.broadcast %cst_146 : f32 to vector<1x1xf32>
    %324 = arith.mulf %323, %322 : vector<1x1xf32>
    %c0_147 = arith.constant 0 : index
    %c0_148 = arith.constant 0 : index
    %325 = vector.load %arg18[%c0_147, %c0_148] : memref<1x1xf32, #tpu.memory_space<vmem>>, vector<1x1xf32>
    tpu.vector_store %arg18[%c0_147, %c0_148], %324 {strides = array<i32>} : memref<1x1xf32, #tpu.memory_space<vmem>>, vector<1x1xf32>,
    return
  }
}

</mosaic_0001>

<llo_original>
// kernel: simsiam_forward.1
$region0: #{simsiam_forward.1}
  #allocation0 [shape = 'u32[]', space=smem, size = 0x4, offset = 0x4, fixed_abs, tag = 'smem constant byte address 0x4 - core index']
  #allocation1 [shape = 'u32[72,128]{1,0:T(1,128)}', space=vmem, size = 0x9000, scoped, tag = 'internal scratch']
  %s0 = inlined_call_operand.vmem [shape: bf16[2,512,32], index: 0, kind: input, shape index: {}]
  %s1 = inlined_call_operand.vmem [shape: bf16[32,64], index: 1, kind: input, shape index: {}]
  %s2 = inlined_call_operand.vmem [shape: f32[1,64], index: 2, kind: input, shape index: {}]
  %s3 = inlined_call_operand.vmem [shape: f32[1,64], index: 3, kind: input, shape index: {}]
  %s4 = inlined_call_operand.vmem [shape: bf16[64,256], index: 4, kind: input, shape index: {}]
  %s5 = inlined_call_operand.vmem [shape: f32[1,256], index: 5, kind: input, shape index: {}]
  %s6 = inlined_call_operand.vmem [shape: f32[1,256], index: 6, kind: input, shape index: {}]
  %s7 = inlined_call_operand.vmem [shape: f32[1,256], index: 7, kind: input, shape index: {}]
  %s8 = inlined_call_operand.vmem [shape: bf16[256,256], index: 8, kind: input, shape index: {}]
  %s9 = inlined_call_operand.vmem [shape: f32[1,256], index: 9, kind: input, shape index: {}]
  %s10 = inlined_call_operand.vmem [shape: f32[1,256], index: 10, kind: input, shape index: {}]
  %s11 = inlined_call_operand.vmem [shape: f32[1,256], index: 11, kind: input, shape index: {}]
  %s12 = inlined_call_operand.vmem [shape: bf16[256,128], index: 12, kind: input, shape index: {}]
  %s13 = inlined_call_operand.vmem [shape: f32[1,128], index: 13, kind: input, shape index: {}]
  %s14 = inlined_call_operand.vmem [shape: f32[1,128], index: 14, kind: input, shape index: {}]
  %s15 = inlined_call_operand.vmem [shape: f32[1,128], index: 15, kind: input, shape index: {}]
  %s16 = inlined_call_operand.vmem [shape: bf16[128,256], index: 16, kind: input, shape index: {}]
  %s17 = inlined_call_operand.vmem [shape: f32[1,256], index: 17, kind: input, shape index: {}]
  %s18 = inlined_call_operand.hbm [shape: f32[1,1], index: 18, kind: output, shape index: {}]
  %s19 = sld [smem:[#allocation0]]
  $region82: #{simsiam_forward.1} parent=0
    _
  %s21 = ssub.s32 1, %s19
  %s22 = scalar_select 0, %s21, %s19
  $region1: #{simsiam_forward.1} parent=0
    #allocation2 [shape = 'u8[512]{0}', space=vmem, size = 0x400, scoped, tag = 'output window, operand 0, single buffered']
    #allocation3 [shape = 's32[1]{0}', space=sflag, size = 0x4, scoped, tag = 'scoped memory for simsiam_forward.1']
    %23 = vsyncpa [#allocation3], 0
    // Predicated region
    $region2: #{simsiam_forward.1} parent=1 // pred_check
      _
    $region3: #{simsiam_forward.1} parent=1 // pred_check_branch
      %25 = sbr.rel (0) target = $region5
    $region4: #{simsiam_forward.1} parent=1 // pred_region
      _
    $region5: #{simsiam_forward.1} parent=1 // pred_fallthru
      _
    // Predicated region
    $region6: #{simsiam_forward.1} parent=1 // pred_check
      _
    $region7: #{simsiam_forward.1} parent=1 // pred_check_branch
      %27 = sbr.rel (0) target = $region9
    $region8: #{simsiam_forward.1} parent=1 // pred_region
      _
    $region9: #{simsiam_forward.1} parent=1 // pred_fallthru
      _
    // Predicated region
    $region10: #{simsiam_forward.1} parent=1 // pred_check
      _
    $region11: #{simsiam_forward.1} parent=1 // pred_check_branch
      %29 = sbr.rel (0) target = $region13
    $region12: #{simsiam_forward.1} parent=1 // pred_region
      _
    $region13: #{simsiam_forward.1} parent=1 // pred_fallthru
      _
    // Predicated region
    $region14: #{simsiam_forward.1} parent=1 // pred_check
      _
    $region15: #{simsiam_forward.1} parent=1 // pred_check_branch
      %31 = sbr.rel (0) target = $region17
    $region16: #{simsiam_forward.1} parent=1 // pred_region
      _
    $region17: #{simsiam_forward.1} parent=1 // pred_fallthru
      _
    // Predicated region
    $region18: #{simsiam_forward.1} parent=1 // pred_check
      _
    $region19: #{simsiam_forward.1} parent=1 // pred_check_branch
      %33 = sbr.rel (0) target = $region21
    $region20: #{simsiam_forward.1} parent=1 // pred_region
      _
    $region21: #{simsiam_forward.1} parent=1 // pred_fallthru
      _
    // Predicated region
    $region22: #{simsiam_forward.1} parent=1 // pred_check
      _
    $region23: #{simsiam_forward.1} parent=1 // pred_check_branch
      %35 = sbr.rel (0) target = $region25
    $region24: #{simsiam_forward.1} parent=1 // pred_region
      _
    $region25: #{simsiam_forward.1} parent=1 // pred_fallthru
      _
    // Predicated region
    $region26: #{simsiam_forward.1} parent=1 // pred_check
      _
    $region27: #{simsiam_forward.1} parent=1 // pred_check_branch
      %37 = sbr.rel (0) target = $region29
    $region28: #{simsiam_forward.1} parent=1 // pred_region
      _
    $region29: #{simsiam_forward.1} parent=1 // pred_fallthru
      _
    // Predicated region
    $region30: #{simsiam_forward.1} parent=1 // pred_check
      _
    $region31: #{simsiam_forward.1} parent=1 // pred_check_branch
      %39 = sbr.rel (0) target = $region33
    $region32: #{simsiam_forward.1} parent=1 // pred_region
      _
    $region33: #{simsiam_forward.1} parent=1 // pred_fallthru
      _
    // Predicated region
    $region34: #{simsiam_forward.1} parent=1 // pred_check
      _
    $region35: #{simsiam_forward.1} parent=1 // pred_check_branch
      %41 = sbr.rel (0) target = $region37
    $region36: #{simsiam_forward.1} parent=1 // pred_region
      _
    $region37: #{simsiam_forward.1} parent=1 // pred_fallthru
      _
    // Predicated region
    $region38: #{simsiam_forward.1} parent=1 // pred_check
      _
    $region39: #{simsiam_forward.1} parent=1 // pred_check_branch
      %43 = sbr.rel (0) target = $region41
    $region40: #{simsiam_forward.1} parent=1 // pred_region
      _
    $region41: #{simsiam_forward.1} parent=1 // pred_fallthru
      _
    // Predicated region
    $region42: #{simsiam_forward.1} parent=1 // pred_check
      _
    $region43: #{simsiam_forward.1} parent=1 // pred_check_branch
      %45 = sbr.rel (0) target = $region45
    $region44: #{simsiam_forward.1} parent=1 // pred_region
      _
    $region45: #{simsiam_forward.1} parent=1 // pred_fallthru
      _
    // Predicated region
    $region46: #{simsiam_forward.1} parent=1 // pred_check
      _
    $region47: #{simsiam_forward.1} parent=1 // pred_check_branch
      %47 = sbr.rel (0) target = $region49
    $region48: #{simsiam_forward.1} parent=1 // pred_region
      _
    $region49: #{simsiam_forward.1} parent=1 // pred_fallthru
      _
    // Predicated region
    $region50: #{simsiam_forward.1} parent=1 // pred_check
      _
    $region51: #{simsiam_forward.1} parent=1 // pred_check_branch
      %49 = sbr.rel (0) target = $region53
    $region52: #{simsiam_forward.1} parent=1 // pred_region
      _
    $region53: #{simsiam_forward.1} parent=1 // pred_fallthru
      _
    // Predicated region
    $region54: #{simsiam_forward.1} parent=1 // pred_check
      _
    $region55: #{simsiam_forward.1} parent=1 // pred_check_branch
      %51 = sbr.rel (0) target = $region57
    $region56: #{simsiam_forward.1} parent=1 // pred_region
      _
    $region57: #{simsiam_forward.1} parent=1 // pred_fallthru
      _
    // Predicated region
    $region58: #{simsiam_forward.1} parent=1 // pred_check
      _
    $region59: #{simsiam_forward.1} parent=1 // pred_check_branch
      %53 = sbr.rel (0) target = $region61
    $region60: #{simsiam_forward.1} parent=1 // pred_region
      _
    $region61: #{simsiam_forward.1} parent=1 // pred_fallthru
      _
    // Predicated region
    $region62: #{simsiam_forward.1} parent=1 // pred_check
      _
    $region63: #{simsiam_forward.1} parent=1 // pred_check_branch
      %55 = sbr.rel (0) target = $region65
    $region64: #{simsiam_forward.1} parent=1 // pred_region
      _
    $region65: #{simsiam_forward.1} parent=1 // pred_fallthru
      _
    // Predicated region
    $region66: #{simsiam_forward.1} parent=1 // pred_check
      _
    $region67: #{simsiam_forward.1} parent=1 // pred_check_branch
      %57 = sbr.rel (0) target = $region69
    $region68: #{simsiam_forward.1} parent=1 // pred_region
      _
    $region69: #{simsiam_forward.1} parent=1 // pred_fallthru
      _
    // Predicated region
    $region70: #{simsiam_forward.1} parent=1 // pred_check
      _
    $region71: #{simsiam_forward.1} parent=1 // pred_check_branch
      %59 = sbr.rel (0) target = $region73
    $region72: #{simsiam_forward.1} parent=1 // pred_region
      _
    $region73: #{simsiam_forward.1} parent=1 // pred_fallthru
      _
    %v61 = vld [vmem:[%s0] sm:$0xf]
    %v62 = vld [vmem:[%s0 + $0x4] sm:$0xf]
    %v63 = vld [vmem:[%s0 + $0x8] sm:$0xf]
    %v64 = vld [vmem:[%s0 + $0xc] sm:$0xf]
    %v65 = vld [vmem:[%s0 + $0x10] sm:$0xf]
    %v66 = vld [vmem:[%s0 + $0x14] sm:$0xf]
    %v67 = vld [vmem:[%s0 + $0x18] sm:$0xf]
    %v68 = vld [vmem:[%s0 + $0x1c] sm:$0xf]
    %v69 = vld [vmem:[%s0 + $0x20] sm:$0xf]
    %v70 = vld [vmem:[%s0 + $0x24] sm:$0xf]
    %v71 = vld [vmem:[%s0 + $0x28] sm:$0xf]
    %v72 = vld [vmem:[%s0 + $0x2c] sm:$0xf]
    %v73 = vld [vmem:[%s0 + $0x30] sm:$0xf]
    %v74 = vld [vmem:[%s0 + $0x34] sm:$0xf]
    %v75 = vld [vmem:[%s0 + $0x38] sm:$0xf]
    %v76 = vld [vmem:[%s0 + $0x3c] sm:$0xf]
    %v77 = vld [vmem:[%s0 + $0x40] sm:$0xf]
    %v78 = vld [vmem:[%s0 + $0x44] sm:$0xf]
    %v79 = vld [vmem:[%s0 + $0x48] sm:$0xf]
    %v80 = vld [vmem:[%s0 + $0x4c] sm:$0xf]
    %v81 = vld [vmem:[%s0 + $0x50] sm:$0xf]
    %v82 = vld [vmem:[%s0 + $0x54] sm:$0xf]
    %v83 = vld [vmem:[%s0 + $0x58] sm:$0xf]
    %v84 = vld [vmem:[%s0 + $0x5c] sm:$0xf]
    %v85 = vld [vmem:[%s0 + $0x60] sm:$0xf]
    %v86 = vld [vmem:[%s0 + $0x64] sm:$0xf]
    %v87 = vld [vmem:[%s0 + $0x68] sm:$0xf]
    %v88 = vld [vmem:[%s0 + $0x6c] sm:$0xf]
    %v89 = vld [vmem:[%s0 + $0x70] sm:$0xf]
    %v90 = vld [vmem:[%s0 + $0x74] sm:$0xf]
    %v91 = vld [vmem:[%s0 + $0x78] sm:$0xf]
    %v92 = vld [vmem:[%s0 + $0x7c] sm:$0xf]
    %v93 = vld [vmem:[%s0 + $0x80] sm:$0xf]
    %v94 = vld [vmem:[%s0 + $0x84] sm:$0xf]
    %v95 = vld [vmem:[%s0 + $0x88] sm:$0xf]
    %v96 = vld [vmem:[%s0 + $0x8c] sm:$0xf]
    %v97 = vld [vmem:[%s0 + $0x90] sm:$0xf]
    %v98 = vld [vmem:[%s0 + $0x94] sm:$0xf]
    %v99 = vld [vmem:[%s0 + $0x98] sm:$0xf]
    %v100 = vld [vmem:[%s0 + $0x9c] sm:$0xf]
    %v101 = vld [vmem:[%s0 + $0xa0] sm:$0xf]
    %v102 = vld [vmem:[%s0 + $0xa4] sm:$0xf]
    %v103 = vld [vmem:[%s0 + $0xa8] sm:$0xf]
    %v104 = vld [vmem:[%s0 + $0xac] sm:$0xf]
    %v105 = vld [vmem:[%s0 + $0xb0] sm:$0xf]
    %v106 = vld [vmem:[%s0 + $0xb4] sm:$0xf]
    %v107 = vld [vmem:[%s0 + $0xb8] sm:$0xf]
    %v108 = vld [vmem:[%s0 + $0xbc] sm:$0xf]
    %v109 = vld [vmem:[%s0 + $0xc0] sm:$0xf]
    %v110 = vld [vmem:[%s0 + $0xc4] sm:$0xf]
    %v111 = vld [vmem:[%s0 + $0xc8] sm:$0xf]
    %v112 = vld [vmem:[%s0 + $0xcc] sm:$0xf]
    %v113 = vld [vmem:[%s0 + $0xd0] sm:$0xf]
    %v114 = vld [vmem:[%s0 + $0xd4] sm:$0xf]
    %v115 = vld [vmem:[%s0 + $0xd8] sm:$0xf]
    %v116 = vld [vmem:[%s0 + $0xdc] sm:$0xf]
    %v117 = vld [vmem:[%s0 + $0xe0] sm:$0xf]
    %v118 = vld [vmem:[%s0 + $0xe4] sm:$0xf]
    %v119 = vld [vmem:[%s0 + $0xe8] sm:$0xf]
    %v120 = vld [vmem:[%s0 + $0xec] sm:$0xf]
    %v121 = vld [vmem:[%s0 + $0xf0] sm:$0xf]
    %v122 = vld [vmem:[%s0 + $0xf4] sm:$0xf]
    %v123 = vld [vmem:[%s0 + $0xf8] sm:$0xf]
    %v124 = vld [vmem:[%s0 + $0xfc] sm:$0xf]
    %v125 = vld [vmem:[%s1] sm:$0xf]
    %v126 = vld [vmem:[%s1 + $0x4] sm:$0xf]
    %v127 = vld [vmem:[%s1 + $0x8] sm:$0xf]
    %v128 = vld [vmem:[%s1 + $0xc] sm:$0xf]
    %v193 = vunpack.c.l.b16 %v61
    %v194 = vunpack.c.l.b16 %v62
    %v195 = vunpack.c.l.b16 %v63
    %v196 = vunpack.c.l.b16 %v64
    %v197 = vunpack.c.l.b16 %v65
    %v198 = vunpack.c.l.b16 %v66
    %v199 = vunpack.c.l.b16 %v67
    %v200 = vunpack.c.l.b16 %v68
    %v201 = vunpack.c.l.b16 %v69
    %v202 = vunpack.c.l.b16 %v70
    %v203 = vunpack.c.l.b16 %v71
    %v204 = vunpack.c.l.b16 %v72
    %v205 = vunpack.c.l.b16 %v73
    %v206 = vunpack.c.l.b16 %v74
    %v207 = vunpack.c.l.b16 %v75
    %v208 = vunpack.c.l.b16 %v76
    %v209 = vunpack.c.l.b16 %v77
    %v210 = vunpack.c.l.b16 %v78
    %v211 = vunpack.c.l.b16 %v79
    %v212 = vunpack.c.l.b16 %v80
    %v213 = vunpack.c.l.b16 %v81
    %v214 = vunpack.c.l.b16 %v82
    %v215 = vunpack.c.l.b16 %v83
    %v216 = vunpack.c.l.b16 %v84
    %v217 = vunpack.c.l.b16 %v85
    %v218 = vunpack.c.l.b16 %v86
    %v219 = vunpack.c.l.b16 %v87
    %v220 = vunpack.c.l.b16 %v88
    %v221 = vunpack.c.l.b16 %v89
    %v222 = vunpack.c.l.b16 %v90
    %v223 = vunpack.c.l.b16 %v91
    %v224 = vunpack.c.l.b16 %v92
    %v225 = vunpack.c.l.b16 %v93
    %v226 = vunpack.c.l.b16 %v94
    %v227 = vunpack.c.l.b16 %v95
    %v228 = vunpack.c.l.b16 %v96
    %v229 = vunpack.c.l.b16 %v97
    %v230 = vunpack.c.l.b16 %v98
    %v231 = vunpack.c.l.b16 %v99
    %v232 = vunpack.c.l.b16 %v100
    %v233 = vunpack.c.l.b16 %v101
    %v234 = vunpack.c.l.b16 %v102
    %v235 = vunpack.c.l.b16 %v103
    %v236 = vunpack.c.l.b16 %v104
    %v237 = vunpack.c.l.b16 %v105
    %v238 = vunpack.c.l.b16 %v106
    %v239 = vunpack.c.l.b16 %v107
    %v240 = vunpack.c.l.b16 %v108
    %v241 = vunpack.c.l.b16 %v109
    %v242 = vunpack.c.l.b16 %v110
    %v243 = vunpack.c.l.b16 %v111
    %v244 = vunpack.c.l.b16 %v112
    %v245 = vunpack.c.l.b16 %v113
    %v246 = vunpack.c.l.b16 %v114
    %v247 = vunpack.c.l.b16 %v115
    %v248 = vunpack.c.l.b16 %v116
    %v249 = vunpack.c.l.b16 %v117
    %v250 = vunpack.c.l.b16 %v118
    %v251 = vunpack.c.l.b16 %v119
    %v252 = vunpack.c.l.b16 %v120
    %v253 = vunpack.c.l.b16 %v121
    %v254 = vunpack.c.l.b16 %v122
    %v255 = vunpack.c.l.b16 %v123
    %v256 = vunpack.c.l.b16 %v124
    %v257 = vpack.c.b16 %v194, %v193
    %v258 = vpack.c.b16 %v196, %v195
    %v259 = vpack.c.b16 %v198, %v197
    %v260 = vpack.c.b16 %v200, %v199
    %v261 = vpack.c.b16 %v202, %v201
    %v262 = vpack.c.b16 %v204, %v203
    %v263 = vpack.c.b16 %v206, %v205
    %v264 = vpack.c.b16 %v208, %v207
    %v265 = vpack.c.b16 %v210, %v209
    %v266 = vpack.c.b16 %v212, %v211
    %v267 = vpack.c.b16 %v214, %v213
    %v268 = vpack.c.b16 %v216, %v215
    %v269 = vpack.c.b16 %v218, %v217
    %v270 = vpack.c.b16 %v220, %v219
    %v271 = vpack.c.b16 %v222, %v221
    %v272 = vpack.c.b16 %v224, %v223
    %v273 = vpack.c.b16 %v226, %v225
    %v274 = vpack.c.b16 %v228, %v227
    %v275 = vpack.c.b16 %v230, %v229
    %v276 = vpack.c.b16 %v232, %v231
    %v277 = vpack.c.b16 %v234, %v233
    %v278 = vpack.c.b16 %v236, %v235
    %v279 = vpack.c.b16 %v238, %v237
    %v280 = vpack.c.b16 %v240, %v239
    %v281 = vpack.c.b16 %v242, %v241
    %v282 = vpack.c.b16 %v244, %v243
    %v283 = vpack.c.b16 %v246, %v245
    %v284 = vpack.c.b16 %v248, %v247
    %v285 = vpack.c.b16 %v250, %v249
    %v286 = vpack.c.b16 %v252, %v251
    %v287 = vpack.c.b16 %v254, %v253
    %v288 = vpack.c.b16 %v256, %v255
    %v293 = vunpack.c.l.b16 %v125
    %v294 = vunpack.c.l.b16 %v126
    %v295 = vunpack.c.l.b16 %v127
    %v296 = vunpack.c.l.b16 %v128
    %v297 = vpack.c.b16 %v294, %v293
    %v298 = vpack.c.b16 %v296, %v295
    %vm301 = vcmask 261120
    %v303 = vsel %vm301, %v257, 0
    %v306 = vsel %vm301, %v258, 0
    %v309 = vsel %vm301, %v259, 0
    %v312 = vsel %vm301, %v260, 0
    %v315 = vsel %vm301, %v261, 0
    %v318 = vsel %vm301, %v262, 0
    %v321 = vsel %vm301, %v263, 0
    %v324 = vsel %vm301, %v264, 0
    %v327 = vsel %vm301, %v265, 0
    %v330 = vsel %vm301, %v266, 0
    %v333 = vsel %vm301, %v267, 0
    %v336 = vsel %vm301, %v268, 0
    %v339 = vsel %vm301, %v269, 0
    %v342 = vsel %vm301, %v270, 0
    %v345 = vsel %vm301, %v271, 0
    %v348 = vsel %vm301, %v272, 0
    %v351 = vsel %vm301, %v273, 0
    %v354 = vsel %vm301, %v274, 0
    %v357 = vsel %vm301, %v275, 0
    %v360 = vsel %vm301, %v276, 0
    %v363 = vsel %vm301, %v277, 0
    %v366 = vsel %vm301, %v278, 0
    %v369 = vsel %vm301, %v279, 0
    %v372 = vsel %vm301, %v280, 0
    %v375 = vsel %vm301, %v281, 0
    %v378 = vsel %vm301, %v282, 0
    %v381 = vsel %vm301, %v283, 0
    %v384 = vsel %vm301, %v284, 0
    %v387 = vsel %vm301, %v285, 0
    %v390 = vsel %vm301, %v286, 0
    %v393 = vsel %vm301, %v287, 0
    %v396 = vsel %vm301, %v288, 0
    %398 = vmatpush.bf16.msra.mxu0 0
    %399 = vmatpush.bf16.msra.mxu0 0
    %400 = vmatpush.bf16.msra.mxu0 0
    %401 = vmatpush.bf16.msra.mxu0 0
    %402 = vmatpush.bf16.msra.mxu0 0
    %403 = vmatpush.bf16.msra.mxu0 0
    %404 = vmatpush.bf16.msra.mxu0 %v298
    %405 = vmatpush.bf16.msra.mxu0 %v297
    %406 = vmatmul.bf16.gmra.mxu0 %v303
    %v407 = vpop.f32.mrf.mxu0
    %v408 = vadd.f32 0.0, %v407
    %v409 = vpop.f32.mrf.mxu0
    %v410 = vadd.f32 0.0, %v409
    %411 = vmatmul.bf16.gmra.mxu0 %v306
    %v412 = vpop.f32.mrf.mxu0
    %v413 = vadd.f32 0.0, %v412
    %v414 = vpop.f32.mrf.mxu0
    %v415 = vadd.f32 0.0, %v414
    %416 = vmatmul.bf16.gmra.mxu0 %v309
    %v417 = vpop.f32.mrf.mxu0
    %v418 = vadd.f32 0.0, %v417
    %v419 = vpop.f32.mrf.mxu0
    %v420 = vadd.f32 0.0, %v419
    %421 = vmatmul.bf16.gmra.mxu0 %v312
    %v422 = vpop.f32.mrf.mxu0
    %v423 = vadd.f32 0.0, %v422
    %v424 = vpop.f32.mrf.mxu0
    %v425 = vadd.f32 0.0, %v424
    %426 = vmatmul.bf16.gmra.mxu0 %v315
    %v427 = vpop.f32.mrf.mxu0
    %v428 = vadd.f32 0.0, %v427
    %v429 = vpop.f32.mrf.mxu0
    %v430 = vadd.f32 0.0, %v429
    %431 = vmatmul.bf16.gmra.mxu0 %v318
    %v432 = vpop.f32.mrf.mxu0
    %v433 = vadd.f32 0.0, %v432
    %v434 = vpop.f32.mrf.mxu0
    %v435 = vadd.f32 0.0, %v434
    %436 = vmatmul.bf16.gmra.mxu0 %v321
    %v437 = vpop.f32.mrf.mxu0
    %v438 = vadd.f32 0.0, %v437
    %v439 = vpop.f32.mrf.mxu0
    %v440 = vadd.f32 0.0, %v439
    %441 = vmatmul.bf16.gmra.mxu0 %v324
    %v442 = vpop.f32.mrf.mxu0
    %v443 = vadd.f32 0.0, %v442
    %v444 = vpop.f32.mrf.mxu0
    %v445 = vadd.f32 0.0, %v444
    %446 = vmatmul.bf16.gmra.mxu0 %v327
    %v447 = vpop.f32.mrf.mxu0
    %v448 = vadd.f32 0.0, %v447
    %v449 = vpop.f32.mrf.mxu0
    %v450 = vadd.f32 0.0, %v449
    %451 = vmatmul.bf16.gmra.mxu0 %v330
    %v452 = vpop.f32.mrf.mxu0
    %v453 = vadd.f32 0.0, %v452
    %v454 = vpop.f32.mrf.mxu0
    %v455 = vadd.f32 0.0, %v454
    %456 = vmatmul.bf16.gmra.mxu0 %v333
    %v457 = vpop.f32.mrf.mxu0
    %v458 = vadd.f32 0.0, %v457
    %v459 = vpop.f32.mrf.mxu0
    %v460 = vadd.f32 0.0, %v459
    %461 = vmatmul.bf16.gmra.mxu0 %v336
    %v462 = vpop.f32.mrf.mxu0
    %v463 = vadd.f32 0.0, %v462
    %v464 = vpop.f32.mrf.mxu0
    %v465 = vadd.f32 0.0, %v464
    %466 = vmatmul.bf16.gmra.mxu0 %v339
    %v467 = vpop.f32.mrf.mxu0
    %v468 = vadd.f32 0.0, %v467
    %v469 = vpop.f32.mrf.mxu0
    %v470 = vadd.f32 0.0, %v469
    %471 = vmatmul.bf16.gmra.mxu0 %v342
    %v472 = vpop.f32.mrf.mxu0
    %v473 = vadd.f32 0.0, %v472
    %v474 = vpop.f32.mrf.mxu0
    %v475 = vadd.f32 0.0, %v474
    %476 = vmatmul.bf16.gmra.mxu0 %v345
    %v477 = vpop.f32.mrf.mxu0
    %v478 = vadd.f32 0.0, %v477
    %v479 = vpop.f32.mrf.mxu0
    %v480 = vadd.f32 0.0, %v479
    %481 = vmatmul.bf16.gmra.mxu0 %v348
    %v482 = vpop.f32.mrf.mxu0
    %v483 = vadd.f32 0.0, %v482
    %v484 = vpop.f32.mrf.mxu0
    %v485 = vadd.f32 0.0, %v484
    %486 = vmatmul.bf16.gmra.mxu0 %v351
    %v487 = vpop.f32.mrf.mxu0
    %v488 = vadd.f32 0.0, %v487
    %v489 = vpop.f32.mrf.mxu0
    %v490 = vadd.f32 0.0, %v489
    %491 = vmatmul.bf16.gmra.mxu0 %v354
    %v492 = vpop.f32.mrf.mxu0
    %v493 = vadd.f32 0.0, %v492
    %v494 = vpop.f32.mrf.mxu0
    %v495 = vadd.f32 0.0, %v494
    %496 = vmatmul.bf16.gmra.mxu0 %v357
    %v497 = vpop.f32.mrf.mxu0
    %v498 = vadd.f32 0.0, %v497
    %v499 = vpop.f32.mrf.mxu0
    %v500 = vadd.f32 0.0, %v499
    %501 = vmatmul.bf16.gmra.mxu0 %v360
    %v502 = vpop.f32.mrf.mxu0
    %v503 = vadd.f32 0.0, %v502
    %v504 = vpop.f32.mrf.mxu0
    %v505 = vadd.f32 0.0, %v504
    %506 = vmatmul.bf16.gmra.mxu0 %v363
    %v507 = vpop.f32.mrf.mxu0
    %v508 = vadd.f32 0.0, %v507
    %v509 = vpop.f32.mrf.mxu0
    %v510 = vadd.f32 0.0, %v509
    %511 = vmatmul.bf16.gmra.mxu0 %v366
    %v512 = vpop.f32.mrf.mxu0
    %v513 = vadd.f32 0.0, %v512
    %v514 = vpop.f32.mrf.mxu0
    %v515 = vadd.f32 0.0, %v514
    %516 = vmatmul.bf16.gmra.mxu0 %v369
    %v517 = vpop.f32.mrf.mxu0
    %v518 = vadd.f32 0.0, %v517
    %v519 = vpop.f32.mrf.mxu0
    %v520 = vadd.f32 0.0, %v519
    %521 = vmatmul.bf16.gmra.mxu0 %v372
    %v522 = vpop.f32.mrf.mxu0
    %v523 = vadd.f32 0.0, %v522
    %v524 = vpop.f32.mrf.mxu0
    %v525 = vadd.f32 0.0, %v524
    %526 = vmatmul.bf16.gmra.mxu0 %v375
    %v527 = vpop.f32.mrf.mxu0
    %v528 = vadd.f32 0.0, %v527
    %v529 = vpop.f32.mrf.mxu0
    %v530 = vadd.f32 0.0, %v529
    %531 = vmatmul.bf16.gmra.mxu0 %v378
    %v532 = vpop.f32.mrf.mxu0
    %v533 = vadd.f32 0.0, %v532
    %v534 = vpop.f32.mrf.mxu0
    %v535 = vadd.f32 0.0, %v534
    %536 = vmatmul.bf16.gmra.mxu0 %v381
    %v537 = vpop.f32.mrf.mxu0
    %v538 = vadd.f32 0.0, %v537
    %v539 = vpop.f32.mrf.mxu0
    %v540 = vadd.f32 0.0, %v539
    %541 = vmatmul.bf16.gmra.mxu0 %v384
    %v542 = vpop.f32.mrf.mxu0
    %v543 = vadd.f32 0.0, %v542
    %v544 = vpop.f32.mrf.mxu0
    %v545 = vadd.f32 0.0, %v544
    %546 = vmatmul.bf16.gmra.mxu0 %v387
    %v547 = vpop.f32.mrf.mxu0
    %v548 = vadd.f32 0.0, %v547
    %v549 = vpop.f32.mrf.mxu0
    %v550 = vadd.f32 0.0, %v549
    %551 = vmatmul.bf16.gmra.mxu0 %v390
    %v552 = vpop.f32.mrf.mxu0
    %v553 = vadd.f32 0.0, %v552
    %v554 = vpop.f32.mrf.mxu0
    %v555 = vadd.f32 0.0, %v554
    %556 = vmatmul.bf16.gmra.mxu0 %v393
    %v557 = vpop.f32.mrf.mxu0
    %v558 = vadd.f32 0.0, %v557
    %v559 = vpop.f32.mrf.mxu0
    %v560 = vadd.f32 0.0, %v559
    %561 = vmatmul.bf16.gmra.mxu0 %v396
    %v562 = vpop.f32.mrf.mxu0
    %v563 = vadd.f32 0.0, %v562
    %v564 = vpop.f32.mrf.mxu0
    %v565 = vadd.f32 0.0, %v564
    %566 = vdwg.mxu0
    %v567 = vld [vmem:[%s2] sm:$0x1]
    %v568 = vld [vmem:[%s3] sm:$0x1]
    %vm569 = vcmask 523264
    %v570 = vsel %vm569, %v408, 0.0
    %v571 = vsel %vm569, %v410, 0.0
    %v572 = vadd.f32 %v570, %v571
    %v573 = vsel %vm569, %v413, 0.0
    %v574 = vadd.f32 %v572, %v573
    %v575 = vsel %vm569, %v415, 0.0
    %v576 = vadd.f32 %v574, %v575
    %v577 = vsel %vm569, %v418, 0.0
    %v578 = vadd.f32 %v576, %v577
    %v579 = vsel %vm569, %v420, 0.0
    %v580 = vadd.f32 %v578, %v579
    %v581 = vsel %vm569, %v423, 0.0
    %v582 = vadd.f32 %v580, %v581
    %v583 = vsel %vm569, %v425, 0.0
    %v584 = vadd.f32 %v582, %v583
    %v585 = vsel %vm569, %v428, 0.0
    %v586 = vadd.f32 %v584, %v585
    %v587 = vsel %vm569, %v430, 0.0
    %v588 = vadd.f32 %v586, %v587
    %v589 = vsel %vm569, %v433, 0.0
    %v590 = vadd.f32 %v588, %v589
    %v591 = vsel %vm569, %v435, 0.0
    %v592 = vadd.f32 %v590, %v591
    %v593 = vsel %vm569, %v438, 0.0
    %v594 = vadd.f32 %v592, %v593
    %v595 = vsel %vm569, %v440, 0.0
    %v596 = vadd.f32 %v594, %v595
    %v597 = vsel %vm569, %v443, 0.0
    %v598 = vadd.f32 %v596, %v597
    %v599 = vsel %vm569, %v445, 0.0
    %v600 = vadd.f32 %v598, %v599
    %v601 = vsel %vm569, %v448, 0.0
    %v602 = vadd.f32 %v600, %v601
    %v603 = vsel %vm569, %v450, 0.0
    %v604 = vadd.f32 %v602, %v603
    %v605 = vsel %vm569, %v453, 0.0
    %v606 = vadd.f32 %v604, %v605
    %v607 = vsel %vm569, %v455, 0.0
    %v608 = vadd.f32 %v606, %v607
    %v609 = vsel %vm569, %v458, 0.0
    %v610 = vadd.f32 %v608, %v609
    %v611 = vsel %vm569, %v460, 0.0
    %v612 = vadd.f32 %v610, %v611
    %v613 = vsel %vm569, %v463, 0.0
    %v614 = vadd.f32 %v612, %v613
    %v615 = vsel %vm569, %v465, 0.0
    %v616 = vadd.f32 %v614, %v615
    %v617 = vsel %vm569, %v468, 0.0
    %v618 = vadd.f32 %v616, %v617
    %v619 = vsel %vm569, %v470, 0.0
    %v620 = vadd.f32 %v618, %v619
    %v621 = vsel %vm569, %v473, 0.0
    %v622 = vadd.f32 %v620, %v621
    %v623 = vsel %vm569, %v475, 0.0
    %v624 = vadd.f32 %v622, %v623
    %v625 = vsel %vm569, %v478, 0.0
    %v626 = vadd.f32 %v624, %v625
    %v627 = vsel %vm569, %v480, 0.0
    %v628 = vadd.f32 %v626, %v627
    %v629 = vsel %vm569, %v483, 0.0
    %v630 = vadd.f32 %v628, %v629
    %v631 = vsel %vm569, %v485, 0.0
    %v632 = vadd.f32 %v630, %v631
    %v633 = vsel %vm569, %v488, 0.0
    %v634 = vadd.f32 %v632, %v633
    %v635 = vsel %vm569, %v490, 0.0
    %v636 = vadd.f32 %v634, %v635
    %v637 = vsel %vm569, %v493, 0.0
    %v638 = vadd.f32 %v636, %v637
    %v639 = vsel %vm569, %v495, 0.0
    %v640 = vadd.f32 %v638, %v639
    %v641 = vsel %vm569, %v498, 0.0
    %v642 = vadd.f32 %v640, %v641
    %v643 = vsel %vm569, %v500, 0.0
    %v644 = vadd.f32 %v642, %v643
    %v645 = vsel %vm569, %v503, 0.0
    %v646 = vadd.f32 %v644, %v645
    %v647 = vsel %vm569, %v505, 0.0
    %v648 = vadd.f32 %v646, %v647
    %v649 = vsel %vm569, %v508, 0.0
    %v650 = vadd.f32 %v648, %v649
    %v651 = vsel %vm569, %v510, 0.0
    %v652 = vadd.f32 %v650, %v651
    %v653 = vsel %vm569, %v513, 0.0
    %v654 = vadd.f32 %v652, %v653
    %v655 = vsel %vm569, %v515, 0.0
    %v656 = vadd.f32 %v654, %v655
    %v657 = vsel %vm569, %v518, 0.0
    %v658 = vadd.f32 %v656, %v657
    %v659 = vsel %vm569, %v520, 0.0
    %v660 = vadd.f32 %v658, %v659
    %v661 = vsel %vm569, %v523, 0.0
    %v662 = vadd.f32 %v660, %v661
    %v663 = vsel %vm569, %v525, 0.0
    %v664 = vadd.f32 %v662, %v663
    %v665 = vsel %vm569, %v528, 0.0
    %v666 = vadd.f32 %v664, %v665
    %v667 = vsel %vm569, %v530, 0.0
    %v668 = vadd.f32 %v666, %v667
    %v669 = vsel %vm569, %v533, 0.0
    %v670 = vadd.f32 %v668, %v669
    %v671 = vsel %vm569, %v535, 0.0
    %v672 = vadd.f32 %v670, %v671
    %v673 = vsel %vm569, %v538, 0.0
    %v674 = vadd.f32 %v672, %v673
    %v675 = vsel %vm569, %v540, 0.0
    %v676 = vadd.f32 %v674, %v675
    %v677 = vsel %vm569, %v543, 0.0
    %v678 = vadd.f32 %v676, %v677
    %v679 = vsel %vm569, %v545, 0.0
    %v680 = vadd.f32 %v678, %v679
    %v681 = vsel %vm569, %v548, 0.0
    %v682 = vadd.f32 %v680, %v681
    %v683 = vsel %vm569, %v550, 0.0
    %v684 = vadd.f32 %v682, %v683
    %v685 = vsel %vm569, %v553, 0.0
    %v686 = vadd.f32 %v684, %v685
    %v687 = vsel %vm569, %v555, 0.0
    %v688 = vadd.f32 %v686, %v687
    %v689 = vsel %vm569, %v558, 0.0
    %v690 = vadd.f32 %v688, %v689
    %v691 = vsel %vm569, %v560, 0.0
    %v692 = vadd.f32 %v690, %v691
    %v693 = vsel %vm569, %v563, 0.0
    %v694 = vadd.f32 %v692, %v693
    %v695 = vsel %vm569, %v565, 0.0
    %v696 = vadd.f32 %v694, %v695
    %v697 = vrot.slane %v696, 4
    %v698 = vadd.f32 %v696, %v697
    %v699 = vrot.slane %v698, 2
    %v700 = vadd.f32 %v698, %v699
    %v701 = vrot.slane %v700, 1
    %v702 = vadd.f32 %v700, %v701
    %v703 = vrcp.pop 512.0
    %v704 = vmul.f32 512.0, %v703
    %v705 = vsub.f32 1.0, %v704
    %v706 = vmul.f32 %v703, %v705
    %v707 = vadd.f32 %v703, %v706
    %vm708 = vweird.f32 %v703
    %v709 = vsel %vm708, %v703, %v707
    %v710 = vmul.f32 %v702, %v709
    %v711 = vmul.f32 %v408, %v408
    %v712 = vmul.f32 %v410, %v410
    %v713 = vmul.f32 %v413, %v413
    %v714 = vmul.f32 %v415, %v415
    %v715 = vmul.f32 %v418, %v418
    %v716 = vmul.f32 %v420, %v420
    %v717 = vmul.f32 %v423, %v423
    %v718 = vmul.f32 %v425, %v425
    %v719 = vmul.f32 %v428, %v428
    %v720 = vmul.f32 %v430, %v430
    %v721 = vmul.f32 %v433, %v433
    %v722 = vmul.f32 %v435, %v435
    %v723 = vmul.f32 %v438, %v438
    %v724 = vmul.f32 %v440, %v440
    %v725 = vmul.f32 %v443, %v443
    %v726 = vmul.f32 %v445, %v445
    %v727 = vmul.f32 %v448, %v448
    %v728 = vmul.f32 %v450, %v450
    %v729 = vmul.f32 %v453, %v453
    %v730 = vmul.f32 %v455, %v455
    %v731 = vmul.f32 %v458, %v458
    %v732 = vmul.f32 %v460, %v460
    %v733 = vmul.f32 %v463, %v463
    %v734 = vmul.f32 %v465, %v465
    %v735 = vmul.f32 %v468, %v468
    %v736 = vmul.f32 %v470, %v470
    %v737 = vmul.f32 %v473, %v473
    %v738 = vmul.f32 %v475, %v475
    %v739 = vmul.f32 %v478, %v478
    %v740 = vmul.f32 %v480, %v480
    %v741 = vmul.f32 %v483, %v483
    %v742 = vmul.f32 %v485, %v485
    %v743 = vmul.f32 %v488, %v488
    %v744 = vmul.f32 %v490, %v490
    %v745 = vmul.f32 %v493, %v493
    %v746 = vmul.f32 %v495, %v495
    %v747 = vmul.f32 %v498, %v498
    %v748 = vmul.f32 %v500, %v500
    %v749 = vmul.f32 %v503, %v503
    %v750 = vmul.f32 %v505, %v505
    %v751 = vmul.f32 %v508, %v508
    %v752 = vmul.f32 %v510, %v510
    %v753 = vmul.f32 %v513, %v513
    %v754 = vmul.f32 %v515, %v515
    %v755 = vmul.f32 %v518, %v518
    %v756 = vmul.f32 %v520, %v520
    %v757 = vmul.f32 %v523, %v523
    %v758 = vmul.f32 %v525, %v525
    %v759 = vmul.f32 %v528, %v528
    %v760 = vmul.f32 %v530, %v530
    %v761 = vmul.f32 %v533, %v533
    %v762 = vmul.f32 %v535, %v535
    %v763 = vmul.f32 %v538, %v538
    %v764 = vmul.f32 %v540, %v540
    %v765 = vmul.f32 %v543, %v543
    %v766 = vmul.f32 %v545, %v545
    %v767 = vmul.f32 %v548, %v548
    %v768 = vmul.f32 %v550, %v550
    %v769 = vmul.f32 %v553, %v553
    %v770 = vmul.f32 %v555, %v555
    %v771 = vmul.f32 %v558, %v558
    %v772 = vmul.f32 %v560, %v560
    %v773 = vmul.f32 %v563, %v563
    %v774 = vmul.f32 %v565, %v565
    %v775 = vsel %vm569, %v711, 0.0
    %v776 = vsel %vm569, %v712, 0.0
    %v777 = vadd.f32 %v775, %v776
    %v778 = vsel %vm569, %v713, 0.0
    %v779 = vadd.f32 %v777, %v778
    %v780 = vsel %vm569, %v714, 0.0
    %v781 = vadd.f32 %v779, %v780
    %v782 = vsel %vm569, %v715, 0.0
    %v783 = vadd.f32 %v781, %v782
    %v784 = vsel %vm569, %v716, 0.0
    %v785 = vadd.f32 %v783, %v784
    %v786 = vsel %vm569, %v717, 0.0
    %v787 = vadd.f32 %v785, %v786
    %v788 = vsel %vm569, %v718, 0.0
    %v789 = vadd.f32 %v787, %v788
    %v790 = vsel %vm569, %v719, 0.0
    %v791 = vadd.f32 %v789, %v790
    %v792 = vsel %vm569, %v720, 0.0
    %v793 = vadd.f32 %v791, %v792
    %v794 = vsel %vm569, %v721, 0.0
    %v795 = vadd.f32 %v793, %v794
    %v796 = vsel %vm569, %v722, 0.0
    %v797 = vadd.f32 %v795, %v796
    %v798 = vsel %vm569, %v723, 0.0
    %v799 = vadd.f32 %v797, %v798
    %v800 = vsel %vm569, %v724, 0.0
    %v801 = vadd.f32 %v799, %v800
    %v802 = vsel %vm569, %v725, 0.0
    %v803 = vadd.f32 %v801, %v802
    %v804 = vsel %vm569, %v726, 0.0
    %v805 = vadd.f32 %v803, %v804
    %v806 = vsel %vm569, %v727, 0.0
    %v807 = vadd.f32 %v805, %v806
    %v808 = vsel %vm569, %v728, 0.0
    %v809 = vadd.f32 %v807, %v808
    %v810 = vsel %vm569, %v729, 0.0
    %v811 = vadd.f32 %v809, %v810
    %v812 = vsel %vm569, %v730, 0.0
    %v813 = vadd.f32 %v811, %v812
    %v814 = vsel %vm569, %v731, 0.0
    %v815 = vadd.f32 %v813, %v814
    %v816 = vsel %vm569, %v732, 0.0
    %v817 = vadd.f32 %v815, %v816
    %v818 = vsel %vm569, %v733, 0.0
    %v819 = vadd.f32 %v817, %v818
    %v820 = vsel %vm569, %v734, 0.0
    %v821 = vadd.f32 %v819, %v820
    %v822 = vsel %vm569, %v735, 0.0
    %v823 = vadd.f32 %v821, %v822
    %v824 = vsel %vm569, %v736, 0.0
    %v825 = vadd.f32 %v823, %v824
    %v826 = vsel %vm569, %v737, 0.0
    %v827 = vadd.f32 %v825, %v826
    %v828 = vsel %vm569, %v738, 0.0
    %v829 = vadd.f32 %v827, %v828
    %v830 = vsel %vm569, %v739, 0.0
    %v831 = vadd.f32 %v829, %v830
    %v832 = vsel %vm569, %v740, 0.0
    %v833 = vadd.f32 %v831, %v832
    %v834 = vsel %vm569, %v741, 0.0
    %v835 = vadd.f32 %v833, %v834
    %v836 = vsel %vm569, %v742, 0.0
    %v837 = vadd.f32 %v835, %v836
    %v838 = vsel %vm569, %v743, 0.0
    %v839 = vadd.f32 %v837, %v838
    %v840 = vsel %vm569, %v744, 0.0
    %v841 = vadd.f32 %v839, %v840
    %v842 = vsel %vm569, %v745, 0.0
    %v843 = vadd.f32 %v841, %v842
    %v844 = vsel %vm569, %v746, 0.0
    %v845 = vadd.f32 %v843, %v844
    %v846 = vsel %vm569, %v747, 0.0
    %v847 = vadd.f32 %v845, %v846
    %v848 = vsel %vm569, %v748, 0.0
    %v849 = vadd.f32 %v847, %v848
    %v850 = vsel %vm569, %v749, 0.0
    %v851 = vadd.f32 %v849, %v850
    %v852 = vsel %vm569, %v750, 0.0
    %v853 = vadd.f32 %v851, %v852
    %v854 = vsel %vm569, %v751, 0.0
    %v855 = vadd.f32 %v853, %v854
    %v856 = vsel %vm569, %v752, 0.0
    %v857 = vadd.f32 %v855, %v856
    %v858 = vsel %vm569, %v753, 0.0
    %v859 = vadd.f32 %v857, %v858
    %v860 = vsel %vm569, %v754, 0.0
    %v861 = vadd.f32 %v859, %v860
    %v862 = vsel %vm569, %v755, 0.0
    %v863 = vadd.f32 %v861, %v862
    %v864 = vsel %vm569, %v756, 0.0
    %v865 = vadd.f32 %v863, %v864
    %v866 = vsel %vm569, %v757, 0.0
    %v867 = vadd.f32 %v865, %v866
    %v868 = vsel %vm569, %v758, 0.0
    %v869 = vadd.f32 %v867, %v868
    %v870 = vsel %vm569, %v759, 0.0
    %v871 = vadd.f32 %v869, %v870
    %v872 = vsel %vm569, %v760, 0.0
    %v873 = vadd.f32 %v871, %v872
    %v874 = vsel %vm569, %v761, 0.0
    %v875 = vadd.f32 %v873, %v874
    %v876 = vsel %vm569, %v762, 0.0
    %v877 = vadd.f32 %v875, %v876
    %v878 = vsel %vm569, %v763, 0.0
    %v879 = vadd.f32 %v877, %v878
    %v880 = vsel %vm569, %v764, 0.0
    %v881 = vadd.f32 %v879, %v880
    %v882 = vsel %vm569, %v765, 0.0
    %v883 = vadd.f32 %v881, %v882
    %v884 = vsel %vm569, %v766, 0.0
    %v885 = vadd.f32 %v883, %v884
    %v886 = vsel %vm569, %v767, 0.0
    %v887 = vadd.f32 %v885, %v886
    %v888 = vsel %vm569, %v768, 0.0
    %v889 = vadd.f32 %v887, %v888
    %v890 = vsel %vm569, %v769, 0.0
    %v891 = vadd.f32 %v889, %v890
    %v892 = vsel %vm569, %v770, 0.0
    %v893 = vadd.f32 %v891, %v892
    %v894 = vsel %vm569, %v771, 0.0
    %v895 = vadd.f32 %v893, %v894
    %v896 = vsel %vm569, %v772, 0.0
    %v897 = vadd.f32 %v895, %v896
    %v898 = vsel %vm569, %v773, 0.0
    %v899 = vadd.f32 %v897, %v898
    %v900 = vsel %vm569, %v774, 0.0
    %v901 = vadd.f32 %v899, %v900
    %v902 = vrot.slane %v901, 4
    %v903 = vadd.f32 %v901, %v902
    %v904 = vrot.slane %v903, 2
    %v905 = vadd.f32 %v903, %v904
    %v906 = vrot.slane %v905, 1
    %v907 = vadd.f32 %v905, %v906
    %v908 = vmul.f32 %v907, %v709
    %v909 = vmul.f32 %v710, %v710
    %v910 = vsub.f32 %v908, %v909
    %v911 = vsub.f32 %v408, %v710
    %v912 = vsub.f32 %v410, %v710
    %v913 = vsub.f32 %v413, %v710
    %v914 = vsub.f32 %v415, %v710
    %v915 = vsub.f32 %v418, %v710
    %v916 = vsub.f32 %v420, %v710
    %v917 = vsub.f32 %v423, %v710
    %v918 = vsub.f32 %v425, %v710
    %v919 = vsub.f32 %v428, %v710
    %v920 = vsub.f32 %v430, %v710
    %v921 = vsub.f32 %v433, %v710
    %v922 = vsub.f32 %v435, %v710
    %v923 = vsub.f32 %v438, %v710
    %v924 = vsub.f32 %v440, %v710
    %v925 = vsub.f32 %v443, %v710
    %v926 = vsub.f32 %v445, %v710
    %v927 = vsub.f32 %v448, %v710
    %v928 = vsub.f32 %v450, %v710
    %v929 = vsub.f32 %v453, %v710
    %v930 = vsub.f32 %v455, %v710
    %v931 = vsub.f32 %v458, %v710
    %v932 = vsub.f32 %v460, %v710
    %v933 = vsub.f32 %v463, %v710
    %v934 = vsub.f32 %v465, %v710
    %v935 = vsub.f32 %v468, %v710
    %v936 = vsub.f32 %v470, %v710
    %v937 = vsub.f32 %v473, %v710
    %v938 = vsub.f32 %v475, %v710
    %v939 = vsub.f32 %v478, %v710
    %v940 = vsub.f32 %v480, %v710
    %v941 = vsub.f32 %v483, %v710
    %v942 = vsub.f32 %v485, %v710
    %v943 = vsub.f32 %v488, %v710
    %v944 = vsub.f32 %v490, %v710
    %v945 = vsub.f32 %v493, %v710
    %v946 = vsub.f32 %v495, %v710
    %v947 = vsub.f32 %v498, %v710
    %v948 = vsub.f32 %v500, %v710
    %v949 = vsub.f32 %v503, %v710
    %v950 = vsub.f32 %v505, %v710
    %v951 = vsub.f32 %v508, %v710
    %v952 = vsub.f32 %v510, %v710
    %v953 = vsub.f32 %v513, %v710
    %v954 = vsub.f32 %v515, %v710
    %v955 = vsub.f32 %v518, %v710
    %v956 = vsub.f32 %v520, %v710
    %v957 = vsub.f32 %v523, %v710
    %v958 = vsub.f32 %v525, %v710
    %v959 = vsub.f32 %v528, %v710
    %v960 = vsub.f32 %v530, %v710
    %v961 = vsub.f32 %v533, %v710
    %v962 = vsub.f32 %v535, %v710
    %v963 = vsub.f32 %v538, %v710
    %v964 = vsub.f32 %v540, %v710
    %v965 = vsub.f32 %v543, %v710
    %v966 = vsub.f32 %v545, %v710
    %v967 = vsub.f32 %v548, %v710
    %v968 = vsub.f32 %v550, %v710
    %v969 = vsub.f32 %v553, %v710
    %v970 = vsub.f32 %v555, %v710
    %v971 = vsub.f32 %v558, %v710
    %v972 = vsub.f32 %v560, %v710
    %v973 = vsub.f32 %v563, %v710
    %v974 = vsub.f32 %v565, %v710
    %v975 = vadd.f32 %v910, 1e-05
    %v976 = vrsqrt.pop %v975
    %v977 = vmul.f32 %v976, %v975
    %v978 = vmul.f32 %v977, %v976
    %v979 = vmul.f32 0.5, %v978
    %v980 = vsub.f32 1.5, %v979
    %v981 = vmul.f32 %v976, %v980
    %vm982 = vweird.f32 %v975
    %vm983 = vweird.f32 %v976
    %vm984 = vmor %vm982, %vm983
    %v985 = vsel %vm984, %v976, %v981
    %v986 = vmul.f32 %v911, %v985
    %v987 = vmul.f32 %v912, %v985
    %v988 = vmul.f32 %v913, %v985
    %v989 = vmul.f32 %v914, %v985
    %v990 = vmul.f32 %v915, %v985
    %v991 = vmul.f32 %v916, %v985
    %v992 = vmul.f32 %v917, %v985
    %v993 = vmul.f32 %v918, %v985
    %v994 = vmul.f32 %v919, %v985
    %v995 = vmul.f32 %v920, %v985
    %v996 = vmul.f32 %v921, %v985
    %v997 = vmul.f32 %v922, %v985
    %v998 = vmul.f32 %v923, %v985
    %v999 = vmul.f32 %v924, %v985
    %v1000 = vmul.f32 %v925, %v985
    %v1001 = vmul.f32 %v926, %v985
    %v1002 = vmul.f32 %v927, %v985
    %v1003 = vmul.f32 %v928, %v985
    %v1004 = vmul.f32 %v929, %v985
    %v1005 = vmul.f32 %v930, %v985
    %v1006 = vmul.f32 %v931, %v985
    %v1007 = vmul.f32 %v932, %v985
    %v1008 = vmul.f32 %v933, %v985
    %v1009 = vmul.f32 %v934, %v985
    %v1010 = vmul.f32 %v935, %v985
    %v1011 = vmul.f32 %v936, %v985
    %v1012 = vmul.f32 %v937, %v985
    %v1013 = vmul.f32 %v938, %v985
    %v1014 = vmul.f32 %v939, %v985
    %v1015 = vmul.f32 %v940, %v985
    %v1016 = vmul.f32 %v941, %v985
    %v1017 = vmul.f32 %v942, %v985
    %v1018 = vmul.f32 %v943, %v985
    %v1019 = vmul.f32 %v944, %v985
    %v1020 = vmul.f32 %v945, %v985
    %v1021 = vmul.f32 %v946, %v985
    %v1022 = vmul.f32 %v947, %v985
    %v1023 = vmul.f32 %v948, %v985
    %v1024 = vmul.f32 %v949, %v985
    %v1025 = vmul.f32 %v950, %v985
    %v1026 = vmul.f32 %v951, %v985
    %v1027 = vmul.f32 %v952, %v985
    %v1028 = vmul.f32 %v953, %v985
    %v1029 = vmul.f32 %v954, %v985
    %v1030 = vmul.f32 %v955, %v985
    %v1031 = vmul.f32 %v956, %v985
    %v1032 = vmul.f32 %v957, %v985
    %v1033 = vmul.f32 %v958, %v985
    %v1034 = vmul.f32 %v959, %v985
    %v1035 = vmul.f32 %v960, %v985
    %v1036 = vmul.f32 %v961, %v985
    %v1037 = vmul.f32 %v962, %v985
    %v1038 = vmul.f32 %v963, %v985
    %v1039 = vmul.f32 %v964, %v985
    %v1040 = vmul.f32 %v965, %v985
    %v1041 = vmul.f32 %v966, %v985
    %v1042 = vmul.f32 %v967, %v985
    %v1043 = vmul.f32 %v968, %v985
    %v1044 = vmul.f32 %v969, %v985
    %v1045 = vmul.f32 %v970, %v985
    %v1046 = vmul.f32 %v971, %v985
    %v1047 = vmul.f32 %v972, %v985
    %v1048 = vmul.f32 %v973, %v985
    %v1049 = vmul.f32 %v974, %v985
    %v1051 = vperm.slane %v567, 0
    %v1053 = vmul.f32 %v986, %v1051
    %v1054 = vmul.f32 %v987, %v1051
    %v1055 = vmul.f32 %v988, %v1051
    %v1056 = vmul.f32 %v989, %v1051
    %v1057 = vmul.f32 %v990, %v1051
    %v1058 = vmul.f32 %v991, %v1051
    %v1059 = vmul.f32 %v992, %v1051
    %v1060 = vmul.f32 %v993, %v1051
    %v1061 = vmul.f32 %v994, %v1051
    %v1062 = vmul.f32 %v995, %v1051
    %v1063 = vmul.f32 %v996, %v1051
    %v1064 = vmul.f32 %v997, %v1051
    %v1065 = vmul.f32 %v998, %v1051
    %v1066 = vmul.f32 %v999, %v1051
    %v1067 = vmul.f32 %v1000, %v1051
    %v1068 = vmul.f32 %v1001, %v1051
    %v1069 = vmul.f32 %v1002, %v1051
    %v1070 = vmul.f32 %v1003, %v1051
    %v1071 = vmul.f32 %v1004, %v1051
    %v1072 = vmul.f32 %v1005, %v1051
    %v1073 = vmul.f32 %v1006, %v1051
    %v1074 = vmul.f32 %v1007, %v1051
    %v1075 = vmul.f32 %v1008, %v1051
    %v1076 = vmul.f32 %v1009, %v1051
    %v1077 = vmul.f32 %v1010, %v1051
    %v1078 = vmul.f32 %v1011, %v1051
    %v1079 = vmul.f32 %v1012, %v1051
    %v1080 = vmul.f32 %v1013, %v1051
    %v1081 = vmul.f32 %v1014, %v1051
    %v1082 = vmul.f32 %v1015, %v1051
    %v1083 = vmul.f32 %v1016, %v1051
    %v1084 = vmul.f32 %v1017, %v1051
    %v1085 = vmul.f32 %v1018, %v1051
    %v1086 = vmul.f32 %v1019, %v1051
    %v1087 = vmul.f32 %v1020, %v1051
    %v1088 = vmul.f32 %v1021, %v1051
    %v1089 = vmul.f32 %v1022, %v1051
    %v1090 = vmul.f32 %v1023, %v1051
    %v1091 = vmul.f32 %v1024, %v1051
    %v1092 = vmul.f32 %v1025, %v1051
    %v1093 = vmul.f32 %v1026, %v1051
    %v1094 = vmul.f32 %v1027, %v1051
    %v1095 = vmul.f32 %v1028, %v1051
    %v1096 = vmul.f32 %v1029, %v1051
    %v1097 = vmul.f32 %v1030, %v1051
    %v1098 = vmul.f32 %v1031, %v1051
    %v1099 = vmul.f32 %v1032, %v1051
    %v1100 = vmul.f32 %v1033, %v1051
    %v1101 = vmul.f32 %v1034, %v1051
    %v1102 = vmul.f32 %v1035, %v1051
    %v1103 = vmul.f32 %v1036, %v1051
    %v1104 = vmul.f32 %v1037, %v1051
    %v1105 = vmul.f32 %v1038, %v1051
    %v1106 = vmul.f32 %v1039, %v1051
    %v1107 = vmul.f32 %v1040, %v1051
    %v1108 = vmul.f32 %v1041, %v1051
    %v1109 = vmul.f32 %v1042, %v1051
    %v1110 = vmul.f32 %v1043, %v1051
    %v1111 = vmul.f32 %v1044, %v1051
    %v1112 = vmul.f32 %v1045, %v1051
    %v1113 = vmul.f32 %v1046, %v1051
    %v1114 = vmul.f32 %v1047, %v1051
    %v1115 = vmul.f32 %v1048, %v1051
    %v1116 = vmul.f32 %v1049, %v1051
    %v1118 = vperm.slane %v568, 0
    %v1120 = vadd.f32 %v1053, %v1118
    %v1121 = vadd.f32 %v1054, %v1118
    %v1122 = vadd.f32 %v1055, %v1118
    %v1123 = vadd.f32 %v1056, %v1118
    %v1124 = vadd.f32 %v1057, %v1118
    %v1125 = vadd.f32 %v1058, %v1118
    %v1126 = vadd.f32 %v1059, %v1118
    %v1127 = vadd.f32 %v1060, %v1118
    %v1128 = vadd.f32 %v1061, %v1118
    %v1129 = vadd.f32 %v1062, %v1118
    %v1130 = vadd.f32 %v1063, %v1118
    %v1131 = vadd.f32 %v1064, %v1118
    %v1132 = vadd.f32 %v1065, %v1118
    %v1133 = vadd.f32 %v1066, %v1118
    %v1134 = vadd.f32 %v1067, %v1118
    %v1135 = vadd.f32 %v1068, %v1118
    %v1136 = vadd.f32 %v1069, %v1118
    %v1137 = vadd.f32 %v1070, %v1118
    %v1138 = vadd.f32 %v1071, %v1118
    %v1139 = vadd.f32 %v1072, %v1118
    %v1140 = vadd.f32 %v1073, %v1118
    %v1141 = vadd.f32 %v1074, %v1118
    %v1142 = vadd.f32 %v1075, %v1118
    %v1143 = vadd.f32 %v1076, %v1118
    %v1144 = vadd.f32 %v1077, %v1118
    %v1145 = vadd.f32 %v1078, %v1118
    %v1146 = vadd.f32 %v1079, %v1118
    %v1147 = vadd.f32 %v1080, %v1118
    %v1148 = vadd.f32 %v1081, %v1118
    %v1149 = vadd.f32 %v1082, %v1118
    %v1150 = vadd.f32 %v1083, %v1118
    %v1151 = vadd.f32 %v1084, %v1118
    %v1152 = vadd.f32 %v1085, %v1118
    %v1153 = vadd.f32 %v1086, %v1118
    %v1154 = vadd.f32 %v1087, %v1118
    %v1155 = vadd.f32 %v1088, %v1118
    %v1156 = vadd.f32 %v1089, %v1118
    %v1157 = vadd.f32 %v1090, %v1118
    %v1158 = vadd.f32 %v1091, %v1118
    %v1159 = vadd.f32 %v1092, %v1118
    %v1160 = vadd.f32 %v1093, %v1118
    %v1161 = vadd.f32 %v1094, %v1118
    %v1162 = vadd.f32 %v1095, %v1118
    %v1163 = vadd.f32 %v1096, %v1118
    %v1164 = vadd.f32 %v1097, %v1118
    %v1165 = vadd.f32 %v1098, %v1118
    %v1166 = vadd.f32 %v1099, %v1118
    %v1167 = vadd.f32 %v1100, %v1118
    %v1168 = vadd.f32 %v1101, %v1118
    %v1169 = vadd.f32 %v1102, %v1118
    %v1170 = vadd.f32 %v1103, %v1118
    %v1171 = vadd.f32 %v1104, %v1118
    %v1172 = vadd.f32 %v1105, %v1118
    %v1173 = vadd.f32 %v1106, %v1118
    %v1174 = vadd.f32 %v1107, %v1118
    %v1175 = vadd.f32 %v1108, %v1118
    %v1176 = vadd.f32 %v1109, %v1118
    %v1177 = vadd.f32 %v1110, %v1118
    %v1178 = vadd.f32 %v1111, %v1118
    %v1179 = vadd.f32 %v1112, %v1118
    %v1180 = vadd.f32 %v1113, %v1118
    %v1181 = vadd.f32 %v1114, %v1118
    %v1182 = vadd.f32 %v1115, %v1118
    %v1183 = vadd.f32 %v1116, %v1118
    %v1184 = vmax.f32 %v1120, 0.0
    %v1185 = vmax.f32 %v1121, 0.0
    %v1186 = vmax.f32 %v1122, 0.0
    %v1187 = vmax.f32 %v1123, 0.0
    %v1188 = vmax.f32 %v1124, 0.0
    %v1189 = vmax.f32 %v1125, 0.0
    %v1190 = vmax.f32 %v1126, 0.0
    %v1191 = vmax.f32 %v1127, 0.0
    %v1192 = vmax.f32 %v1128, 0.0
    %v1193 = vmax.f32 %v1129, 0.0
    %v1194 = vmax.f32 %v1130, 0.0
    %v1195 = vmax.f32 %v1131, 0.0
    %v1196 = vmax.f32 %v1132, 0.0
    %v1197 = vmax.f32 %v1133, 0.0
    %v1198 = vmax.f32 %v1134, 0.0
    %v1199 = vmax.f32 %v1135, 0.0
    %v1200 = vmax.f32 %v1136, 0.0
    %v1201 = vmax.f32 %v1137, 0.0
    %v1202 = vmax.f32 %v1138, 0.0
    %v1203 = vmax.f32 %v1139, 0.0
    %v1204 = vmax.f32 %v1140, 0.0
    %v1205 = vmax.f32 %v1141, 0.0
    %v1206 = vmax.f32 %v1142, 0.0
    %v1207 = vmax.f32 %v1143, 0.0
    %v1208 = vmax.f32 %v1144, 0.0
    %v1209 = vmax.f32 %v1145, 0.0
    %v1210 = vmax.f32 %v1146, 0.0
    %v1211 = vmax.f32 %v1147, 0.0
    %v1212 = vmax.f32 %v1148, 0.0
    %v1213 = vmax.f32 %v1149, 0.0
    %v1214 = vmax.f32 %v1150, 0.0
    %v1215 = vmax.f32 %v1151, 0.0
    %v1216 = vmax.f32 %v1152, 0.0
    %v1217 = vmax.f32 %v1153, 0.0
    %v1218 = vmax.f32 %v1154, 0.0
    %v1219 = vmax.f32 %v1155, 0.0
    %v1220 = vmax.f32 %v1156, 0.0
    %v1221 = vmax.f32 %v1157, 0.0
    %v1222 = vmax.f32 %v1158, 0.0
    %v1223 = vmax.f32 %v1159, 0.0
    %v1224 = vmax.f32 %v1160, 0.0
    %v1225 = vmax.f32 %v1161, 0.0
    %v1226 = vmax.f32 %v1162, 0.0
    %v1227 = vmax.f32 %v1163, 0.0
    %v1228 = vmax.f32 %v1164, 0.0
    %v1229 = vmax.f32 %v1165, 0.0
    %v1230 = vmax.f32 %v1166, 0.0
    %v1231 = vmax.f32 %v1167, 0.0
    %v1232 = vmax.f32 %v1168, 0.0
    %v1233 = vmax.f32 %v1169, 0.0
    %v1234 = vmax.f32 %v1170, 0.0
    %v1235 = vmax.f32 %v1171, 0.0
    %v1236 = vmax.f32 %v1172, 0.0
    %v1237 = vmax.f32 %v1173, 0.0
    %v1238 = vmax.f32 %v1174, 0.0
    %v1239 = vmax.f32 %v1175, 0.0
    %v1240 = vmax.f32 %v1176, 0.0
    %v1241 = vmax.f32 %v1177, 0.0
    %v1242 = vmax.f32 %v1178, 0.0
    %v1243 = vmax.f32 %v1179, 0.0
    %v1244 = vmax.f32 %v1180, 0.0
    %v1245 = vmax.f32 %v1181, 0.0
    %v1246 = vmax.f32 %v1182, 0.0
    %v1247 = vmax.f32 %v1183, 0.0
    %v1248 = vsel %vm569, %v1184, 0.0
    %v1249 = vsel %vm569, %v1185, 0.0
    %v1250 = vadd.f32 %v1248, %v1249
    %v1251 = vsel %vm569, %v1186, 0.0
    %v1252 = vadd.f32 %v1250, %v1251
    %v1253 = vsel %vm569, %v1187, 0.0
    %v1254 = vadd.f32 %v1252, %v1253
    %v1255 = vsel %vm569, %v1188, 0.0
    %v1256 = vadd.f32 %v1254, %v1255
    %v1257 = vsel %vm569, %v1189, 0.0
    %v1258 = vadd.f32 %v1256, %v1257
    %v1259 = vsel %vm569, %v1190, 0.0
    %v1260 = vadd.f32 %v1258, %v1259
    %v1261 = vsel %vm569, %v1191, 0.0
    %v1262 = vadd.f32 %v1260, %v1261
    %v1263 = vsel %vm569, %v1192, 0.0
    %v1264 = vadd.f32 %v1262, %v1263
    %v1265 = vsel %vm569, %v1193, 0.0
    %v1266 = vadd.f32 %v1264, %v1265
    %v1267 = vsel %vm569, %v1194, 0.0
    %v1268 = vadd.f32 %v1266, %v1267
    %v1269 = vsel %vm569, %v1195, 0.0
    %v1270 = vadd.f32 %v1268, %v1269
    %v1271 = vsel %vm569, %v1196, 0.0
    %v1272 = vadd.f32 %v1270, %v1271
    %v1273 = vsel %vm569, %v1197, 0.0
    %v1274 = vadd.f32 %v1272, %v1273
    %v1275 = vsel %vm569, %v1198, 0.0
    %v1276 = vadd.f32 %v1274, %v1275
    %v1277 = vsel %vm569, %v1199, 0.0
    %v1278 = vadd.f32 %v1276, %v1277
    %v1279 = vsel %vm569, %v1200, 0.0
    %v1280 = vadd.f32 %v1278, %v1279
    %v1281 = vsel %vm569, %v1201, 0.0
    %v1282 = vadd.f32 %v1280, %v1281
    %v1283 = vsel %vm569, %v1202, 0.0
    %v1284 = vadd.f32 %v1282, %v1283
    %v1285 = vsel %vm569, %v1203, 0.0
    %v1286 = vadd.f32 %v1284, %v1285
    %v1287 = vsel %vm569, %v1204, 0.0
    %v1288 = vadd.f32 %v1286, %v1287
    %v1289 = vsel %vm569, %v1205, 0.0
    %v1290 = vadd.f32 %v1288, %v1289
    %v1291 = vsel %vm569, %v1206, 0.0
    %v1292 = vadd.f32 %v1290, %v1291
    %v1293 = vsel %vm569, %v1207, 0.0
    %v1294 = vadd.f32 %v1292, %v1293
    %v1295 = vsel %vm569, %v1208, 0.0
    %v1296 = vadd.f32 %v1294, %v1295
    %v1297 = vsel %vm569, %v1209, 0.0
    %v1298 = vadd.f32 %v1296, %v1297
    %v1299 = vsel %vm569, %v1210, 0.0
    %v1300 = vadd.f32 %v1298, %v1299
    %v1301 = vsel %vm569, %v1211, 0.0
    %v1302 = vadd.f32 %v1300, %v1301
    %v1303 = vsel %vm569, %v1212, 0.0
    %v1304 = vadd.f32 %v1302, %v1303
    %v1305 = vsel %vm569, %v1213, 0.0
    %v1306 = vadd.f32 %v1304, %v1305
    %v1307 = vsel %vm569, %v1214, 0.0
    %v1308 = vadd.f32 %v1306, %v1307
    %v1309 = vsel %vm569, %v1215, 0.0
    %v1310 = vadd.f32 %v1308, %v1309
    %v1311 = vrot.slane %v1310, 4
    %v1312 = vadd.f32 %v1310, %v1311
    %v1313 = vrot.slane %v1312, 2
    %v1314 = vadd.f32 %v1312, %v1313
    %v1315 = vrot.slane %v1314, 1
    %v1316 = vadd.f32 %v1314, %v1315
    %v1317 = vrcp.pop 256.0
    %v1318 = vmul.f32 256.0, %v1317
    %v1319 = vsub.f32 1.0, %v1318
    %v1320 = vmul.f32 %v1317, %v1319
    %v1321 = vadd.f32 %v1317, %v1320
    %vm1322 = vweird.f32 %v1317
    %v1323 = vsel %vm1322, %v1317, %v1321
    %v1324 = vmul.f32 %v1316, %v1323
    %v1325 = vsel %vm569, %v1216, 0.0
    %v1326 = vsel %vm569, %v1217, 0.0
    %v1327 = vadd.f32 %v1325, %v1326
    %v1328 = vsel %vm569, %v1218, 0.0
    %v1329 = vadd.f32 %v1327, %v1328
    %v1330 = vsel %vm569, %v1219, 0.0
    %v1331 = vadd.f32 %v1329, %v1330
    %v1332 = vsel %vm569, %v1220, 0.0
    %v1333 = vadd.f32 %v1331, %v1332
    %v1334 = vsel %vm569, %v1221, 0.0
    %v1335 = vadd.f32 %v1333, %v1334
    %v1336 = vsel %vm569, %v1222, 0.0
    %v1337 = vadd.f32 %v1335, %v1336
    %v1338 = vsel %vm569, %v1223, 0.0
    %v1339 = vadd.f32 %v1337, %v1338
    %v1340 = vsel %vm569, %v1224, 0.0
    %v1341 = vadd.f32 %v1339, %v1340
    %v1342 = vsel %vm569, %v1225, 0.0
    %v1343 = vadd.f32 %v1341, %v1342
    %v1344 = vsel %vm569, %v1226, 0.0
    %v1345 = vadd.f32 %v1343, %v1344
    %v1346 = vsel %vm569, %v1227, 0.0
    %v1347 = vadd.f32 %v1345, %v1346
    %v1348 = vsel %vm569, %v1228, 0.0
    %v1349 = vadd.f32 %v1347, %v1348
    %v1350 = vsel %vm569, %v1229, 0.0
    %v1351 = vadd.f32 %v1349, %v1350
    %v1352 = vsel %vm569, %v1230, 0.0
    %v1353 = vadd.f32 %v1351, %v1352
    %v1354 = vsel %vm569, %v1231, 0.0
    %v1355 = vadd.f32 %v1353, %v1354
    %v1356 = vsel %vm569, %v1232, 0.0
    %v1357 = vadd.f32 %v1355, %v1356
    %v1358 = vsel %vm569, %v1233, 0.0
    %v1359 = vadd.f32 %v1357, %v1358
    %v1360 = vsel %vm569, %v1234, 0.0
    %v1361 = vadd.f32 %v1359, %v1360
    %v1362 = vsel %vm569, %v1235, 0.0
    %v1363 = vadd.f32 %v1361, %v1362
    %v1364 = vsel %vm569, %v1236, 0.0
    %v1365 = vadd.f32 %v1363, %v1364
    %v1366 = vsel %vm569, %v1237, 0.0
    %v1367 = vadd.f32 %v1365, %v1366
    %v1368 = vsel %vm569, %v1238, 0.0
    %v1369 = vadd.f32 %v1367, %v1368
    %v1370 = vsel %vm569, %v1239, 0.0
    %v1371 = vadd.f32 %v1369, %v1370
    %v1372 = vsel %vm569, %v1240, 0.0
    %v1373 = vadd.f32 %v1371, %v1372
    %v1374 = vsel %vm569, %v1241, 0.0
    %v1375 = vadd.f32 %v1373, %v1374
    %v1376 = vsel %vm569, %v1242, 0.0
    %v1377 = vadd.f32 %v1375, %v1376
    %v1378 = vsel %vm569, %v1243, 0.0
    %v1379 = vadd.f32 %v1377, %v1378
    %v1380 = vsel %vm569, %v1244, 0.0
    %v1381 = vadd.f32 %v1379, %v1380
    %v1382 = vsel %vm569, %v1245, 0.0
    %v1383 = vadd.f32 %v1381, %v1382
    %v1384 = vsel %vm569, %v1246, 0.0
    %v1385 = vadd.f32 %v1383, %v1384
    %v1386 = vsel %vm569, %v1247, 0.0
    %v1387 = vadd.f32 %v1385, %v1386
    %v1388 = vrot.slane %v1387, 4
    %v1389 = vadd.f32 %v1387, %v1388
    %v1390 = vrot.slane %v1389, 2
    %v1391 = vadd.f32 %v1389, %v1390
    %v1392 = vrot.slane %v1391, 1
    %v1393 = vadd.f32 %v1391, %v1392
    %v1394 = vmul.f32 %v1393, %v1323
    %vm1395 = vcmask 1040384
    %v1396 = vsel %vm1395, %v1324, %v1394
    %v1397 = vpack.c.bf16 %v1396, %v1396
    %v1398 = vld [vmem:[%s4] sm:$0xff]
    %v1399 = vld [vmem:[%s4 + $0x8] sm:$0xff]
    %v1400 = vld [vmem:[%s4 + $0x10] sm:$0xff]
    %v1401 = vld [vmem:[%s4 + $0x18] sm:$0xff]
    %v1402 = vld [vmem:[%s4 + $0x20] sm:$0xff]
    %v1403 = vld [vmem:[%s4 + $0x28] sm:$0xff]
    %v1404 = vld [vmem:[%s4 + $0x30] sm:$0xff]
    %v1405 = vld [vmem:[%s4 + $0x38] sm:$0xff]
    %v1406 = vld [vmem:[%s5] sm:$0x3]
    %v1408 = vperm.slane %v1406, 0
    %v1409 = vperm.slane %v1406, 1
    %v1420 = vunpack.c.l.b16 %v1398
    %v1421 = vunpack.c.h.b16 %v1398
    %v1422 = vunpack.c.l.b16 %v1399
    %v1423 = vunpack.c.h.b16 %v1399
    %v1424 = vunpack.c.l.b16 %v1400
    %v1425 = vunpack.c.h.b16 %v1400
    %v1426 = vunpack.c.l.b16 %v1401
    %v1427 = vunpack.c.h.b16 %v1401
    %v1428 = vunpack.c.l.b16 %v1402
    %v1429 = vunpack.c.h.b16 %v1402
    %v1430 = vunpack.c.l.b16 %v1403
    %v1431 = vunpack.c.h.b16 %v1403
    %v1432 = vunpack.c.l.b16 %v1404
    %v1433 = vunpack.c.h.b16 %v1404
    %v1434 = vunpack.c.l.b16 %v1405
    %v1435 = vunpack.c.h.b16 %v1405
    %v1436 = vpack.c.b16 %v1422, %v1420
    %v1437 = vpack.c.b16 %v1423, %v1421
    %v1438 = vpack.c.b16 %v1426, %v1424
    %v1439 = vpack.c.b16 %v1427, %v1425
    %v1440 = vpack.c.b16 %v1430, %v1428
    %v1441 = vpack.c.b16 %v1431, %v1429
    %v1442 = vpack.c.b16 %v1434, %v1432
    %v1443 = vpack.c.b16 %v1435, %v1433
    %v1453 = vsel %vm569, %v1397, 0
    %1455 = vmatpush.bf16.msra.mxu0 0
    %1456 = vmatpush.bf16.msra.mxu0 0
    %1457 = vmatpush.bf16.msra.mxu0 0
    %1458 = vmatpush.bf16.msra.mxu0 0
    %1459 = vmatpush.bf16.msra.mxu0 %v1442
    %1460 = vmatpush.bf16.msra.mxu0 %v1440
    %1461 = vmatpush.bf16.msra.mxu0 %v1438
    %1462 = vmatpush.bf16.msra.mxu0 %v1436
    %1463 = vmatmul.bf16.gmra.mxu0 %v1453
    %v1464 = vpop.f32.mrf.mxu0
    %v1465 = vadd.f32 %v1408, %v1464
    %v1466 = vpop.f32.mrf.mxu0
    %1467 = vdwg.mxu0
    %1468 = vmatpush.bf16.msra.mxu0 0
    %1469 = vmatpush.bf16.msra.mxu0 0
    %1470 = vmatpush.bf16.msra.mxu0 0
    %1471 = vmatpush.bf16.msra.mxu0 0
    %1472 = vmatpush.bf16.msra.mxu0 %v1443
    %1473 = vmatpush.bf16.msra.mxu0 %v1441
    %1474 = vmatpush.bf16.msra.mxu0 %v1439
    %1475 = vmatpush.bf16.msra.mxu0 %v1437
    %1476 = vmatmul.bf16.gmra.mxu0 %v1453
    %v1477 = vpop.f32.mrf.mxu0
    %v1478 = vadd.f32 %v1409, %v1477
    %v1479 = vpop.f32.mrf.mxu0
    %1480 = vdwg.mxu0
    %v1481 = vld [vmem:[%s6] sm:$0x3]
    %v1482 = vld [vmem:[%s7] sm:$0x3]
    %vm1483 = vcmask 1041408
    %v1484 = vsel %vm1483, %v1465, 0.0
    %v1485 = vrot.slane %v1484, 4
    %v1486 = vadd.f32 %v1484, %v1485
    %v1487 = vrot.slane %v1486, 2
    %v1488 = vadd.f32 %v1486, %v1487
    %v1489 = vrot.slane %v1488, 1
    %v1490 = vadd.f32 %v1488, %v1489
    %v1491 = vsel %vm1483, %v1478, 0.0
    %v1492 = vrot.slane %v1491, 4
    %v1493 = vadd.f32 %v1491, %v1492
    %v1494 = vrot.slane %v1493, 2
    %v1495 = vadd.f32 %v1493, %v1494
    %v1496 = vrot.slane %v1495, 1
    %v1497 = vadd.f32 %v1495, %v1496
    %v1498 = vrcp.pop 2.0
    %v1499 = vmul.f32 2.0, %v1498
    %v1500 = vsub.f32 1.0, %v1499
    %v1501 = vmul.f32 %v1498, %v1500
    %v1502 = vadd.f32 %v1498, %v1501
    %vm1503 = vweird.f32 %v1498
    %v1504 = vsel %vm1503, %v1498, %v1502
    %v1505 = vmul.f32 %v1490, %v1504
    %v1506 = vmul.f32 %v1497, %v1504
    %v1507 = vmul.f32 %v1465, %v1465
    %v1508 = vmul.f32 %v1478, %v1478
    %v1509 = vsel %vm1483, %v1507, 0.0
    %v1510 = vrot.slane %v1509, 4
    %v1511 = vadd.f32 %v1509, %v1510
    %v1512 = vrot.slane %v1511, 2
    %v1513 = vadd.f32 %v1511, %v1512
    %v1514 = vrot.slane %v1513, 1
    %v1515 = vadd.f32 %v1513, %v1514
    %v1516 = vsel %vm1483, %v1508, 0.0
    %v1517 = vrot.slane %v1516, 4
    %v1518 = vadd.f32 %v1516, %v1517
    %v1519 = vrot.slane %v1518, 2
    %v1520 = vadd.f32 %v1518, %v1519
    %v1521 = vrot.slane %v1520, 1
    %v1522 = vadd.f32 %v1520, %v1521
    %v1523 = vmul.f32 %v1515, %v1504
    %v1524 = vmul.f32 %v1522, %v1504
    %v1525 = vmul.f32 %v1505, %v1505
    %v1526 = vmul.f32 %v1506, %v1506
    %v1527 = vsub.f32 %v1523, %v1525
    %v1528 = vsub.f32 %v1524, %v1526
    %v1529 = vsub.f32 %v1465, %v1505
    %v1530 = vsub.f32 %v1478, %v1506
    %v1531 = vadd.f32 %v1527, 1e-05
    %v1532 = vadd.f32 %v1528, 1e-05
    %v1533 = vrsqrt.pop %v1531
    %v1534 = vmul.f32 %v1533, %v1531
    %v1535 = vmul.f32 %v1534, %v1533
    %v1536 = vmul.f32 0.5, %v1535
    %v1537 = vsub.f32 1.5, %v1536
    %v1538 = vmul.f32 %v1533, %v1537
    %vm1539 = vweird.f32 %v1531
    %vm1540 = vweird.f32 %v1533
    %vm1541 = vmor %vm1539, %vm1540
    %v1542 = vsel %vm1541, %v1533, %v1538
    %v1543 = vrsqrt.pop %v1532
    %v1544 = vmul.f32 %v1543, %v1532
    %v1545 = vmul.f32 %v1544, %v1543
    %v1546 = vmul.f32 0.5, %v1545
    %v1547 = vsub.f32 1.5, %v1546
    %v1548 = vmul.f32 %v1543, %v1547
    %vm1549 = vweird.f32 %v1532
    %vm1550 = vweird.f32 %v1543
    %vm1551 = vmor %vm1549, %vm1550
    %v1552 = vsel %vm1551, %v1543, %v1548
    %v1553 = vmul.f32 %v1529, %v1542
    %v1554 = vmul.f32 %v1530, %v1552
    %v1556 = vperm.slane %v1481, 0
    %v1557 = vperm.slane %v1481, 1
    %v1560 = vmul.f32 %v1553, %v1556
    %v1561 = vmul.f32 %v1554, %v1557
    %v1563 = vperm.slane %v1482, 0
    %v1564 = vperm.slane %v1482, 1
    %v1567 = vadd.f32 %v1560, %v1563
    %v1568 = vadd.f32 %v1561, %v1564
    %v1569 = vmax.f32 %v1567, 0.0
    %v1570 = vmax.f32 %v1568, 0.0
    %v1571 = vpack.c.bf16 %v1569, %v1569
    %v1572 = vpack.c.bf16 %v1570, %v1570
    %v1573 = vld [vmem:[%s8] sm:$0xff]
    %v1574 = vld [vmem:[%s8 + $0x8] sm:$0xff]
    %v1575 = vld [vmem:[%s8 + $0x10] sm:$0xff]
    %v1576 = vld [vmem:[%s8 + $0x18] sm:$0xff]
    %v1577 = vld [vmem:[%s8 + $0x20] sm:$0xff]
    %v1578 = vld [vmem:[%s8 + $0x28] sm:$0xff]
    %v1579 = vld [vmem:[%s8 + $0x30] sm:$0xff]
    %v1580 = vld [vmem:[%s8 + $0x38] sm:$0xff]
    %v1581 = vld [vmem:[%s8 + $0x40] sm:$0xff]
    %v1582 = vld [vmem:[%s8 + $0x48] sm:$0xff]
    %v1583 = vld [vmem:[%s8 + $0x50] sm:$0xff]
    %v1584 = vld [vmem:[%s8 + $0x58] sm:$0xff]
    %v1585 = vld [vmem:[%s8 + $0x60] sm:$0xff]
    %v1586 = vld [vmem:[%s8 + $0x68] sm:$0xff]
    %v1587 = vld [vmem:[%s8 + $0x70] sm:$0xff]
    %v1588 = vld [vmem:[%s8 + $0x78] sm:$0xff]
    %v1589 = vld [vmem:[%s8 + $0x80] sm:$0xff]
    %v1590 = vld [vmem:[%s8 + $0x88] sm:$0xff]
    %v1591 = vld [vmem:[%s8 + $0x90] sm:$0xff]
    %v1592 = vld [vmem:[%s8 + $0x98] sm:$0xff]
    %v1593 = vld [vmem:[%s8 + $0xa0] sm:$0xff]
    %v1594 = vld [vmem:[%s8 + $0xa8] sm:$0xff]
    %v1595 = vld [vmem:[%s8 + $0xb0] sm:$0xff]
    %v1596 = vld [vmem:[%s8 + $0xb8] sm:$0xff]
    %v1597 = vld [vmem:[%s8 + $0xc0] sm:$0xff]
    %v1598 = vld [vmem:[%s8 + $0xc8] sm:$0xff]
    %v1599 = vld [vmem:[%s8 + $0xd0] sm:$0xff]
    %v1600 = vld [vmem:[%s8 + $0xd8] sm:$0xff]
    %v1601 = vld [vmem:[%s8 + $0xe0] sm:$0xff]
    %v1602 = vld [vmem:[%s8 + $0xe8] sm:$0xff]
    %v1603 = vld [vmem:[%s8 + $0xf0] sm:$0xff]
    %v1604 = vld [vmem:[%s8 + $0xf8] sm:$0xff]
    %v1605 = vld [vmem:[%s9] sm:$0x3]
    %v1607 = vperm.slane %v1605, 0
    %v1608 = vperm.slane %v1605, 1
    %v1643 = vunpack.c.l.b16 %v1573
    %v1644 = vunpack.c.h.b16 %v1573
    %v1645 = vunpack.c.l.b16 %v1574
    %v1646 = vunpack.c.h.b16 %v1574
    %v1647 = vunpack.c.l.b16 %v1575
    %v1648 = vunpack.c.h.b16 %v1575
    %v1649 = vunpack.c.l.b16 %v1576
    %v1650 = vunpack.c.h.b16 %v1576
    %v1651 = vunpack.c.l.b16 %v1577
    %v1652 = vunpack.c.h.b16 %v1577
    %v1653 = vunpack.c.l.b16 %v1578
    %v1654 = vunpack.c.h.b16 %v1578
    %v1655 = vunpack.c.l.b16 %v1579
    %v1656 = vunpack.c.h.b16 %v1579
    %v1657 = vunpack.c.l.b16 %v1580
    %v1658 = vunpack.c.h.b16 %v1580
    %v1659 = vunpack.c.l.b16 %v1581
    %v1660 = vunpack.c.h.b16 %v1581
    %v1661 = vunpack.c.l.b16 %v1582
    %v1662 = vunpack.c.h.b16 %v1582
    %v1663 = vunpack.c.l.b16 %v1583
    %v1664 = vunpack.c.h.b16 %v1583
    %v1665 = vunpack.c.l.b16 %v1584
    %v1666 = vunpack.c.h.b16 %v1584
    %v1667 = vunpack.c.l.b16 %v1585
    %v1668 = vunpack.c.h.b16 %v1585
    %v1669 = vunpack.c.l.b16 %v1586
    %v1670 = vunpack.c.h.b16 %v1586
    %v1671 = vunpack.c.l.b16 %v1587
    %v1672 = vunpack.c.h.b16 %v1587
    %v1673 = vunpack.c.l.b16 %v1588
    %v1674 = vunpack.c.h.b16 %v1588
    %v1675 = vunpack.c.l.b16 %v1589
    %v1676 = vunpack.c.h.b16 %v1589
    %v1677 = vunpack.c.l.b16 %v1590
    %v1678 = vunpack.c.h.b16 %v1590
    %v1679 = vunpack.c.l.b16 %v1591
    %v1680 = vunpack.c.h.b16 %v1591
    %v1681 = vunpack.c.l.b16 %v1592
    %v1682 = vunpack.c.h.b16 %v1592
    %v1683 = vunpack.c.l.b16 %v1593
    %v1684 = vunpack.c.h.b16 %v1593
    %v1685 = vunpack.c.l.b16 %v1594
    %v1686 = vunpack.c.h.b16 %v1594
    %v1687 = vunpack.c.l.b16 %v1595
    %v1688 = vunpack.c.h.b16 %v1595
    %v1689 = vunpack.c.l.b16 %v1596
    %v1690 = vunpack.c.h.b16 %v1596
    %v1691 = vunpack.c.l.b16 %v1597
    %v1692 = vunpack.c.h.b16 %v1597
    %v1693 = vunpack.c.l.b16 %v1598
    %v1694 = vunpack.c.h.b16 %v1598
    %v1695 = vunpack.c.l.b16 %v1599
    %v1696 = vunpack.c.h.b16 %v1599
    %v1697 = vunpack.c.l.b16 %v1600
    %v1698 = vunpack.c.h.b16 %v1600
    %v1699 = vunpack.c.l.b16 %v1601
    %v1700 = vunpack.c.h.b16 %v1601
    %v1701 = vunpack.c.l.b16 %v1602
    %v1702 = vunpack.c.h.b16 %v1602
    %v1703 = vunpack.c.l.b16 %v1603
    %v1704 = vunpack.c.h.b16 %v1603
    %v1705 = vunpack.c.l.b16 %v1604
    %v1706 = vunpack.c.h.b16 %v1604
    %v1707 = vpack.c.b16 %v1645, %v1643
    %v1708 = vpack.c.b16 %v1646, %v1644
    %v1709 = vpack.c.b16 %v1649, %v1647
    %v1710 = vpack.c.b16 %v1650, %v1648
    %v1711 = vpack.c.b16 %v1653, %v1651
    %v1712 = vpack.c.b16 %v1654, %v1652
    %v1713 = vpack.c.b16 %v1657, %v1655
    %v1714 = vpack.c.b16 %v1658, %v1656
    %v1715 = vpack.c.b16 %v1661, %v1659
    %v1716 = vpack.c.b16 %v1662, %v1660
    %v1717 = vpack.c.b16 %v1665, %v1663
    %v1718 = vpack.c.b16 %v1666, %v1664
    %v1719 = vpack.c.b16 %v1669, %v1667
    %v1720 = vpack.c.b16 %v1670, %v1668
    %v1721 = vpack.c.b16 %v1673, %v1671
    %v1722 = vpack.c.b16 %v1674, %v1672
    %v1723 = vpack.c.b16 %v1677, %v1675
    %v1724 = vpack.c.b16 %v1678, %v1676
    %v1725 = vpack.c.b16 %v1681, %v1679
    %v1726 = vpack.c.b16 %v1682, %v1680
    %v1727 = vpack.c.b16 %v1685, %v1683
    %v1728 = vpack.c.b16 %v1686, %v1684
    %v1729 = vpack.c.b16 %v1689, %v1687
    %v1730 = vpack.c.b16 %v1690, %v1688
    %v1731 = vpack.c.b16 %v1693, %v1691
    %v1732 = vpack.c.b16 %v1694, %v1692
    %v1733 = vpack.c.b16 %v1697, %v1695
    %v1734 = vpack.c.b16 %v1698, %v1696
    %v1735 = vpack.c.b16 %v1701, %v1699
    %v1736 = vpack.c.b16 %v1702, %v1700
    %v1737 = vpack.c.b16 %v1705, %v1703
    %v1738 = vpack.c.b16 %v1706, %v1704
    %1771 = vmatpush.bf16.msra.mxu0 %v1721
    %1772 = vmatpush.bf16.msra.mxu0 %v1719
    %1773 = vmatpush.bf16.msra.mxu0 %v1717
    %1774 = vmatpush.bf16.msra.mxu0 %v1715
    %1775 = vmatpush.bf16.msra.mxu0 %v1713
    %1776 = vmatpush.bf16.msra.mxu0 %v1711
    %1777 = vmatpush.bf16.msra.mxu0 %v1709
    %1778 = vmatpush.bf16.msra.mxu0 %v1707
    %1779 = vmatmul.bf16.gmra.mxu0 %v1571
    %v1780 = vpop.f32.mrf.mxu0
    %v1781 = vadd.f32 %v1607, %v1780
    %v1782 = vpop.f32.mrf.mxu0
    %1783 = vdwg.mxu0
    %1784 = vmatpush.bf16.msra.mxu0 %v1737
    %1785 = vmatpush.bf16.msra.mxu0 %v1735
    %1786 = vmatpush.bf16.msra.mxu0 %v1733
    %1787 = vmatpush.bf16.msra.mxu0 %v1731
    %1788 = vmatpush.bf16.msra.mxu0 %v1729
    %1789 = vmatpush.bf16.msra.mxu0 %v1727
    %1790 = vmatpush.bf16.msra.mxu0 %v1725
    %1791 = vmatpush.bf16.msra.mxu0 %v1723
    %1792 = vmatmul.bf16.gmra.mxu0 %v1572
    %v1793 = vpop.f32.mrf.mxu0
    %v1794 = vadd.f32 %v1781, %v1793
    %v1795 = vpop.f32.mrf.mxu0
    %1796 = vdwg.mxu0
    %1797 = vmatpush.bf16.msra.mxu0 %v1722
    %1798 = vmatpush.bf16.msra.mxu0 %v1720
    %1799 = vmatpush.bf16.msra.mxu0 %v1718
    %1800 = vmatpush.bf16.msra.mxu0 %v1716
    %1801 = vmatpush.bf16.msra.mxu0 %v1714
    %1802 = vmatpush.bf16.msra.mxu0 %v1712
    %1803 = vmatpush.bf16.msra.mxu0 %v1710
    %1804 = vmatpush.bf16.msra.mxu0 %v1708
    %1805 = vmatmul.bf16.gmra.mxu0 %v1571
    %v1806 = vpop.f32.mrf.mxu0
    %v1807 = vadd.f32 %v1608, %v1806
    %v1808 = vpop.f32.mrf.mxu0
    %1809 = vdwg.mxu0
    %1810 = vmatpush.bf16.msra.mxu0 %v1738
    %1811 = vmatpush.bf16.msra.mxu0 %v1736
    %1812 = vmatpush.bf16.msra.mxu0 %v1734
    %1813 = vmatpush.bf16.msra.mxu0 %v1732
    %1814 = vmatpush.bf16.msra.mxu0 %v1730
    %1815 = vmatpush.bf16.msra.mxu0 %v1728
    %1816 = vmatpush.bf16.msra.mxu0 %v1726
    %1817 = vmatpush.bf16.msra.mxu0 %v1724
    %1818 = vmatmul.bf16.gmra.mxu0 %v1572
    %v1819 = vpop.f32.mrf.mxu0
    %v1820 = vadd.f32 %v1807, %v1819
    %v1821 = vpop.f32.mrf.mxu0
    %1822 = vdwg.mxu0
    %v1823 = vld [vmem:[%s10] sm:$0x3]
    %v1824 = vld [vmem:[%s11] sm:$0x3]
    %v1825 = vsel %vm1483, %v1794, 0.0
    %v1826 = vrot.slane %v1825, 4
    %v1827 = vadd.f32 %v1825, %v1826
    %v1828 = vrot.slane %v1827, 2
    %v1829 = vadd.f32 %v1827, %v1828
    %v1830 = vrot.slane %v1829, 1
    %v1831 = vadd.f32 %v1829, %v1830
    %v1832 = vsel %vm1483, %v1820, 0.0
    %v1833 = vrot.slane %v1832, 4
    %v1834 = vadd.f32 %v1832, %v1833
    %v1835 = vrot.slane %v1834, 2
    %v1836 = vadd.f32 %v1834, %v1835
    %v1837 = vrot.slane %v1836, 1
    %v1838 = vadd.f32 %v1836, %v1837
    %v1839 = vmul.f32 %v1831, %v1504
    %v1840 = vmul.f32 %v1838, %v1504
    %v1841 = vmul.f32 %v1794, %v1794
    %v1842 = vmul.f32 %v1820, %v1820
    %v1843 = vsel %vm1483, %v1841, 0.0
    %v1844 = vrot.slane %v1843, 4
    %v1845 = vadd.f32 %v1843, %v1844
    %v1846 = vrot.slane %v1845, 2
    %v1847 = vadd.f32 %v1845, %v1846
    %v1848 = vrot.slane %v1847, 1
    %v1849 = vadd.f32 %v1847, %v1848
    %v1850 = vsel %vm1483, %v1842, 0.0
    %v1851 = vrot.slane %v1850, 4
    %v1852 = vadd.f32 %v1850, %v1851
    %v1853 = vrot.slane %v1852, 2
    %v1854 = vadd.f32 %v1852, %v1853
    %v1855 = vrot.slane %v1854, 1
    %v1856 = vadd.f32 %v1854, %v1855
    %v1857 = vmul.f32 %v1849, %v1504
    %v1858 = vmul.f32 %v1856, %v1504
    %v1859 = vmul.f32 %v1839, %v1839
    %v1860 = vmul.f32 %v1840, %v1840
    %v1861 = vsub.f32 %v1857, %v1859
    %v1862 = vsub.f32 %v1858, %v1860
    %v1863 = vsub.f32 %v1794, %v1839
    %v1864 = vsub.f32 %v1820, %v1840
    %v1865 = vadd.f32 %v1861, 1e-05
    %v1866 = vadd.f32 %v1862, 1e-05
    %v1867 = vrsqrt.pop %v1865
    %v1868 = vmul.f32 %v1867, %v1865
    %v1869 = vmul.f32 %v1868, %v1867
    %v1870 = vmul.f32 0.5, %v1869
    %v1871 = vsub.f32 1.5, %v1870
    %v1872 = vmul.f32 %v1867, %v1871
    %vm1873 = vweird.f32 %v1865
    %vm1874 = vweird.f32 %v1867
    %vm1875 = vmor %vm1873, %vm1874
    %v1876 = vsel %vm1875, %v1867, %v1872
    %v1877 = vrsqrt.pop %v1866
    %v1878 = vmul.f32 %v1877, %v1866
    %v1879 = vmul.f32 %v1878, %v1877
    %v1880 = vmul.f32 0.5, %v1879
    %v1881 = vsub.f32 1.5, %v1880
    %v1882 = vmul.f32 %v1877, %v1881
    %vm1883 = vweird.f32 %v1866
    %vm1884 = vweird.f32 %v1877
    %vm1885 = vmor %vm1883, %vm1884
    %v1886 = vsel %vm1885, %v1877, %v1882
    %v1887 = vmul.f32 %v1863, %v1876
    %v1888 = vmul.f32 %v1864, %v1886
    %v1890 = vperm.slane %v1823, 0
    %v1891 = vperm.slane %v1823, 1
    %v1894 = vmul.f32 %v1887, %v1890
    %v1895 = vmul.f32 %v1888, %v1891
    %v1897 = vperm.slane %v1824, 0
    %v1898 = vperm.slane %v1824, 1
    %v1901 = vadd.f32 %v1894, %v1897
    %v1902 = vadd.f32 %v1895, %v1898
    %v1903 = vpack.c.bf16 %v1901, %v1901
    %v1904 = vpack.c.bf16 %v1902, %v1902
    %v1905 = vld [vmem:[%s12] sm:$0xf]
    %v1906 = vld [vmem:[%s12 + $0x4] sm:$0xf]
    %v1907 = vld [vmem:[%s12 + $0x8] sm:$0xf]
    %v1908 = vld [vmem:[%s12 + $0xc] sm:$0xf]
    %v1909 = vld [vmem:[%s12 + $0x10] sm:$0xf]
    %v1910 = vld [vmem:[%s12 + $0x14] sm:$0xf]
    %v1911 = vld [vmem:[%s12 + $0x18] sm:$0xf]
    %v1912 = vld [vmem:[%s12 + $0x1c] sm:$0xf]
    %v1913 = vld [vmem:[%s12 + $0x20] sm:$0xf]
    %v1914 = vld [vmem:[%s12 + $0x24] sm:$0xf]
    %v1915 = vld [vmem:[%s12 + $0x28] sm:$0xf]
    %v1916 = vld [vmem:[%s12 + $0x2c] sm:$0xf]
    %v1917 = vld [vmem:[%s12 + $0x30] sm:$0xf]
    %v1918 = vld [vmem:[%s12 + $0x34] sm:$0xf]
    %v1919 = vld [vmem:[%s12 + $0x38] sm:$0xf]
    %v1920 = vld [vmem:[%s12 + $0x3c] sm:$0xf]
    %v1921 = vld [vmem:[%s12 + $0x40] sm:$0xf]
    %v1922 = vld [vmem:[%s12 + $0x44] sm:$0xf]
    %v1923 = vld [vmem:[%s12 + $0x48] sm:$0xf]
    %v1924 = vld [vmem:[%s12 + $0x4c] sm:$0xf]
    %v1925 = vld [vmem:[%s12 + $0x50] sm:$0xf]
    %v1926 = vld [vmem:[%s12 + $0x54] sm:$0xf]
    %v1927 = vld [vmem:[%s12 + $0x58] sm:$0xf]
    %v1928 = vld [vmem:[%s12 + $0x5c] sm:$0xf]
    %v1929 = vld [vmem:[%s12 + $0x60] sm:$0xf]
    %v1930 = vld [vmem:[%s12 + $0x64] sm:$0xf]
    %v1931 = vld [vmem:[%s12 + $0x68] sm:$0xf]
    %v1932 = vld [vmem:[%s12 + $0x6c] sm:$0xf]
    %v1933 = vld [vmem:[%s12 + $0x70] sm:$0xf]
    %v1934 = vld [vmem:[%s12 + $0x74] sm:$0xf]
    %v1935 = vld [vmem:[%s12 + $0x78] sm:$0xf]
    %v1936 = vld [vmem:[%s12 + $0x7c] sm:$0xf]
    %v1937 = vld [vmem:[%s13] sm:$0x1]
    %v1939 = vperm.slane %v1937, 0
    %v1973 = vunpack.c.l.b16 %v1905
    %v1974 = vunpack.c.l.b16 %v1906
    %v1975 = vunpack.c.l.b16 %v1907
    %v1976 = vunpack.c.l.b16 %v1908
    %v1977 = vunpack.c.l.b16 %v1909
    %v1978 = vunpack.c.l.b16 %v1910
    %v1979 = vunpack.c.l.b16 %v1911
    %v1980 = vunpack.c.l.b16 %v1912
    %v1981 = vunpack.c.l.b16 %v1913
    %v1982 = vunpack.c.l.b16 %v1914
    %v1983 = vunpack.c.l.b16 %v1915
    %v1984 = vunpack.c.l.b16 %v1916
    %v1985 = vunpack.c.l.b16 %v1917
    %v1986 = vunpack.c.l.b16 %v1918
    %v1987 = vunpack.c.l.b16 %v1919
    %v1988 = vunpack.c.l.b16 %v1920
    %v1989 = vunpack.c.l.b16 %v1921
    %v1990 = vunpack.c.l.b16 %v1922
    %v1991 = vunpack.c.l.b16 %v1923
    %v1992 = vunpack.c.l.b16 %v1924
    %v1993 = vunpack.c.l.b16 %v1925
    %v1994 = vunpack.c.l.b16 %v1926
    %v1995 = vunpack.c.l.b16 %v1927
    %v1996 = vunpack.c.l.b16 %v1928
    %v1997 = vunpack.c.l.b16 %v1929
    %v1998 = vunpack.c.l.b16 %v1930
    %v1999 = vunpack.c.l.b16 %v1931
    %v2000 = vunpack.c.l.b16 %v1932
    %v2001 = vunpack.c.l.b16 %v1933
    %v2002 = vunpack.c.l.b16 %v1934
    %v2003 = vunpack.c.l.b16 %v1935
    %v2004 = vunpack.c.l.b16 %v1936
    %v2005 = vpack.c.b16 %v1974, %v1973
    %v2006 = vpack.c.b16 %v1976, %v1975
    %v2007 = vpack.c.b16 %v1978, %v1977
    %v2008 = vpack.c.b16 %v1980, %v1979
    %v2009 = vpack.c.b16 %v1982, %v1981
    %v2010 = vpack.c.b16 %v1984, %v1983
    %v2011 = vpack.c.b16 %v1986, %v1985
    %v2012 = vpack.c.b16 %v1988, %v1987
    %v2013 = vpack.c.b16 %v1990, %v1989
    %v2014 = vpack.c.b16 %v1992, %v1991
    %v2015 = vpack.c.b16 %v1994, %v1993
    %v2016 = vpack.c.b16 %v1996, %v1995
    %v2017 = vpack.c.b16 %v1998, %v1997
    %v2018 = vpack.c.b16 %v2000, %v1999
    %v2019 = vpack.c.b16 %v2002, %v2001
    %v2020 = vpack.c.b16 %v2004, %v2003
    %2037 = vmatpush.bf16.msra.mxu0 %v2012
    %2038 = vmatpush.bf16.msra.mxu0 %v2011
    %2039 = vmatpush.bf16.msra.mxu0 %v2010
    %2040 = vmatpush.bf16.msra.mxu0 %v2009
    %2041 = vmatpush.bf16.msra.mxu0 %v2008
    %2042 = vmatpush.bf16.msra.mxu0 %v2007
    %2043 = vmatpush.bf16.msra.mxu0 %v2006
    %2044 = vmatpush.bf16.msra.mxu0 %v2005
    %2045 = vmatmul.bf16.gmra.mxu0 %v1903
    %v2046 = vpop.f32.mrf.mxu0
    %v2047 = vadd.f32 %v1939, %v2046
    %v2048 = vpop.f32.mrf.mxu0
    %2049 = vdwg.mxu0
    %2050 = vmatpush.bf16.msra.mxu0 %v2020
    %2051 = vmatpush.bf16.msra.mxu0 %v2019
    %2052 = vmatpush.bf16.msra.mxu0 %v2018
    %2053 = vmatpush.bf16.msra.mxu0 %v2017
    %2054 = vmatpush.bf16.msra.mxu0 %v2016
    %2055 = vmatpush.bf16.msra.mxu0 %v2015
    %2056 = vmatpush.bf16.msra.mxu0 %v2014
    %2057 = vmatpush.bf16.msra.mxu0 %v2013
    %2058 = vmatmul.bf16.gmra.mxu0 %v1904
    %v2059 = vpop.f32.mrf.mxu0
    %v2060 = vadd.f32 %v2047, %v2059
    %v2061 = vpop.f32.mrf.mxu0
    %2062 = vdwg.mxu0
    %v2063 = vld [vmem:[%s14] sm:$0x1]
    %v2064 = vld [vmem:[%s15] sm:$0x1]
    %v2065 = vsel %vm1483, %v2060, 0.0
    %v2066 = vrot.slane %v2065, 4
    %v2067 = vadd.f32 %v2065, %v2066
    %v2068 = vrot.slane %v2067, 2
    %v2069 = vadd.f32 %v2067, %v2068
    %v2070 = vrot.slane %v2069, 1
    %v2071 = vadd.f32 %v2069, %v2070
    %v2072 = vmul.f32 %v2071, %v1504
    %v2073 = vmul.f32 %v2060, %v2060
    %v2074 = vsel %vm1483, %v2073, 0.0
    %v2075 = vrot.slane %v2074, 4
    %v2076 = vadd.f32 %v2074, %v2075
    %v2077 = vrot.slane %v2076, 2
    %v2078 = vadd.f32 %v2076, %v2077
    %v2079 = vrot.slane %v2078, 1
    %v2080 = vadd.f32 %v2078, %v2079
    %v2081 = vmul.f32 %v2080, %v1504
    %v2082 = vmul.f32 %v2072, %v2072
    %v2083 = vsub.f32 %v2081, %v2082
    %v2084 = vsub.f32 %v2060, %v2072
    %v2085 = vadd.f32 %v2083, 1e-05
    %v2086 = vrsqrt.pop %v2085
    %v2087 = vmul.f32 %v2086, %v2085
    %v2088 = vmul.f32 %v2087, %v2086
    %v2089 = vmul.f32 0.5, %v2088
    %v2090 = vsub.f32 1.5, %v2089
    %v2091 = vmul.f32 %v2086, %v2090
    %vm2092 = vweird.f32 %v2085
    %vm2093 = vweird.f32 %v2086
    %vm2094 = vmor %vm2092, %vm2093
    %v2095 = vsel %vm2094, %v2086, %v2091
    %v2096 = vmul.f32 %v2084, %v2095
    %v2098 = vperm.slane %v2063, 0
    %v2100 = vmul.f32 %v2096, %v2098
    %v2102 = vperm.slane %v2064, 0
    %v2104 = vadd.f32 %v2100, %v2102
    %v2105 = vmax.f32 %v2104, 0.0
    %v2106 = vpack.c.bf16 %v2105, %v2105
    %v2107 = vld [vmem:[%s16] sm:$0xff]
    %v2108 = vld [vmem:[%s16 + $0x8] sm:$0xff]
    %v2109 = vld [vmem:[%s16 + $0x10] sm:$0xff]
    %v2110 = vld [vmem:[%s16 + $0x18] sm:$0xff]
    %v2111 = vld [vmem:[%s16 + $0x20] sm:$0xff]
    %v2112 = vld [vmem:[%s16 + $0x28] sm:$0xff]
    %v2113 = vld [vmem:[%s16 + $0x30] sm:$0xff]
    %v2114 = vld [vmem:[%s16 + $0x38] sm:$0xff]
    %v2115 = vld [vmem:[%s16 + $0x40] sm:$0xff]
    %v2116 = vld [vmem:[%s16 + $0x48] sm:$0xff]
    %v2117 = vld [vmem:[%s16 + $0x50] sm:$0xff]
    %v2118 = vld [vmem:[%s16 + $0x58] sm:$0xff]
    %v2119 = vld [vmem:[%s16 + $0x60] sm:$0xff]
    %v2120 = vld [vmem:[%s16 + $0x68] sm:$0xff]
    %v2121 = vld [vmem:[%s16 + $0x70] sm:$0xff]
    %v2122 = vld [vmem:[%s16 + $0x78] sm:$0xff]
    %v2123 = vld [vmem:[%s17] sm:$0x3]
    %v2125 = vperm.slane %v2123, 0
    %v2126 = vperm.slane %v2123, 1
    %v2145 = vunpack.c.l.b16 %v2107
    %v2146 = vunpack.c.h.b16 %v2107
    %v2147 = vunpack.c.l.b16 %v2108
    %v2148 = vunpack.c.h.b16 %v2108
    %v2149 = vunpack.c.l.b16 %v2109
    %v2150 = vunpack.c.h.b16 %v2109
    %v2151 = vunpack.c.l.b16 %v2110
    %v2152 = vunpack.c.h.b16 %v2110
    %v2153 = vunpack.c.l.b16 %v2111
    %v2154 = vunpack.c.h.b16 %v2111
    %v2155 = vunpack.c.l.b16 %v2112
    %v2156 = vunpack.c.h.b16 %v2112
    %v2157 = vunpack.c.l.b16 %v2113
    %v2158 = vunpack.c.h.b16 %v2113
    %v2159 = vunpack.c.l.b16 %v2114
    %v2160 = vunpack.c.h.b16 %v2114
    %v2161 = vunpack.c.l.b16 %v2115
    %v2162 = vunpack.c.h.b16 %v2115
    %v2163 = vunpack.c.l.b16 %v2116
    %v2164 = vunpack.c.h.b16 %v2116
    %v2165 = vunpack.c.l.b16 %v2117
    %v2166 = vunpack.c.h.b16 %v2117
    %v2167 = vunpack.c.l.b16 %v2118
    %v2168 = vunpack.c.h.b16 %v2118
    %v2169 = vunpack.c.l.b16 %v2119
    %v2170 = vunpack.c.h.b16 %v2119
    %v2171 = vunpack.c.l.b16 %v2120
    %v2172 = vunpack.c.h.b16 %v2120
    %v2173 = vunpack.c.l.b16 %v2121
    %v2174 = vunpack.c.h.b16 %v2121
    %v2175 = vunpack.c.l.b16 %v2122
    %v2176 = vunpack.c.h.b16 %v2122
    %v2177 = vpack.c.b16 %v2147, %v2145
    %v2178 = vpack.c.b16 %v2148, %v2146
    %v2179 = vpack.c.b16 %v2151, %v2149
    %v2180 = vpack.c.b16 %v2152, %v2150
    %v2181 = vpack.c.b16 %v2155, %v2153
    %v2182 = vpack.c.b16 %v2156, %v2154
    %v2183 = vpack.c.b16 %v2159, %v2157
    %v2184 = vpack.c.b16 %v2160, %v2158
    %v2185 = vpack.c.b16 %v2163, %v2161
    %v2186 = vpack.c.b16 %v2164, %v2162
    %v2187 = vpack.c.b16 %v2167, %v2165
    %v2188 = vpack.c.b16 %v2168, %v2166
    %v2189 = vpack.c.b16 %v2171, %v2169
    %v2190 = vpack.c.b16 %v2172, %v2170
    %v2191 = vpack.c.b16 %v2175, %v2173
    %v2192 = vpack.c.b16 %v2176, %v2174
    %2209 = vmatpush.bf16.msra.mxu0 %v2191
    %2210 = vmatpush.bf16.msra.mxu0 %v2189
    %2211 = vmatpush.bf16.msra.mxu0 %v2187
    %2212 = vmatpush.bf16.msra.mxu0 %v2185
    %2213 = vmatpush.bf16.msra.mxu0 %v2183
    %2214 = vmatpush.bf16.msra.mxu0 %v2181
    %2215 = vmatpush.bf16.msra.mxu0 %v2179
    %2216 = vmatpush.bf16.msra.mxu0 %v2177
    %2217 = vmatmul.bf16.gmra.mxu0 %v2106
    %v2218 = vpop.f32.mrf.mxu0
    %v2219 = vadd.f32 %v2125, %v2218
    %v2220 = vpop.f32.mrf.mxu0
    %2221 = vdwg.mxu0
    %2222 = vmatpush.bf16.msra.mxu0 %v2192
    %2223 = vmatpush.bf16.msra.mxu0 %v2190
    %2224 = vmatpush.bf16.msra.mxu0 %v2188
    %2225 = vmatpush.bf16.msra.mxu0 %v2186
    %2226 = vmatpush.bf16.msra.mxu0 %v2184
    %2227 = vmatpush.bf16.msra.mxu0 %v2182
    %2228 = vmatpush.bf16.msra.mxu0 %v2180
    %2229 = vmatpush.bf16.msra.mxu0 %v2178
    %2230 = vmatmul.bf16.gmra.mxu0 %v2106
    %v2231 = vpop.f32.mrf.mxu0
    %v2232 = vadd.f32 %v2126, %v2231
    %v2233 = vpop.f32.mrf.mxu0
    %2234 = vdwg.mxu0
    %s2235 = scalar_lea.vmem %s0, 256
    %v2236 = vld [vmem:[%s2235] sm:$0xf]
    %v2237 = vld [vmem:[%s2235 + $0x4] sm:$0xf]
    %v2238 = vld [vmem:[%s2235 + $0x8] sm:$0xf]
    %v2239 = vld [vmem:[%s2235 + $0xc] sm:$0xf]
    %v2240 = vld [vmem:[%s2235 + $0x10] sm:$0xf]
    %v2241 = vld [vmem:[%s2235 + $0x14] sm:$0xf]
    %v2242 = vld [vmem:[%s2235 + $0x18] sm:$0xf]
    %v2243 = vld [vmem:[%s2235 + $0x1c] sm:$0xf]
    %v2244 = vld [vmem:[%s2235 + $0x20] sm:$0xf]
    %v2245 = vld [vmem:[%s2235 + $0x24] sm:$0xf]
    %v2246 = vld [vmem:[%s2235 + $0x28] sm:$0xf]
    %v2247 = vld [vmem:[%s2235 + $0x2c] sm:$0xf]
    %v2248 = vld [vmem:[%s2235 + $0x30] sm:$0xf]
    %v2249 = vld [vmem:[%s2235 + $0x34] sm:$0xf]
    %v2250 = vld [vmem:[%s2235 + $0x38] sm:$0xf]
    %v2251 = vld [vmem:[%s2235 + $0x3c] sm:$0xf]
    %v2252 = vld [vmem:[%s2235 + $0x40] sm:$0xf]
    %v2253 = vld [vmem:[%s2235 + $0x44] sm:$0xf]
    %v2254 = vld [vmem:[%s2235 + $0x48] sm:$0xf]
    %v2255 = vld [vmem:[%s2235 + $0x4c] sm:$0xf]
    %v2256 = vld [vmem:[%s2235 + $0x50] sm:$0xf]
    %v2257 = vld [vmem:[%s2235 + $0x54] sm:$0xf]
    %v2258 = vld [vmem:[%s2235 + $0x58] sm:$0xf]
    %v2259 = vld [vmem:[%s2235 + $0x5c] sm:$0xf]
    %v2260 = vld [vmem:[%s2235 + $0x60] sm:$0xf]
    %v2261 = vld [vmem:[%s2235 + $0x64] sm:$0xf]
    %v2262 = vld [vmem:[%s2235 + $0x68] sm:$0xf]
    %v2263 = vld [vmem:[%s2235 + $0x6c] sm:$0xf]
    %v2264 = vld [vmem:[%s2235 + $0x70] sm:$0xf]
    %v2265 = vld [vmem:[%s2235 + $0x74] sm:$0xf]
    %v2266 = vld [vmem:[%s2235 + $0x78] sm:$0xf]
    %v2267 = vld [vmem:[%s2235 + $0x7c] sm:$0xf]
    %v2268 = vld [vmem:[%s2235 + $0x80] sm:$0xf]
    %v2269 = vld [vmem:[%s2235 + $0x84] sm:$0xf]
    %v2270 = vld [vmem:[%s2235 + $0x88] sm:$0xf]
    %v2271 = vld [vmem:[%s2235 + $0x8c] sm:$0xf]
    %v2272 = vld [vmem:[%s2235 + $0x90] sm:$0xf]
    %v2273 = vld [vmem:[%s2235 + $0x94] sm:$0xf]
    %v2274 = vld [vmem:[%s2235 + $0x98] sm:$0xf]
    %v2275 = vld [vmem:[%s2235 + $0x9c] sm:$0xf]
    %v2276 = vld [vmem:[%s2235 + $0xa0] sm:$0xf]
    %v2277 = vld [vmem:[%s2235 + $0xa4] sm:$0xf]
    %v2278 = vld [vmem:[%s2235 + $0xa8] sm:$0xf]
    %v2279 = vld [vmem:[%s2235 + $0xac] sm:$0xf]
    %v2280 = vld [vmem:[%s2235 + $0xb0] sm:$0xf]
    %v2281 = vld [vmem:[%s2235 + $0xb4] sm:$0xf]
    %v2282 = vld [vmem:[%s2235 + $0xb8] sm:$0xf]
    %v2283 = vld [vmem:[%s2235 + $0xbc] sm:$0xf]
    %v2284 = vld [vmem:[%s2235 + $0xc0] sm:$0xf]
    %v2285 = vld [vmem:[%s2235 + $0xc4] sm:$0xf]
    %v2286 = vld [vmem:[%s2235 + $0xc8] sm:$0xf]
    %v2287 = vld [vmem:[%s2235 + $0xcc] sm:$0xf]
    %v2288 = vld [vmem:[%s2235 + $0xd0] sm:$0xf]
    %v2289 = vld [vmem:[%s2235 + $0xd4] sm:$0xf]
    %v2290 = vld [vmem:[%s2235 + $0xd8] sm:$0xf]
    %v2291 = vld [vmem:[%s2235 + $0xdc] sm:$0xf]
    %v2292 = vld [vmem:[%s2235 + $0xe0] sm:$0xf]
    %v2293 = vld [vmem:[%s2235 + $0xe4] sm:$0xf]
    %v2294 = vld [vmem:[%s2235 + $0xe8] sm:$0xf]
    %v2295 = vld [vmem:[%s2235 + $0xec] sm:$0xf]
    %v2296 = vld [vmem:[%s2235 + $0xf0] sm:$0xf]
    %v2297 = vld [vmem:[%s2235 + $0xf4] sm:$0xf]
    %v2298 = vld [vmem:[%s2235 + $0xf8] sm:$0xf]
    %v2299 = vld [vmem:[%s2235 + $0xfc] sm:$0xf]
    %v2364 = vunpack.c.l.b16 %v2236
    %v2365 = vunpack.c.l.b16 %v2237
    %v2366 = vunpack.c.l.b16 %v2238
    %v2367 = vunpack.c.l.b16 %v2239
    %v2368 = vunpack.c.l.b16 %v2240
    %v2369 = vunpack.c.l.b16 %v2241
    %v2370 = vunpack.c.l.b16 %v2242
    %v2371 = vunpack.c.l.b16 %v2243
    %v2372 = vunpack.c.l.b16 %v2244
    %v2373 = vunpack.c.l.b16 %v2245
    %v2374 = vunpack.c.l.b16 %v2246
    %v2375 = vunpack.c.l.b16 %v2247
    %v2376 = vunpack.c.l.b16 %v2248
    %v2377 = vunpack.c.l.b16 %v2249
    %v2378 = vunpack.c.l.b16 %v2250
    %v2379 = vunpack.c.l.b16 %v2251
    %v2380 = vunpack.c.l.b16 %v2252
    %v2381 = vunpack.c.l.b16 %v2253
    %v2382 = vunpack.c.l.b16 %v2254
    %v2383 = vunpack.c.l.b16 %v2255
    %v2384 = vunpack.c.l.b16 %v2256
    %v2385 = vunpack.c.l.b16 %v2257
    %v2386 = vunpack.c.l.b16 %v2258
    %v2387 = vunpack.c.l.b16 %v2259
    %v2388 = vunpack.c.l.b16 %v2260
    %v2389 = vunpack.c.l.b16 %v2261
    %v2390 = vunpack.c.l.b16 %v2262
    %v2391 = vunpack.c.l.b16 %v2263
    %v2392 = vunpack.c.l.b16 %v2264
    %v2393 = vunpack.c.l.b16 %v2265
    %v2394 = vunpack.c.l.b16 %v2266
    %v2395 = vunpack.c.l.b16 %v2267
    %v2396 = vunpack.c.l.b16 %v2268
    %v2397 = vunpack.c.l.b16 %v2269
    %v2398 = vunpack.c.l.b16 %v2270
    %v2399 = vunpack.c.l.b16 %v2271
    %v2400 = vunpack.c.l.b16 %v2272
    %v2401 = vunpack.c.l.b16 %v2273
    %v2402 = vunpack.c.l.b16 %v2274
    %v2403 = vunpack.c.l.b16 %v2275
    %v2404 = vunpack.c.l.b16 %v2276
    %v2405 = vunpack.c.l.b16 %v2277
    %v2406 = vunpack.c.l.b16 %v2278
    %v2407 = vunpack.c.l.b16 %v2279
    %v2408 = vunpack.c.l.b16 %v2280
    %v2409 = vunpack.c.l.b16 %v2281
    %v2410 = vunpack.c.l.b16 %v2282
    %v2411 = vunpack.c.l.b16 %v2283
    %v2412 = vunpack.c.l.b16 %v2284
    %v2413 = vunpack.c.l.b16 %v2285
    %v2414 = vunpack.c.l.b16 %v2286
    %v2415 = vunpack.c.l.b16 %v2287
    %v2416 = vunpack.c.l.b16 %v2288
    %v2417 = vunpack.c.l.b16 %v2289
    %v2418 = vunpack.c.l.b16 %v2290
    %v2419 = vunpack.c.l.b16 %v2291
    %v2420 = vunpack.c.l.b16 %v2292
    %v2421 = vunpack.c.l.b16 %v2293
    %v2422 = vunpack.c.l.b16 %v2294
    %v2423 = vunpack.c.l.b16 %v2295
    %v2424 = vunpack.c.l.b16 %v2296
    %v2425 = vunpack.c.l.b16 %v2297
    %v2426 = vunpack.c.l.b16 %v2298
    %v2427 = vunpack.c.l.b16 %v2299
    %v2428 = vpack.c.b16 %v2365, %v2364
    %v2429 = vpack.c.b16 %v2367, %v2366
    %v2430 = vpack.c.b16 %v2369, %v2368
    %v2431 = vpack.c.b16 %v2371, %v2370
    %v2432 = vpack.c.b16 %v2373, %v2372
    %v2433 = vpack.c.b16 %v2375, %v2374
    %v2434 = vpack.c.b16 %v2377, %v2376
    %v2435 = vpack.c.b16 %v2379, %v2378
    %v2436 = vpack.c.b16 %v2381, %v2380
    %v2437 = vpack.c.b16 %v2383, %v2382
    %v2438 = vpack.c.b16 %v2385, %v2384
    %v2439 = vpack.c.b16 %v2387, %v2386
    %v2440 = vpack.c.b16 %v2389, %v2388
    %v2441 = vpack.c.b16 %v2391, %v2390
    %v2442 = vpack.c.b16 %v2393, %v2392
    %v2443 = vpack.c.b16 %v2395, %v2394
    %v2444 = vpack.c.b16 %v2397, %v2396
    %v2445 = vpack.c.b16 %v2399, %v2398
    %v2446 = vpack.c.b16 %v2401, %v2400
    %v2447 = vpack.c.b16 %v2403, %v2402
    %v2448 = vpack.c.b16 %v2405, %v2404
    %v2449 = vpack.c.b16 %v2407, %v2406
    %v2450 = vpack.c.b16 %v2409, %v2408
    %v2451 = vpack.c.b16 %v2411, %v2410
    %v2452 = vpack.c.b16 %v2413, %v2412
    %v2453 = vpack.c.b16 %v2415, %v2414
    %v2454 = vpack.c.b16 %v2417, %v2416
    %v2455 = vpack.c.b16 %v2419, %v2418
    %v2456 = vpack.c.b16 %v2421, %v2420
    %v2457 = vpack.c.b16 %v2423, %v2422
    %v2458 = vpack.c.b16 %v2425, %v2424
    %v2459 = vpack.c.b16 %v2427, %v2426
    %v2461 = vsel %vm301, %v2428, 0
    %v2464 = vsel %vm301, %v2429, 0
    %v2467 = vsel %vm301, %v2430, 0
    %v2470 = vsel %vm301, %v2431, 0
    %v2473 = vsel %vm301, %v2432, 0
    %v2476 = vsel %vm301, %v2433, 0
    %v2479 = vsel %vm301, %v2434, 0
    %v2482 = vsel %vm301, %v2435, 0
    %v2485 = vsel %vm301, %v2436, 0
    %v2488 = vsel %vm301, %v2437, 0
    %v2491 = vsel %vm301, %v2438, 0
    %v2494 = vsel %vm301, %v2439, 0
    %v2497 = vsel %vm301, %v2440, 0
    %v2500 = vsel %vm301, %v2441, 0
    %v2503 = vsel %vm301, %v2442, 0
    %v2506 = vsel %vm301, %v2443, 0
    %v2509 = vsel %vm301, %v2444, 0
    %v2512 = vsel %vm301, %v2445, 0
    %v2515 = vsel %vm301, %v2446, 0
    %v2518 = vsel %vm301, %v2447, 0
    %v2521 = vsel %vm301, %v2448, 0
    %v2524 = vsel %vm301, %v2449, 0
    %v2527 = vsel %vm301, %v2450, 0
    %v2530 = vsel %vm301, %v2451, 0
    %v2533 = vsel %vm301, %v2452, 0
    %v2536 = vsel %vm301, %v2453, 0
    %v2539 = vsel %vm301, %v2454, 0
    %v2542 = vsel %vm301, %v2455, 0
    %v2545 = vsel %vm301, %v2456, 0
    %v2548 = vsel %vm301, %v2457, 0
    %v2551 = vsel %vm301, %v2458, 0
    %v2554 = vsel %vm301, %v2459, 0
    %2556 = vmatpush.bf16.msra.mxu0 0
    %2557 = vmatpush.bf16.msra.mxu0 0
    %2558 = vmatpush.bf16.msra.mxu0 0
    %2559 = vmatpush.bf16.msra.mxu0 0
    %2560 = vmatpush.bf16.msra.mxu0 0
    %2561 = vmatpush.bf16.msra.mxu0 0
    %2562 = vmatpush.bf16.msra.mxu0 %v298
    %2563 = vmatpush.bf16.msra.mxu0 %v297
    %2564 = vmatmul.bf16.gmra.mxu0 %v2461
    %v2565 = vpop.f32.mrf.mxu0
    %v2566 = vadd.f32 0.0, %v2565
    %v2567 = vpop.f32.mrf.mxu0
    %v2568 = vadd.f32 0.0, %v2567
    %2569 = vmatmul.bf16.gmra.mxu0 %v2464
    %v2570 = vpop.f32.mrf.mxu0
    %v2571 = vadd.f32 0.0, %v2570
    %v2572 = vpop.f32.mrf.mxu0
    %v2573 = vadd.f32 0.0, %v2572
    %2574 = vmatmul.bf16.gmra.mxu0 %v2467
    %v2575 = vpop.f32.mrf.mxu0
    %v2576 = vadd.f32 0.0, %v2575
    %v2577 = vpop.f32.mrf.mxu0
    %v2578 = vadd.f32 0.0, %v2577
    %2579 = vmatmul.bf16.gmra.mxu0 %v2470
    %v2580 = vpop.f32.mrf.mxu0
    %v2581 = vadd.f32 0.0, %v2580
    %v2582 = vpop.f32.mrf.mxu0
    %v2583 = vadd.f32 0.0, %v2582
    %2584 = vmatmul.bf16.gmra.mxu0 %v2473
    %v2585 = vpop.f32.mrf.mxu0
    %v2586 = vadd.f32 0.0, %v2585
    %v2587 = vpop.f32.mrf.mxu0
    %v2588 = vadd.f32 0.0, %v2587
    %2589 = vmatmul.bf16.gmra.mxu0 %v2476
    %v2590 = vpop.f32.mrf.mxu0
    %v2591 = vadd.f32 0.0, %v2590
    %v2592 = vpop.f32.mrf.mxu0
    %v2593 = vadd.f32 0.0, %v2592
    %2594 = vmatmul.bf16.gmra.mxu0 %v2479
    %v2595 = vpop.f32.mrf.mxu0
    %v2596 = vadd.f32 0.0, %v2595
    %v2597 = vpop.f32.mrf.mxu0
    %v2598 = vadd.f32 0.0, %v2597
    %2599 = vmatmul.bf16.gmra.mxu0 %v2482
    %v2600 = vpop.f32.mrf.mxu0
    %v2601 = vadd.f32 0.0, %v2600
    %v2602 = vpop.f32.mrf.mxu0
    %v2603 = vadd.f32 0.0, %v2602
    %2604 = vmatmul.bf16.gmra.mxu0 %v2485
    %v2605 = vpop.f32.mrf.mxu0
    %v2606 = vadd.f32 0.0, %v2605
    %v2607 = vpop.f32.mrf.mxu0
    %v2608 = vadd.f32 0.0, %v2607
    %2609 = vmatmul.bf16.gmra.mxu0 %v2488
    %v2610 = vpop.f32.mrf.mxu0
    %v2611 = vadd.f32 0.0, %v2610
    %v2612 = vpop.f32.mrf.mxu0
    %v2613 = vadd.f32 0.0, %v2612
    %2614 = vmatmul.bf16.gmra.mxu0 %v2491
    %v2615 = vpop.f32.mrf.mxu0
    %v2616 = vadd.f32 0.0, %v2615
    %v2617 = vpop.f32.mrf.mxu0
    %v2618 = vadd.f32 0.0, %v2617
    %2619 = vmatmul.bf16.gmra.mxu0 %v2494
    %v2620 = vpop.f32.mrf.mxu0
    %v2621 = vadd.f32 0.0, %v2620
    %v2622 = vpop.f32.mrf.mxu0
    %v2623 = vadd.f32 0.0, %v2622
    %2624 = vmatmul.bf16.gmra.mxu0 %v2497
    %v2625 = vpop.f32.mrf.mxu0
    %v2626 = vadd.f32 0.0, %v2625
    %v2627 = vpop.f32.mrf.mxu0
    %v2628 = vadd.f32 0.0, %v2627
    %2629 = vmatmul.bf16.gmra.mxu0 %v2500
    %v2630 = vpop.f32.mrf.mxu0
    %v2631 = vadd.f32 0.0, %v2630
    %v2632 = vpop.f32.mrf.mxu0
    %v2633 = vadd.f32 0.0, %v2632
    %2634 = vmatmul.bf16.gmra.mxu0 %v2503
    %v2635 = vpop.f32.mrf.mxu0
    %v2636 = vadd.f32 0.0, %v2635
    %v2637 = vpop.f32.mrf.mxu0
    %v2638 = vadd.f32 0.0, %v2637
    %2639 = vmatmul.bf16.gmra.mxu0 %v2506
    %v2640 = vpop.f32.mrf.mxu0
    %v2641 = vadd.f32 0.0, %v2640
    %v2642 = vpop.f32.mrf.mxu0
    %v2643 = vadd.f32 0.0, %v2642
    %2644 = vmatmul.bf16.gmra.mxu0 %v2509
    %v2645 = vpop.f32.mrf.mxu0
    %v2646 = vadd.f32 0.0, %v2645
    %v2647 = vpop.f32.mrf.mxu0
    %v2648 = vadd.f32 0.0, %v2647
    %2649 = vmatmul.bf16.gmra.mxu0 %v2512
    %v2650 = vpop.f32.mrf.mxu0
    %v2651 = vadd.f32 0.0, %v2650
    %v2652 = vpop.f32.mrf.mxu0
    %v2653 = vadd.f32 0.0, %v2652
    %2654 = vmatmul.bf16.gmra.mxu0 %v2515
    %v2655 = vpop.f32.mrf.mxu0
    %v2656 = vadd.f32 0.0, %v2655
    %v2657 = vpop.f32.mrf.mxu0
    %v2658 = vadd.f32 0.0, %v2657
    %2659 = vmatmul.bf16.gmra.mxu0 %v2518
    %v2660 = vpop.f32.mrf.mxu0
    %v2661 = vadd.f32 0.0, %v2660
    %v2662 = vpop.f32.mrf.mxu0
    %v2663 = vadd.f32 0.0, %v2662
    %2664 = vmatmul.bf16.gmra.mxu0 %v2521
    %v2665 = vpop.f32.mrf.mxu0
    %v2666 = vadd.f32 0.0, %v2665
    %v2667 = vpop.f32.mrf.mxu0
    %v2668 = vadd.f32 0.0, %v2667
    %2669 = vmatmul.bf16.gmra.mxu0 %v2524
    %v2670 = vpop.f32.mrf.mxu0
    %v2671 = vadd.f32 0.0, %v2670
    %v2672 = vpop.f32.mrf.mxu0
    %v2673 = vadd.f32 0.0, %v2672
    %2674 = vmatmul.bf16.gmra.mxu0 %v2527
    %v2675 = vpop.f32.mrf.mxu0
    %v2676 = vadd.f32 0.0, %v2675
    %v2677 = vpop.f32.mrf.mxu0
    %v2678 = vadd.f32 0.0, %v2677
    %2679 = vmatmul.bf16.gmra.mxu0 %v2530
    %v2680 = vpop.f32.mrf.mxu0
    %v2681 = vadd.f32 0.0, %v2680
    %v2682 = vpop.f32.mrf.mxu0
    %v2683 = vadd.f32 0.0, %v2682
    %2684 = vmatmul.bf16.gmra.mxu0 %v2533
    %v2685 = vpop.f32.mrf.mxu0
    %v2686 = vadd.f32 0.0, %v2685
    %v2687 = vpop.f32.mrf.mxu0
    %v2688 = vadd.f32 0.0, %v2687
    %2689 = vmatmul.bf16.gmra.mxu0 %v2536
    %v2690 = vpop.f32.mrf.mxu0
    %v2691 = vadd.f32 0.0, %v2690
    %v2692 = vpop.f32.mrf.mxu0
    %v2693 = vadd.f32 0.0, %v2692
    %2694 = vmatmul.bf16.gmra.mxu0 %v2539
    %v2695 = vpop.f32.mrf.mxu0
    %v2696 = vadd.f32 0.0, %v2695
    %v2697 = vpop.f32.mrf.mxu0
    %v2698 = vadd.f32 0.0, %v2697
    %2699 = vmatmul.bf16.gmra.mxu0 %v2542
    %v2700 = vpop.f32.mrf.mxu0
    %v2701 = vadd.f32 0.0, %v2700
    %v2702 = vpop.f32.mrf.mxu0
    %v2703 = vadd.f32 0.0, %v2702
    %2704 = vmatmul.bf16.gmra.mxu0 %v2545
    %v2705 = vpop.f32.mrf.mxu0
    %v2706 = vadd.f32 0.0, %v2705
    %v2707 = vpop.f32.mrf.mxu0
    %v2708 = vadd.f32 0.0, %v2707
    %2709 = vmatmul.bf16.gmra.mxu0 %v2548
    %v2710 = vpop.f32.mrf.mxu0
    %v2711 = vadd.f32 0.0, %v2710
    %v2712 = vpop.f32.mrf.mxu0
    %v2713 = vadd.f32 0.0, %v2712
    %2714 = vmatmul.bf16.gmra.mxu0 %v2551
    %v2715 = vpop.f32.mrf.mxu0
    %v2716 = vadd.f32 0.0, %v2715
    %v2717 = vpop.f32.mrf.mxu0
    %v2718 = vadd.f32 0.0, %v2717
    %2719 = vmatmul.bf16.gmra.mxu0 %v2554
    %v2720 = vpop.f32.mrf.mxu0
    %v2721 = vadd.f32 0.0, %v2720
    %v2722 = vpop.f32.mrf.mxu0
    %v2723 = vadd.f32 0.0, %v2722
    %2724 = vdwg.mxu0
    %v2725 = vsel %vm569, %v2566, 0.0
    %v2726 = vsel %vm569, %v2568, 0.0
    %v2727 = vadd.f32 %v2725, %v2726
    %v2728 = vsel %vm569, %v2571, 0.0
    %v2729 = vadd.f32 %v2727, %v2728
    %v2730 = vsel %vm569, %v2573, 0.0
    %v2731 = vadd.f32 %v2729, %v2730
    %v2732 = vsel %vm569, %v2576, 0.0
    %v2733 = vadd.f32 %v2731, %v2732
    %v2734 = vsel %vm569, %v2578, 0.0
    %v2735 = vadd.f32 %v2733, %v2734
    %v2736 = vsel %vm569, %v2581, 0.0
    %v2737 = vadd.f32 %v2735, %v2736
    %v2738 = vsel %vm569, %v2583, 0.0
    %v2739 = vadd.f32 %v2737, %v2738
    %v2740 = vsel %vm569, %v2586, 0.0
    %v2741 = vadd.f32 %v2739, %v2740
    %v2742 = vsel %vm569, %v2588, 0.0
    %v2743 = vadd.f32 %v2741, %v2742
    %v2744 = vsel %vm569, %v2591, 0.0
    %v2745 = vadd.f32 %v2743, %v2744
    %v2746 = vsel %vm569, %v2593, 0.0
    %v2747 = vadd.f32 %v2745, %v2746
    %v2748 = vsel %vm569, %v2596, 0.0
    %v2749 = vadd.f32 %v2747, %v2748
    %v2750 = vsel %vm569, %v2598, 0.0
    %v2751 = vadd.f32 %v2749, %v2750
    %v2752 = vsel %vm569, %v2601, 0.0
    %v2753 = vadd.f32 %v2751, %v2752
    %v2754 = vsel %vm569, %v2603, 0.0
    %v2755 = vadd.f32 %v2753, %v2754
    %v2756 = vsel %vm569, %v2606, 0.0
    %v2757 = vadd.f32 %v2755, %v2756
    %v2758 = vsel %vm569, %v2608, 0.0
    %v2759 = vadd.f32 %v2757, %v2758
    %v2760 = vsel %vm569, %v2611, 0.0
    %v2761 = vadd.f32 %v2759, %v2760
    %v2762 = vsel %vm569, %v2613, 0.0
    %v2763 = vadd.f32 %v2761, %v2762
    %v2764 = vsel %vm569, %v2616, 0.0
    %v2765 = vadd.f32 %v2763, %v2764
    %v2766 = vsel %vm569, %v2618, 0.0
    %v2767 = vadd.f32 %v2765, %v2766
    %v2768 = vsel %vm569, %v2621, 0.0
    %v2769 = vadd.f32 %v2767, %v2768
    %v2770 = vsel %vm569, %v2623, 0.0
    %v2771 = vadd.f32 %v2769, %v2770
    %v2772 = vsel %vm569, %v2626, 0.0
    %v2773 = vadd.f32 %v2771, %v2772
    %v2774 = vsel %vm569, %v2628, 0.0
    %v2775 = vadd.f32 %v2773, %v2774
    %v2776 = vsel %vm569, %v2631, 0.0
    %v2777 = vadd.f32 %v2775, %v2776
    %v2778 = vsel %vm569, %v2633, 0.0
    %v2779 = vadd.f32 %v2777, %v2778
    %v2780 = vsel %vm569, %v2636, 0.0
    %v2781 = vadd.f32 %v2779, %v2780
    %v2782 = vsel %vm569, %v2638, 0.0
    %v2783 = vadd.f32 %v2781, %v2782
    %v2784 = vsel %vm569, %v2641, 0.0
    %v2785 = vadd.f32 %v2783, %v2784
    %v2786 = vsel %vm569, %v2643, 0.0
    %v2787 = vadd.f32 %v2785, %v2786
    %v2788 = vsel %vm569, %v2646, 0.0
    %v2789 = vadd.f32 %v2787, %v2788
    %v2790 = vsel %vm569, %v2648, 0.0
    %v2791 = vadd.f32 %v2789, %v2790
    %v2792 = vsel %vm569, %v2651, 0.0
    %v2793 = vadd.f32 %v2791, %v2792
    %v2794 = vsel %vm569, %v2653, 0.0
    %v2795 = vadd.f32 %v2793, %v2794
    %v2796 = vsel %vm569, %v2656, 0.0
    %v2797 = vadd.f32 %v2795, %v2796
    %v2798 = vsel %vm569, %v2658, 0.0
    %v2799 = vadd.f32 %v2797, %v2798
    %v2800 = vsel %vm569, %v2661, 0.0
    %v2801 = vadd.f32 %v2799, %v2800
    %v2802 = vsel %vm569, %v2663, 0.0
    %v2803 = vadd.f32 %v2801, %v2802
    %v2804 = vsel %vm569, %v2666, 0.0
    %v2805 = vadd.f32 %v2803, %v2804
    %v2806 = vsel %vm569, %v2668, 0.0
    %v2807 = vadd.f32 %v2805, %v2806
    %v2808 = vsel %vm569, %v2671, 0.0
    %v2809 = vadd.f32 %v2807, %v2808
    %v2810 = vsel %vm569, %v2673, 0.0
    %v2811 = vadd.f32 %v2809, %v2810
    %v2812 = vsel %vm569, %v2676, 0.0
    %v2813 = vadd.f32 %v2811, %v2812
    %v2814 = vsel %vm569, %v2678, 0.0
    %v2815 = vadd.f32 %v2813, %v2814
    %v2816 = vsel %vm569, %v2681, 0.0
    %v2817 = vadd.f32 %v2815, %v2816
    %v2818 = vsel %vm569, %v2683, 0.0
    %v2819 = vadd.f32 %v2817, %v2818
    %v2820 = vsel %vm569, %v2686, 0.0
    %v2821 = vadd.f32 %v2819, %v2820
    %v2822 = vsel %vm569, %v2688, 0.0
    %v2823 = vadd.f32 %v2821, %v2822
    %v2824 = vsel %vm569, %v2691, 0.0
    %v2825 = vadd.f32 %v2823, %v2824
    %v2826 = vsel %vm569, %v2693, 0.0
    %v2827 = vadd.f32 %v2825, %v2826
    %v2828 = vsel %vm569, %v2696, 0.0
    %v2829 = vadd.f32 %v2827, %v2828
    %v2830 = vsel %vm569, %v2698, 0.0
    %v2831 = vadd.f32 %v2829, %v2830
    %v2832 = vsel %vm569, %v2701, 0.0
    %v2833 = vadd.f32 %v2831, %v2832
    %v2834 = vsel %vm569, %v2703, 0.0
    %v2835 = vadd.f32 %v2833, %v2834
    %v2836 = vsel %vm569, %v2706, 0.0
    %v2837 = vadd.f32 %v2835, %v2836
    %v2838 = vsel %vm569, %v2708, 0.0
    %v2839 = vadd.f32 %v2837, %v2838
    %v2840 = vsel %vm569, %v2711, 0.0
    %v2841 = vadd.f32 %v2839, %v2840
    %v2842 = vsel %vm569, %v2713, 0.0
    %v2843 = vadd.f32 %v2841, %v2842
    %v2844 = vsel %vm569, %v2716, 0.0
    %v2845 = vadd.f32 %v2843, %v2844
    %v2846 = vsel %vm569, %v2718, 0.0
    %v2847 = vadd.f32 %v2845, %v2846
    %v2848 = vsel %vm569, %v2721, 0.0
    %v2849 = vadd.f32 %v2847, %v2848
    %v2850 = vsel %vm569, %v2723, 0.0
    %v2851 = vadd.f32 %v2849, %v2850
    %v2852 = vrot.slane %v2851, 4
    %v2853 = vadd.f32 %v2851, %v2852
    %v2854 = vrot.slane %v2853, 2
    %v2855 = vadd.f32 %v2853, %v2854
    %v2856 = vrot.slane %v2855, 1
    %v2857 = vadd.f32 %v2855, %v2856
    %v2858 = vmul.f32 %v2857, %v709
    %v2859 = vmul.f32 %v2566, %v2566
    %v2860 = vmul.f32 %v2568, %v2568
    %v2861 = vmul.f32 %v2571, %v2571
    %v2862 = vmul.f32 %v2573, %v2573
    %v2863 = vmul.f32 %v2576, %v2576
    %v2864 = vmul.f32 %v2578, %v2578
    %v2865 = vmul.f32 %v2581, %v2581
    %v2866 = vmul.f32 %v2583, %v2583
    %v2867 = vmul.f32 %v2586, %v2586
    %v2868 = vmul.f32 %v2588, %v2588
    %v2869 = vmul.f32 %v2591, %v2591
    %v2870 = vmul.f32 %v2593, %v2593
    %v2871 = vmul.f32 %v2596, %v2596
    %v2872 = vmul.f32 %v2598, %v2598
    %v2873 = vmul.f32 %v2601, %v2601
    %v2874 = vmul.f32 %v2603, %v2603
    %v2875 = vmul.f32 %v2606, %v2606
    %v2876 = vmul.f32 %v2608, %v2608
    %v2877 = vmul.f32 %v2611, %v2611
    %v2878 = vmul.f32 %v2613, %v2613
    %v2879 = vmul.f32 %v2616, %v2616
    %v2880 = vmul.f32 %v2618, %v2618
    %v2881 = vmul.f32 %v2621, %v2621
    %v2882 = vmul.f32 %v2623, %v2623
    %v2883 = vmul.f32 %v2626, %v2626
    %v2884 = vmul.f32 %v2628, %v2628
    %v2885 = vmul.f32 %v2631, %v2631
    %v2886 = vmul.f32 %v2633, %v2633
    %v2887 = vmul.f32 %v2636, %v2636
    %v2888 = vmul.f32 %v2638, %v2638
    %v2889 = vmul.f32 %v2641, %v2641
    %v2890 = vmul.f32 %v2643, %v2643
    %v2891 = vmul.f32 %v2646, %v2646
    %v2892 = vmul.f32 %v2648, %v2648
    %v2893 = vmul.f32 %v2651, %v2651
    %v2894 = vmul.f32 %v2653, %v2653
    %v2895 = vmul.f32 %v2656, %v2656
    %v2896 = vmul.f32 %v2658, %v2658
    %v2897 = vmul.f32 %v2661, %v2661
    %v2898 = vmul.f32 %v2663, %v2663
    %v2899 = vmul.f32 %v2666, %v2666
    %v2900 = vmul.f32 %v2668, %v2668
    %v2901 = vmul.f32 %v2671, %v2671
    %v2902 = vmul.f32 %v2673, %v2673
    %v2903 = vmul.f32 %v2676, %v2676
    %v2904 = vmul.f32 %v2678, %v2678
    %v2905 = vmul.f32 %v2681, %v2681
    %v2906 = vmul.f32 %v2683, %v2683
    %v2907 = vmul.f32 %v2686, %v2686
    %v2908 = vmul.f32 %v2688, %v2688
    %v2909 = vmul.f32 %v2691, %v2691
    %v2910 = vmul.f32 %v2693, %v2693
    %v2911 = vmul.f32 %v2696, %v2696
    %v2912 = vmul.f32 %v2698, %v2698
    %v2913 = vmul.f32 %v2701, %v2701
    %v2914 = vmul.f32 %v2703, %v2703
    %v2915 = vmul.f32 %v2706, %v2706
    %v2916 = vmul.f32 %v2708, %v2708
    %v2917 = vmul.f32 %v2711, %v2711
    %v2918 = vmul.f32 %v2713, %v2713
    %v2919 = vmul.f32 %v2716, %v2716
    %v2920 = vmul.f32 %v2718, %v2718
    %v2921 = vmul.f32 %v2721, %v2721
    %v2922 = vmul.f32 %v2723, %v2723
    %v2923 = vsel %vm569, %v2859, 0.0
    %v2924 = vsel %vm569, %v2860, 0.0
    %v2925 = vadd.f32 %v2923, %v2924
    %v2926 = vsel %vm569, %v2861, 0.0
    %v2927 = vadd.f32 %v2925, %v2926
    %v2928 = vsel %vm569, %v2862, 0.0
    %v2929 = vadd.f32 %v2927, %v2928
    %v2930 = vsel %vm569, %v2863, 0.0
    %v2931 = vadd.f32 %v2929, %v2930
    %v2932 = vsel %vm569, %v2864, 0.0
    %v2933 = vadd.f32 %v2931, %v2932
    %v2934 = vsel %vm569, %v2865, 0.0
    %v2935 = vadd.f32 %v2933, %v2934
    %v2936 = vsel %vm569, %v2866, 0.0
    %v2937 = vadd.f32 %v2935, %v2936
    %v2938 = vsel %vm569, %v2867, 0.0
    %v2939 = vadd.f32 %v2937, %v2938
    %v2940 = vsel %vm569, %v2868, 0.0
    %v2941 = vadd.f32 %v2939, %v2940
    %v2942 = vsel %vm569, %v2869, 0.0
    %v2943 = vadd.f32 %v2941, %v2942
    %v2944 = vsel %vm569, %v2870, 0.0
    %v2945 = vadd.f32 %v2943, %v2944
    %v2946 = vsel %vm569, %v2871, 0.0
    %v2947 = vadd.f32 %v2945, %v2946
    %v2948 = vsel %vm569, %v2872, 0.0
    %v2949 = vadd.f32 %v2947, %v2948
    %v2950 = vsel %vm569, %v2873, 0.0
    %v2951 = vadd.f32 %v2949, %v2950
    %v2952 = vsel %vm569, %v2874, 0.0
    %v2953 = vadd.f32 %v2951, %v2952
    %v2954 = vsel %vm569, %v2875, 0.0
    %v2955 = vadd.f32 %v2953, %v2954
    %v2956 = vsel %vm569, %v2876, 0.0
    %v2957 = vadd.f32 %v2955, %v2956
    %v2958 = vsel %vm569, %v2877, 0.0
    %v2959 = vadd.f32 %v2957, %v2958
    %v2960 = vsel %vm569, %v2878, 0.0
    %v2961 = vadd.f32 %v2959, %v2960
    %v2962 = vsel %vm569, %v2879, 0.0
    %v2963 = vadd.f32 %v2961, %v2962
    %v2964 = vsel %vm569, %v2880, 0.0
    %v2965 = vadd.f32 %v2963, %v2964
    %v2966 = vsel %vm569, %v2881, 0.0
    %v2967 = vadd.f32 %v2965, %v2966
    %v2968 = vsel %vm569, %v2882, 0.0
    %v2969 = vadd.f32 %v2967, %v2968
    %v2970 = vsel %vm569, %v2883, 0.0
    %v2971 = vadd.f32 %v2969, %v2970
    %v2972 = vsel %vm569, %v2884, 0.0
    %v2973 = vadd.f32 %v2971, %v2972
    %v2974 = vsel %vm569, %v2885, 0.0
    %v2975 = vadd.f32 %v2973, %v2974
    %v2976 = vsel %vm569, %v2886, 0.0
    %v2977 = vadd.f32 %v2975, %v2976
    %v2978 = vsel %vm569, %v2887, 0.0
    %v2979 = vadd.f32 %v2977, %v2978
    %v2980 = vsel %vm569, %v2888, 0.0
    %v2981 = vadd.f32 %v2979, %v2980
    %v2982 = vsel %vm569, %v2889, 0.0
    %v2983 = vadd.f32 %v2981, %v2982
    %v2984 = vsel %vm569, %v2890, 0.0
    %v2985 = vadd.f32 %v2983, %v2984
    %v2986 = vsel %vm569, %v2891, 0.0
    %v2987 = vadd.f32 %v2985, %v2986
    %v2988 = vsel %vm569, %v2892, 0.0
    %v2989 = vadd.f32 %v2987, %v2988
    %v2990 = vsel %vm569, %v2893, 0.0
    %v2991 = vadd.f32 %v2989, %v2990
    %v2992 = vsel %vm569, %v2894, 0.0
    %v2993 = vadd.f32 %v2991, %v2992
    %v2994 = vsel %vm569, %v2895, 0.0
    %v2995 = vadd.f32 %v2993, %v2994
    %v2996 = vsel %vm569, %v2896, 0.0
    %v2997 = vadd.f32 %v2995, %v2996
    %v2998 = vsel %vm569, %v2897, 0.0
    %v2999 = vadd.f32 %v2997, %v2998
    %v3000 = vsel %vm569, %v2898, 0.0
    %v3001 = vadd.f32 %v2999, %v3000
    %v3002 = vsel %vm569, %v2899, 0.0
    %v3003 = vadd.f32 %v3001, %v3002
    %v3004 = vsel %vm569, %v2900, 0.0
    %v3005 = vadd.f32 %v3003, %v3004
    %v3006 = vsel %vm569, %v2901, 0.0
    %v3007 = vadd.f32 %v3005, %v3006
    %v3008 = vsel %vm569, %v2902, 0.0
    %v3009 = vadd.f32 %v3007, %v3008
    %v3010 = vsel %vm569, %v2903, 0.0
    %v3011 = vadd.f32 %v3009, %v3010
    %v3012 = vsel %vm569, %v2904, 0.0
    %v3013 = vadd.f32 %v3011, %v3012
    %v3014 = vsel %vm569, %v2905, 0.0
    %v3015 = vadd.f32 %v3013, %v3014
    %v3016 = vsel %vm569, %v2906, 0.0
    %v3017 = vadd.f32 %v3015, %v3016
    %v3018 = vsel %vm569, %v2907, 0.0
    %v3019 = vadd.f32 %v3017, %v3018
    %v3020 = vsel %vm569, %v2908, 0.0
    %v3021 = vadd.f32 %v3019, %v3020
    %v3022 = vsel %vm569, %v2909, 0.0
    %v3023 = vadd.f32 %v3021, %v3022
    %v3024 = vsel %vm569, %v2910, 0.0
    %v3025 = vadd.f32 %v3023, %v3024
    %v3026 = vsel %vm569, %v2911, 0.0
    %v3027 = vadd.f32 %v3025, %v3026
    %v3028 = vsel %vm569, %v2912, 0.0
    %v3029 = vadd.f32 %v3027, %v3028
    %v3030 = vsel %vm569, %v2913, 0.0
    %v3031 = vadd.f32 %v3029, %v3030
    %v3032 = vsel %vm569, %v2914, 0.0
    %v3033 = vadd.f32 %v3031, %v3032
    %v3034 = vsel %vm569, %v2915, 0.0
    %v3035 = vadd.f32 %v3033, %v3034
    %v3036 = vsel %vm569, %v2916, 0.0
    %v3037 = vadd.f32 %v3035, %v3036
    %v3038 = vsel %vm569, %v2917, 0.0
    %v3039 = vadd.f32 %v3037, %v3038
    %v3040 = vsel %vm569, %v2918, 0.0
    %v3041 = vadd.f32 %v3039, %v3040
    %v3042 = vsel %vm569, %v2919, 0.0
    %v3043 = vadd.f32 %v3041, %v3042
    %v3044 = vsel %vm569, %v2920, 0.0
    %v3045 = vadd.f32 %v3043, %v3044
    %v3046 = vsel %vm569, %v2921, 0.0
    %v3047 = vadd.f32 %v3045, %v3046
    %v3048 = vsel %vm569, %v2922, 0.0
    %v3049 = vadd.f32 %v3047, %v3048
    %v3050 = vrot.slane %v3049, 4
    %v3051 = vadd.f32 %v3049, %v3050
    %v3052 = vrot.slane %v3051, 2
    %v3053 = vadd.f32 %v3051, %v3052
    %v3054 = vrot.slane %v3053, 1
    %v3055 = vadd.f32 %v3053, %v3054
    %v3056 = vmul.f32 %v3055, %v709
    %v3057 = vmul.f32 %v2858, %v2858
    %v3058 = vsub.f32 %v3056, %v3057
    %v3059 = vsub.f32 %v2566, %v2858
    %v3060 = vsub.f32 %v2568, %v2858
    %v3061 = vsub.f32 %v2571, %v2858
    %v3062 = vsub.f32 %v2573, %v2858
    %v3063 = vsub.f32 %v2576, %v2858
    %v3064 = vsub.f32 %v2578, %v2858
    %v3065 = vsub.f32 %v2581, %v2858
    %v3066 = vsub.f32 %v2583, %v2858
    %v3067 = vsub.f32 %v2586, %v2858
    %v3068 = vsub.f32 %v2588, %v2858
    %v3069 = vsub.f32 %v2591, %v2858
    %v3070 = vsub.f32 %v2593, %v2858
    %v3071 = vsub.f32 %v2596, %v2858
    %v3072 = vsub.f32 %v2598, %v2858
    %v3073 = vsub.f32 %v2601, %v2858
    %v3074 = vsub.f32 %v2603, %v2858
    %v3075 = vsub.f32 %v2606, %v2858
    %v3076 = vsub.f32 %v2608, %v2858
    %v3077 = vsub.f32 %v2611, %v2858
    %v3078 = vsub.f32 %v2613, %v2858
    %v3079 = vsub.f32 %v2616, %v2858
    %v3080 = vsub.f32 %v2618, %v2858
    %v3081 = vsub.f32 %v2621, %v2858
    %v3082 = vsub.f32 %v2623, %v2858
    %v3083 = vsub.f32 %v2626, %v2858
    %v3084 = vsub.f32 %v2628, %v2858
    %v3085 = vsub.f32 %v2631, %v2858
    %v3086 = vsub.f32 %v2633, %v2858
    %v3087 = vsub.f32 %v2636, %v2858
    %v3088 = vsub.f32 %v2638, %v2858
    %v3089 = vsub.f32 %v2641, %v2858
    %v3090 = vsub.f32 %v2643, %v2858
    %v3091 = vsub.f32 %v2646, %v2858
    %v3092 = vsub.f32 %v2648, %v2858
    %v3093 = vsub.f32 %v2651, %v2858
    %v3094 = vsub.f32 %v2653, %v2858
    %v3095 = vsub.f32 %v2656, %v2858
    %v3096 = vsub.f32 %v2658, %v2858
    %v3097 = vsub.f32 %v2661, %v2858
    %v3098 = vsub.f32 %v2663, %v2858
    %v3099 = vsub.f32 %v2666, %v2858
    %v3100 = vsub.f32 %v2668, %v2858
    %v3101 = vsub.f32 %v2671, %v2858
    %v3102 = vsub.f32 %v2673, %v2858
    %v3103 = vsub.f32 %v2676, %v2858
    %v3104 = vsub.f32 %v2678, %v2858
    %v3105 = vsub.f32 %v2681, %v2858
    %v3106 = vsub.f32 %v2683, %v2858
    %v3107 = vsub.f32 %v2686, %v2858
    %v3108 = vsub.f32 %v2688, %v2858
    %v3109 = vsub.f32 %v2691, %v2858
    %v3110 = vsub.f32 %v2693, %v2858
    %v3111 = vsub.f32 %v2696, %v2858
    %v3112 = vsub.f32 %v2698, %v2858
    %v3113 = vsub.f32 %v2701, %v2858
    %v3114 = vsub.f32 %v2703, %v2858
    %v3115 = vsub.f32 %v2706, %v2858
    %v3116 = vsub.f32 %v2708, %v2858
    %v3117 = vsub.f32 %v2711, %v2858
    %v3118 = vsub.f32 %v2713, %v2858
    %v3119 = vsub.f32 %v2716, %v2858
    %v3120 = vsub.f32 %v2718, %v2858
    %v3121 = vsub.f32 %v2721, %v2858
    %v3122 = vsub.f32 %v2723, %v2858
    %v3123 = vadd.f32 %v3058, 1e-05
    %v3124 = vrsqrt.pop %v3123
    %v3125 = vmul.f32 %v3124, %v3123
    %v3126 = vmul.f32 %v3125, %v3124
    %v3127 = vmul.f32 0.5, %v3126
    %v3128 = vsub.f32 1.5, %v3127
    %v3129 = vmul.f32 %v3124, %v3128
    %vm3130 = vweird.f32 %v3123
    %vm3131 = vweird.f32 %v3124
    %vm3132 = vmor %vm3130, %vm3131
    %v3133 = vsel %vm3132, %v3124, %v3129
    %v3134 = vmul.f32 %v3059, %v3133
    %v3135 = vmul.f32 %v3060, %v3133
    %v3136 = vmul.f32 %v3061, %v3133
    %v3137 = vmul.f32 %v3062, %v3133
    %v3138 = vmul.f32 %v3063, %v3133
    %v3139 = vmul.f32 %v3064, %v3133
    %v3140 = vmul.f32 %v3065, %v3133
    %v3141 = vmul.f32 %v3066, %v3133
    %v3142 = vmul.f32 %v3067, %v3133
    %v3143 = vmul.f32 %v3068, %v3133
    %v3144 = vmul.f32 %v3069, %v3133
    %v3145 = vmul.f32 %v3070, %v3133
    %v3146 = vmul.f32 %v3071, %v3133
    %v3147 = vmul.f32 %v3072, %v3133
    %v3148 = vmul.f32 %v3073, %v3133
    %v3149 = vmul.f32 %v3074, %v3133
    %v3150 = vmul.f32 %v3075, %v3133
    %v3151 = vmul.f32 %v3076, %v3133
    %v3152 = vmul.f32 %v3077, %v3133
    %v3153 = vmul.f32 %v3078, %v3133
    %v3154 = vmul.f32 %v3079, %v3133
    %v3155 = vmul.f32 %v3080, %v3133
    %v3156 = vmul.f32 %v3081, %v3133
    %v3157 = vmul.f32 %v3082, %v3133
    %v3158 = vmul.f32 %v3083, %v3133
    %v3159 = vmul.f32 %v3084, %v3133
    %v3160 = vmul.f32 %v3085, %v3133
    %v3161 = vmul.f32 %v3086, %v3133
    %v3162 = vmul.f32 %v3087, %v3133
    %v3163 = vmul.f32 %v3088, %v3133
    %v3164 = vmul.f32 %v3089, %v3133
    %v3165 = vmul.f32 %v3090, %v3133
    %v3166 = vmul.f32 %v3091, %v3133
    %v3167 = vmul.f32 %v3092, %v3133
    %v3168 = vmul.f32 %v3093, %v3133
    %v3169 = vmul.f32 %v3094, %v3133
    %v3170 = vmul.f32 %v3095, %v3133
    %v3171 = vmul.f32 %v3096, %v3133
    %v3172 = vmul.f32 %v3097, %v3133
    %v3173 = vmul.f32 %v3098, %v3133
    %v3174 = vmul.f32 %v3099, %v3133
    %v3175 = vmul.f32 %v3100, %v3133
    %v3176 = vmul.f32 %v3101, %v3133
    %v3177 = vmul.f32 %v3102, %v3133
    %v3178 = vmul.f32 %v3103, %v3133
    %v3179 = vmul.f32 %v3104, %v3133
    %v3180 = vmul.f32 %v3105, %v3133
    %v3181 = vmul.f32 %v3106, %v3133
    %v3182 = vmul.f32 %v3107, %v3133
    %v3183 = vmul.f32 %v3108, %v3133
    %v3184 = vmul.f32 %v3109, %v3133
    %v3185 = vmul.f32 %v3110, %v3133
    %v3186 = vmul.f32 %v3111, %v3133
    %v3187 = vmul.f32 %v3112, %v3133
    %v3188 = vmul.f32 %v3113, %v3133
    %v3189 = vmul.f32 %v3114, %v3133
    %v3190 = vmul.f32 %v3115, %v3133
    %v3191 = vmul.f32 %v3116, %v3133
    %v3192 = vmul.f32 %v3117, %v3133
    %v3193 = vmul.f32 %v3118, %v3133
    %v3194 = vmul.f32 %v3119, %v3133
    %v3195 = vmul.f32 %v3120, %v3133
    %v3196 = vmul.f32 %v3121, %v3133
    %v3197 = vmul.f32 %v3122, %v3133
    %v3198 = vmul.f32 %v3134, %v1051
    %v3199 = vmul.f32 %v3135, %v1051
    %v3200 = vmul.f32 %v3136, %v1051
    %v3201 = vmul.f32 %v3137, %v1051
    %v3202 = vmul.f32 %v3138, %v1051
    %v3203 = vmul.f32 %v3139, %v1051
    %v3204 = vmul.f32 %v3140, %v1051
    %v3205 = vmul.f32 %v3141, %v1051
    %v3206 = vmul.f32 %v3142, %v1051
    %v3207 = vmul.f32 %v3143, %v1051
    %v3208 = vmul.f32 %v3144, %v1051
    %v3209 = vmul.f32 %v3145, %v1051
    %v3210 = vmul.f32 %v3146, %v1051
    %v3211 = vmul.f32 %v3147, %v1051
    %v3212 = vmul.f32 %v3148, %v1051
    %v3213 = vmul.f32 %v3149, %v1051
    %v3214 = vmul.f32 %v3150, %v1051
    %v3215 = vmul.f32 %v3151, %v1051
    %v3216 = vmul.f32 %v3152, %v1051
    %v3217 = vmul.f32 %v3153, %v1051
    %v3218 = vmul.f32 %v3154, %v1051
    %v3219 = vmul.f32 %v3155, %v1051
    %v3220 = vmul.f32 %v3156, %v1051
    %v3221 = vmul.f32 %v3157, %v1051
    %v3222 = vmul.f32 %v3158, %v1051
    %v3223 = vmul.f32 %v3159, %v1051
    %v3224 = vmul.f32 %v3160, %v1051
    %v3225 = vmul.f32 %v3161, %v1051
    %v3226 = vmul.f32 %v3162, %v1051
    %v3227 = vmul.f32 %v3163, %v1051
    %v3228 = vmul.f32 %v3164, %v1051
    %v3229 = vmul.f32 %v3165, %v1051
    %v3230 = vmul.f32 %v3166, %v1051
    %v3231 = vmul.f32 %v3167, %v1051
    %v3232 = vmul.f32 %v3168, %v1051
    %v3233 = vmul.f32 %v3169, %v1051
    %v3234 = vmul.f32 %v3170, %v1051
    %v3235 = vmul.f32 %v3171, %v1051
    %v3236 = vmul.f32 %v3172, %v1051
    %v3237 = vmul.f32 %v3173, %v1051
    %v3238 = vmul.f32 %v3174, %v1051
    %v3239 = vmul.f32 %v3175, %v1051
    %v3240 = vmul.f32 %v3176, %v1051
    %v3241 = vmul.f32 %v3177, %v1051
    %v3242 = vmul.f32 %v3178, %v1051
    %v3243 = vmul.f32 %v3179, %v1051
    %v3244 = vmul.f32 %v3180, %v1051
    %v3245 = vmul.f32 %v3181, %v1051
    %v3246 = vmul.f32 %v3182, %v1051
    %v3247 = vmul.f32 %v3183, %v1051
    %v3248 = vmul.f32 %v3184, %v1051
    %v3249 = vmul.f32 %v3185, %v1051
    %v3250 = vmul.f32 %v3186, %v1051
    %v3251 = vmul.f32 %v3187, %v1051
    %v3252 = vmul.f32 %v3188, %v1051
    %v3253 = vmul.f32 %v3189, %v1051
    %v3254 = vmul.f32 %v3190, %v1051
    %v3255 = vmul.f32 %v3191, %v1051
    %v3256 = vmul.f32 %v3192, %v1051
    %v3257 = vmul.f32 %v3193, %v1051
    %v3258 = vmul.f32 %v3194, %v1051
    %v3259 = vmul.f32 %v3195, %v1051
    %v3260 = vmul.f32 %v3196, %v1051
    %v3261 = vmul.f32 %v3197, %v1051
    %v3262 = vadd.f32 %v3198, %v1118
    %v3263 = vadd.f32 %v3199, %v1118
    %v3264 = vadd.f32 %v3200, %v1118
    %v3265 = vadd.f32 %v3201, %v1118
    %v3266 = vadd.f32 %v3202, %v1118
    %v3267 = vadd.f32 %v3203, %v1118
    %v3268 = vadd.f32 %v3204, %v1118
    %v3269 = vadd.f32 %v3205, %v1118
    %v3270 = vadd.f32 %v3206, %v1118
    %v3271 = vadd.f32 %v3207, %v1118
    %v3272 = vadd.f32 %v3208, %v1118
    %v3273 = vadd.f32 %v3209, %v1118
    %v3274 = vadd.f32 %v3210, %v1118
    %v3275 = vadd.f32 %v3211, %v1118
    %v3276 = vadd.f32 %v3212, %v1118
    %v3277 = vadd.f32 %v3213, %v1118
    %v3278 = vadd.f32 %v3214, %v1118
    %v3279 = vadd.f32 %v3215, %v1118
    %v3280 = vadd.f32 %v3216, %v1118
    %v3281 = vadd.f32 %v3217, %v1118
    %v3282 = vadd.f32 %v3218, %v1118
    %v3283 = vadd.f32 %v3219, %v1118
    %v3284 = vadd.f32 %v3220, %v1118
    %v3285 = vadd.f32 %v3221, %v1118
    %v3286 = vadd.f32 %v3222, %v1118
    %v3287 = vadd.f32 %v3223, %v1118
    %v3288 = vadd.f32 %v3224, %v1118
    %v3289 = vadd.f32 %v3225, %v1118
    %v3290 = vadd.f32 %v3226, %v1118
    %v3291 = vadd.f32 %v3227, %v1118
    %v3292 = vadd.f32 %v3228, %v1118
    %v3293 = vadd.f32 %v3229, %v1118
    %v3294 = vadd.f32 %v3230, %v1118
    %v3295 = vadd.f32 %v3231, %v1118
    %v3296 = vadd.f32 %v3232, %v1118
    %v3297 = vadd.f32 %v3233, %v1118
    %v3298 = vadd.f32 %v3234, %v1118
    %v3299 = vadd.f32 %v3235, %v1118
    %v3300 = vadd.f32 %v3236, %v1118
    %v3301 = vadd.f32 %v3237, %v1118
    %v3302 = vadd.f32 %v3238, %v1118
    %v3303 = vadd.f32 %v3239, %v1118
    %v3304 = vadd.f32 %v3240, %v1118
    %v3305 = vadd.f32 %v3241, %v1118
    %v3306 = vadd.f32 %v3242, %v1118
    %v3307 = vadd.f32 %v3243, %v1118
    %v3308 = vadd.f32 %v3244, %v1118
    %v3309 = vadd.f32 %v3245, %v1118
    %v3310 = vadd.f32 %v3246, %v1118
    %v3311 = vadd.f32 %v3247, %v1118
    %v3312 = vadd.f32 %v3248, %v1118
    %v3313 = vadd.f32 %v3249, %v1118
    %v3314 = vadd.f32 %v3250, %v1118
    %v3315 = vadd.f32 %v3251, %v1118
    %v3316 = vadd.f32 %v3252, %v1118
    %v3317 = vadd.f32 %v3253, %v1118
    %v3318 = vadd.f32 %v3254, %v1118
    %v3319 = vadd.f32 %v3255, %v1118
    %v3320 = vadd.f32 %v3256, %v1118
    %v3321 = vadd.f32 %v3257, %v1118
    %v3322 = vadd.f32 %v3258, %v1118
    %v3323 = vadd.f32 %v3259, %v1118
    %v3324 = vadd.f32 %v3260, %v1118
    %v3325 = vadd.f32 %v3261, %v1118
    %v3326 = vmax.f32 %v3262, 0.0
    %v3327 = vmax.f32 %v3263, 0.0
    %v3328 = vmax.f32 %v3264, 0.0
    %v3329 = vmax.f32 %v3265, 0.0
    %v3330 = vmax.f32 %v3266, 0.0
    %v3331 = vmax.f32 %v3267, 0.0
    %v3332 = vmax.f32 %v3268, 0.0
    %v3333 = vmax.f32 %v3269, 0.0
    %v3334 = vmax.f32 %v3270, 0.0
    %v3335 = vmax.f32 %v3271, 0.0
    %v3336 = vmax.f32 %v3272, 0.0
    %v3337 = vmax.f32 %v3273, 0.0
    %v3338 = vmax.f32 %v3274, 0.0
    %v3339 = vmax.f32 %v3275, 0.0
    %v3340 = vmax.f32 %v3276, 0.0
    %v3341 = vmax.f32 %v3277, 0.0
    %v3342 = vmax.f32 %v3278, 0.0
    %v3343 = vmax.f32 %v3279, 0.0
    %v3344 = vmax.f32 %v3280, 0.0
    %v3345 = vmax.f32 %v3281, 0.0
    %v3346 = vmax.f32 %v3282, 0.0
    %v3347 = vmax.f32 %v3283, 0.0
    %v3348 = vmax.f32 %v3284, 0.0
    %v3349 = vmax.f32 %v3285, 0.0
    %v3350 = vmax.f32 %v3286, 0.0
    %v3351 = vmax.f32 %v3287, 0.0
    %v3352 = vmax.f32 %v3288, 0.0
    %v3353 = vmax.f32 %v3289, 0.0
    %v3354 = vmax.f32 %v3290, 0.0
    %v3355 = vmax.f32 %v3291, 0.0
    %v3356 = vmax.f32 %v3292, 0.0
    %v3357 = vmax.f32 %v3293, 0.0
    %v3358 = vmax.f32 %v3294, 0.0
    %v3359 = vmax.f32 %v3295, 0.0
    %v3360 = vmax.f32 %v3296, 0.0
    %v3361 = vmax.f32 %v3297, 0.0
    %v3362 = vmax.f32 %v3298, 0.0
    %v3363 = vmax.f32 %v3299, 0.0
    %v3364 = vmax.f32 %v3300, 0.0
    %v3365 = vmax.f32 %v3301, 0.0
    %v3366 = vmax.f32 %v3302, 0.0
    %v3367 = vmax.f32 %v3303, 0.0
    %v3368 = vmax.f32 %v3304, 0.0
    %v3369 = vmax.f32 %v3305, 0.0
    %v3370 = vmax.f32 %v3306, 0.0
    %v3371 = vmax.f32 %v3307, 0.0
    %v3372 = vmax.f32 %v3308, 0.0
    %v3373 = vmax.f32 %v3309, 0.0
    %v3374 = vmax.f32 %v3310, 0.0
    %v3375 = vmax.f32 %v3311, 0.0
    %v3376 = vmax.f32 %v3312, 0.0
    %v3377 = vmax.f32 %v3313, 0.0
    %v3378 = vmax.f32 %v3314, 0.0
    %v3379 = vmax.f32 %v3315, 0.0
    %v3380 = vmax.f32 %v3316, 0.0
    %v3381 = vmax.f32 %v3317, 0.0
    %v3382 = vmax.f32 %v3318, 0.0
    %v3383 = vmax.f32 %v3319, 0.0
    %v3384 = vmax.f32 %v3320, 0.0
    %v3385 = vmax.f32 %v3321, 0.0
    %v3386 = vmax.f32 %v3322, 0.0
    %v3387 = vmax.f32 %v3323, 0.0
    %v3388 = vmax.f32 %v3324, 0.0
    %v3389 = vmax.f32 %v3325, 0.0
    %v3390 = vsel %vm569, %v3326, 0.0
    %v3391 = vsel %vm569, %v3327, 0.0
    %v3392 = vadd.f32 %v3390, %v3391
    %v3393 = vsel %vm569, %v3328, 0.0
    %v3394 = vadd.f32 %v3392, %v3393
    %v3395 = vsel %vm569, %v3329, 0.0
    %v3396 = vadd.f32 %v3394, %v3395
    %v3397 = vsel %vm569, %v3330, 0.0
    %v3398 = vadd.f32 %v3396, %v3397
    %v3399 = vsel %vm569, %v3331, 0.0
    %v3400 = vadd.f32 %v3398, %v3399
    %v3401 = vsel %vm569, %v3332, 0.0
    %v3402 = vadd.f32 %v3400, %v3401
    %v3403 = vsel %vm569, %v3333, 0.0
    %v3404 = vadd.f32 %v3402, %v3403
    %v3405 = vsel %vm569, %v3334, 0.0
    %v3406 = vadd.f32 %v3404, %v3405
    %v3407 = vsel %vm569, %v3335, 0.0
    %v3408 = vadd.f32 %v3406, %v3407
    %v3409 = vsel %vm569, %v3336, 0.0
    %v3410 = vadd.f32 %v3408, %v3409
    %v3411 = vsel %vm569, %v3337, 0.0
    %v3412 = vadd.f32 %v3410, %v3411
    %v3413 = vsel %vm569, %v3338, 0.0
    %v3414 = vadd.f32 %v3412, %v3413
    %v3415 = vsel %vm569, %v3339, 0.0
    %v3416 = vadd.f32 %v3414, %v3415
    %v3417 = vsel %vm569, %v3340, 0.0
    %v3418 = vadd.f32 %v3416, %v3417
    %v3419 = vsel %vm569, %v3341, 0.0
    %v3420 = vadd.f32 %v3418, %v3419
    %v3421 = vsel %vm569, %v3342, 0.0
    %v3422 = vadd.f32 %v3420, %v3421
    %v3423 = vsel %vm569, %v3343, 0.0
    %v3424 = vadd.f32 %v3422, %v3423
    %v3425 = vsel %vm569, %v3344, 0.0
    %v3426 = vadd.f32 %v3424, %v3425
    %v3427 = vsel %vm569, %v3345, 0.0
    %v3428 = vadd.f32 %v3426, %v3427
    %v3429 = vsel %vm569, %v3346, 0.0
    %v3430 = vadd.f32 %v3428, %v3429
    %v3431 = vsel %vm569, %v3347, 0.0
    %v3432 = vadd.f32 %v3430, %v3431
    %v3433 = vsel %vm569, %v3348, 0.0
    %v3434 = vadd.f32 %v3432, %v3433
    %v3435 = vsel %vm569, %v3349, 0.0
    %v3436 = vadd.f32 %v3434, %v3435
    %v3437 = vsel %vm569, %v3350, 0.0
    %v3438 = vadd.f32 %v3436, %v3437
    %v3439 = vsel %vm569, %v3351, 0.0
    %v3440 = vadd.f32 %v3438, %v3439
    %v3441 = vsel %vm569, %v3352, 0.0
    %v3442 = vadd.f32 %v3440, %v3441
    %v3443 = vsel %vm569, %v3353, 0.0
    %v3444 = vadd.f32 %v3442, %v3443
    %v3445 = vsel %vm569, %v3354, 0.0
    %v3446 = vadd.f32 %v3444, %v3445
    %v3447 = vsel %vm569, %v3355, 0.0
    %v3448 = vadd.f32 %v3446, %v3447
    %v3449 = vsel %vm569, %v3356, 0.0
    %v3450 = vadd.f32 %v3448, %v3449
    %v3451 = vsel %vm569, %v3357, 0.0
    %v3452 = vadd.f32 %v3450, %v3451
    %v3453 = vrot.slane %v3452, 4
    %v3454 = vadd.f32 %v3452, %v3453
    %v3455 = vrot.slane %v3454, 2
    %v3456 = vadd.f32 %v3454, %v3455
    %v3457 = vrot.slane %v3456, 1
    %v3458 = vadd.f32 %v3456, %v3457
    %v3459 = vmul.f32 %v3458, %v1323
    %v3460 = vsel %vm569, %v3358, 0.0
    %v3461 = vsel %vm569, %v3359, 0.0
    %v3462 = vadd.f32 %v3460, %v3461
    %v3463 = vsel %vm569, %v3360, 0.0
    %v3464 = vadd.f32 %v3462, %v3463
    %v3465 = vsel %vm569, %v3361, 0.0
    %v3466 = vadd.f32 %v3464, %v3465
    %v3467 = vsel %vm569, %v3362, 0.0
    %v3468 = vadd.f32 %v3466, %v3467
    %v3469 = vsel %vm569, %v3363, 0.0
    %v3470 = vadd.f32 %v3468, %v3469
    %v3471 = vsel %vm569, %v3364, 0.0
    %v3472 = vadd.f32 %v3470, %v3471
    %v3473 = vsel %vm569, %v3365, 0.0
    %v3474 = vadd.f32 %v3472, %v3473
    %v3475 = vsel %vm569, %v3366, 0.0
    %v3476 = vadd.f32 %v3474, %v3475
    %v3477 = vsel %vm569, %v3367, 0.0
    %v3478 = vadd.f32 %v3476, %v3477
    %v3479 = vsel %vm569, %v3368, 0.0
    %v3480 = vadd.f32 %v3478, %v3479
    %v3481 = vsel %vm569, %v3369, 0.0
    %v3482 = vadd.f32 %v3480, %v3481
    %v3483 = vsel %vm569, %v3370, 0.0
    %v3484 = vadd.f32 %v3482, %v3483
    %v3485 = vsel %vm569, %v3371, 0.0
    %v3486 = vadd.f32 %v3484, %v3485
    %v3487 = vsel %vm569, %v3372, 0.0
    %v3488 = vadd.f32 %v3486, %v3487
    %v3489 = vsel %vm569, %v3373, 0.0
    %v3490 = vadd.f32 %v3488, %v3489
    %v3491 = vsel %vm569, %v3374, 0.0
    %v3492 = vadd.f32 %v3490, %v3491
    %v3493 = vsel %vm569, %v3375, 0.0
    %v3494 = vadd.f32 %v3492, %v3493
    %v3495 = vsel %vm569, %v3376, 0.0
    %v3496 = vadd.f32 %v3494, %v3495
    %v3497 = vsel %vm569, %v3377, 0.0
    %v3498 = vadd.f32 %v3496, %v3497
    %v3499 = vsel %vm569, %v3378, 0.0
    %v3500 = vadd.f32 %v3498, %v3499
    %v3501 = vsel %vm569, %v3379, 0.0
    %v3502 = vadd.f32 %v3500, %v3501
    %v3503 = vsel %vm569, %v3380, 0.0
    %v3504 = vadd.f32 %v3502, %v3503
    %v3505 = vsel %vm569, %v3381, 0.0
    %v3506 = vadd.f32 %v3504, %v3505
    %v3507 = vsel %vm569, %v3382, 0.0
    %v3508 = vadd.f32 %v3506, %v3507
    %v3509 = vsel %vm569, %v3383, 0.0
    %v3510 = vadd.f32 %v3508, %v3509
    %v3511 = vsel %vm569, %v3384, 0.0
    %v3512 = vadd.f32 %v3510, %v3511
    %v3513 = vsel %vm569, %v3385, 0.0
    %v3514 = vadd.f32 %v3512, %v3513
    %v3515 = vsel %vm569, %v3386, 0.0
    %v3516 = vadd.f32 %v3514, %v3515
    %v3517 = vsel %vm569, %v3387, 0.0
    %v3518 = vadd.f32 %v3516, %v3517
    %v3519 = vsel %vm569, %v3388, 0.0
    %v3520 = vadd.f32 %v3518, %v3519
    %v3521 = vsel %vm569, %v3389, 0.0
    %v3522 = vadd.f32 %v3520, %v3521
    %v3523 = vrot.slane %v3522, 4
    %v3524 = vadd.f32 %v3522, %v3523
    %v3525 = vrot.slane %v3524, 2
    %v3526 = vadd.f32 %v3524, %v3525
    %v3527 = vrot.slane %v3526, 1
    %v3528 = vadd.f32 %v3526, %v3527
    %v3529 = vmul.f32 %v3528, %v1323
    %v3530 = vsel %vm1395, %v3459, %v3529
    %v3531 = vpack.c.bf16 %v3530, %v3530
    %v3533 = vsel %vm569, %v3531, 0
    %3535 = vmatpush.bf16.msra.mxu0 0
    %3536 = vmatpush.bf16.msra.mxu0 0
    %3537 = vmatpush.bf16.msra.mxu0 0
    %3538 = vmatpush.bf16.msra.mxu0 0
    %3539 = vmatpush.bf16.msra.mxu0 %v1442
    %3540 = vmatpush.bf16.msra.mxu0 %v1440
    %3541 = vmatpush.bf16.msra.mxu0 %v1438
    %3542 = vmatpush.bf16.msra.mxu0 %v1436
    %3543 = vmatmul.bf16.gmra.mxu0 %v3533
    %v3544 = vpop.f32.mrf.mxu0
    %v3545 = vadd.f32 %v1408, %v3544
    %v3546 = vpop.f32.mrf.mxu0
    %3547 = vdwg.mxu0
    %3548 = vmatpush.bf16.msra.mxu0 0
    %3549 = vmatpush.bf16.msra.mxu0 0
    %3550 = vmatpush.bf16.msra.mxu0 0
    %3551 = vmatpush.bf16.msra.mxu0 0
    %3552 = vmatpush.bf16.msra.mxu0 %v1443
    %3553 = vmatpush.bf16.msra.mxu0 %v1441
    %3554 = vmatpush.bf16.msra.mxu0 %v1439
    %3555 = vmatpush.bf16.msra.mxu0 %v1437
    %3556 = vmatmul.bf16.gmra.mxu0 %v3533
    %v3557 = vpop.f32.mrf.mxu0
    %v3558 = vadd.f32 %v1409, %v3557
    %v3559 = vpop.f32.mrf.mxu0
    %3560 = vdwg.mxu0
    %v3561 = vsel %vm1483, %v3545, 0.0
    %v3562 = vrot.slane %v3561, 4
    %v3563 = vadd.f32 %v3561, %v3562
    %v3564 = vrot.slane %v3563, 2
    %v3565 = vadd.f32 %v3563, %v3564
    %v3566 = vrot.slane %v3565, 1
    %v3567 = vadd.f32 %v3565, %v3566
    %v3568 = vsel %vm1483, %v3558, 0.0
    %v3569 = vrot.slane %v3568, 4
    %v3570 = vadd.f32 %v3568, %v3569
    %v3571 = vrot.slane %v3570, 2
    %v3572 = vadd.f32 %v3570, %v3571
    %v3573 = vrot.slane %v3572, 1
    %v3574 = vadd.f32 %v3572, %v3573
    %v3575 = vmul.f32 %v3567, %v1504
    %v3576 = vmul.f32 %v3574, %v1504
    %v3577 = vmul.f32 %v3545, %v3545
    %v3578 = vmul.f32 %v3558, %v3558
    %v3579 = vsel %vm1483, %v3577, 0.0
    %v3580 = vrot.slane %v3579, 4
    %v3581 = vadd.f32 %v3579, %v3580
    %v3582 = vrot.slane %v3581, 2
    %v3583 = vadd.f32 %v3581, %v3582
    %v3584 = vrot.slane %v3583, 1
    %v3585 = vadd.f32 %v3583, %v3584
    %v3586 = vsel %vm1483, %v3578, 0.0
    %v3587 = vrot.slane %v3586, 4
    %v3588 = vadd.f32 %v3586, %v3587
    %v3589 = vrot.slane %v3588, 2
    %v3590 = vadd.f32 %v3588, %v3589
    %v3591 = vrot.slane %v3590, 1
    %v3592 = vadd.f32 %v3590, %v3591
    %v3593 = vmul.f32 %v3585, %v1504
    %v3594 = vmul.f32 %v3592, %v1504
    %v3595 = vmul.f32 %v3575, %v3575
    %v3596 = vmul.f32 %v3576, %v3576
    %v3597 = vsub.f32 %v3593, %v3595
    %v3598 = vsub.f32 %v3594, %v3596
    %v3599 = vsub.f32 %v3545, %v3575
    %v3600 = vsub.f32 %v3558, %v3576
    %v3601 = vadd.f32 %v3597, 1e-05
    %v3602 = vadd.f32 %v3598, 1e-05
    %v3603 = vrsqrt.pop %v3601
    %v3604 = vmul.f32 %v3603, %v3601
    %v3605 = vmul.f32 %v3604, %v3603
    %v3606 = vmul.f32 0.5, %v3605
    %v3607 = vsub.f32 1.5, %v3606
    %v3608 = vmul.f32 %v3603, %v3607
    %vm3609 = vweird.f32 %v3601
    %vm3610 = vweird.f32 %v3603
    %vm3611 = vmor %vm3609, %vm3610
    %v3612 = vsel %vm3611, %v3603, %v3608
    %v3613 = vrsqrt.pop %v3602
    %v3614 = vmul.f32 %v3613, %v3602
    %v3615 = vmul.f32 %v3614, %v3613
    %v3616 = vmul.f32 0.5, %v3615
    %v3617 = vsub.f32 1.5, %v3616
    %v3618 = vmul.f32 %v3613, %v3617
    %vm3619 = vweird.f32 %v3602
    %vm3620 = vweird.f32 %v3613
    %vm3621 = vmor %vm3619, %vm3620
    %v3622 = vsel %vm3621, %v3613, %v3618
    %v3623 = vmul.f32 %v3599, %v3612
    %v3624 = vmul.f32 %v3600, %v3622
    %v3625 = vmul.f32 %v3623, %v1556
    %v3626 = vmul.f32 %v3624, %v1557
    %v3627 = vadd.f32 %v3625, %v1563
    %v3628 = vadd.f32 %v3626, %v1564
    %v3629 = vmax.f32 %v3627, 0.0
    %v3630 = vmax.f32 %v3628, 0.0
    %v3631 = vpack.c.bf16 %v3629, %v3629
    %v3632 = vpack.c.bf16 %v3630, %v3630
    %3633 = vmatpush.bf16.msra.mxu0 %v1721
    %3634 = vmatpush.bf16.msra.mxu0 %v1719
    %3635 = vmatpush.bf16.msra.mxu0 %v1717
    %3636 = vmatpush.bf16.msra.mxu0 %v1715
    %3637 = vmatpush.bf16.msra.mxu0 %v1713
    %3638 = vmatpush.bf16.msra.mxu0 %v1711
    %3639 = vmatpush.bf16.msra.mxu0 %v1709
    %3640 = vmatpush.bf16.msra.mxu0 %v1707
    %3641 = vmatmul.bf16.gmra.mxu0 %v3631
    %v3642 = vpop.f32.mrf.mxu0
    %v3643 = vadd.f32 %v1607, %v3642
    %v3644 = vpop.f32.mrf.mxu0
    %3645 = vdwg.mxu0
    %3646 = vmatpush.bf16.msra.mxu0 %v1737
    %3647 = vmatpush.bf16.msra.mxu0 %v1735
    %3648 = vmatpush.bf16.msra.mxu0 %v1733
    %3649 = vmatpush.bf16.msra.mxu0 %v1731
    %3650 = vmatpush.bf16.msra.mxu0 %v1729
    %3651 = vmatpush.bf16.msra.mxu0 %v1727
    %3652 = vmatpush.bf16.msra.mxu0 %v1725
    %3653 = vmatpush.bf16.msra.mxu0 %v1723
    %3654 = vmatmul.bf16.gmra.mxu0 %v3632
    %v3655 = vpop.f32.mrf.mxu0
    %v3656 = vadd.f32 %v3643, %v3655
    %v3657 = vpop.f32.mrf.mxu0
    %3658 = vdwg.mxu0
    %3659 = vmatpush.bf16.msra.mxu0 %v1722
    %3660 = vmatpush.bf16.msra.mxu0 %v1720
    %3661 = vmatpush.bf16.msra.mxu0 %v1718
    %3662 = vmatpush.bf16.msra.mxu0 %v1716
    %3663 = vmatpush.bf16.msra.mxu0 %v1714
    %3664 = vmatpush.bf16.msra.mxu0 %v1712
    %3665 = vmatpush.bf16.msra.mxu0 %v1710
    %3666 = vmatpush.bf16.msra.mxu0 %v1708
    %3667 = vmatmul.bf16.gmra.mxu0 %v3631
    %v3668 = vpop.f32.mrf.mxu0
    %v3669 = vadd.f32 %v1608, %v3668
    %v3670 = vpop.f32.mrf.mxu0
    %3671 = vdwg.mxu0
    %3672 = vmatpush.bf16.msra.mxu0 %v1738
    %3673 = vmatpush.bf16.msra.mxu0 %v1736
    %3674 = vmatpush.bf16.msra.mxu0 %v1734
    %3675 = vmatpush.bf16.msra.mxu0 %v1732
    %3676 = vmatpush.bf16.msra.mxu0 %v1730
    %3677 = vmatpush.bf16.msra.mxu0 %v1728
    %3678 = vmatpush.bf16.msra.mxu0 %v1726
    %3679 = vmatpush.bf16.msra.mxu0 %v1724
    %3680 = vmatmul.bf16.gmra.mxu0 %v3632
    %v3681 = vpop.f32.mrf.mxu0
    %v3682 = vadd.f32 %v3669, %v3681
    %v3683 = vpop.f32.mrf.mxu0
    %3684 = vdwg.mxu0
    %v3685 = vsel %vm1483, %v3656, 0.0
    %v3686 = vrot.slane %v3685, 4
    %v3687 = vadd.f32 %v3685, %v3686
    %v3688 = vrot.slane %v3687, 2
    %v3689 = vadd.f32 %v3687, %v3688
    %v3690 = vrot.slane %v3689, 1
    %v3691 = vadd.f32 %v3689, %v3690
    %v3692 = vsel %vm1483, %v3682, 0.0
    %v3693 = vrot.slane %v3692, 4
    %v3694 = vadd.f32 %v3692, %v3693
    %v3695 = vrot.slane %v3694, 2
    %v3696 = vadd.f32 %v3694, %v3695
    %v3697 = vrot.slane %v3696, 1
    %v3698 = vadd.f32 %v3696, %v3697
    %v3699 = vmul.f32 %v3691, %v1504
    %v3700 = vmul.f32 %v3698, %v1504
    %v3701 = vmul.f32 %v3656, %v3656
    %v3702 = vmul.f32 %v3682, %v3682
    %v3703 = vsel %vm1483, %v3701, 0.0
    %v3704 = vrot.slane %v3703, 4
    %v3705 = vadd.f32 %v3703, %v3704
    %v3706 = vrot.slane %v3705, 2
    %v3707 = vadd.f32 %v3705, %v3706
    %v3708 = vrot.slane %v3707, 1
    %v3709 = vadd.f32 %v3707, %v3708
    %v3710 = vsel %vm1483, %v3702, 0.0
    %v3711 = vrot.slane %v3710, 4
    %v3712 = vadd.f32 %v3710, %v3711
    %v3713 = vrot.slane %v3712, 2
    %v3714 = vadd.f32 %v3712, %v3713
    %v3715 = vrot.slane %v3714, 1
    %v3716 = vadd.f32 %v3714, %v3715
    %v3717 = vmul.f32 %v3709, %v1504
    %v3718 = vmul.f32 %v3716, %v1504
    %v3719 = vmul.f32 %v3699, %v3699
    %v3720 = vmul.f32 %v3700, %v3700
    %v3721 = vsub.f32 %v3717, %v3719
    %v3722 = vsub.f32 %v3718, %v3720
    %v3723 = vsub.f32 %v3656, %v3699
    %v3724 = vsub.f32 %v3682, %v3700
    %v3725 = vadd.f32 %v3721, 1e-05
    %v3726 = vadd.f32 %v3722, 1e-05
    %v3727 = vrsqrt.pop %v3725
    %v3728 = vmul.f32 %v3727, %v3725
    %v3729 = vmul.f32 %v3728, %v3727
    %v3730 = vmul.f32 0.5, %v3729
    %v3731 = vsub.f32 1.5, %v3730
    %v3732 = vmul.f32 %v3727, %v3731
    %vm3733 = vweird.f32 %v3725
    %vm3734 = vweird.f32 %v3727
    %vm3735 = vmor %vm3733, %vm3734
    %v3736 = vsel %vm3735, %v3727, %v3732
    %v3737 = vrsqrt.pop %v3726
    %v3738 = vmul.f32 %v3737, %v3726
    %v3739 = vmul.f32 %v3738, %v3737
    %v3740 = vmul.f32 0.5, %v3739
    %v3741 = vsub.f32 1.5, %v3740
    %v3742 = vmul.f32 %v3737, %v3741
    %vm3743 = vweird.f32 %v3726
    %vm3744 = vweird.f32 %v3737
    %vm3745 = vmor %vm3743, %vm3744
    %v3746 = vsel %vm3745, %v3737, %v3742
    %v3747 = vmul.f32 %v3723, %v3736
    %v3748 = vmul.f32 %v3724, %v3746
    %v3749 = vmul.f32 %v3747, %v1890
    %v3750 = vmul.f32 %v3748, %v1891
    %v3751 = vadd.f32 %v3749, %v1897
    %v3752 = vadd.f32 %v3750, %v1898
    %v3753 = vpack.c.bf16 %v3751, %v3751
    %v3754 = vpack.c.bf16 %v3752, %v3752
    %3755 = vmatpush.bf16.msra.mxu0 %v2012
    %3756 = vmatpush.bf16.msra.mxu0 %v2011
    %3757 = vmatpush.bf16.msra.mxu0 %v2010
    %3758 = vmatpush.bf16.msra.mxu0 %v2009
    %3759 = vmatpush.bf16.msra.mxu0 %v2008
    %3760 = vmatpush.bf16.msra.mxu0 %v2007
    %3761 = vmatpush.bf16.msra.mxu0 %v2006
    %3762 = vmatpush.bf16.msra.mxu0 %v2005
    %3763 = vmatmul.bf16.gmra.mxu0 %v3753
    %v3764 = vpop.f32.mrf.mxu0
    %v3765 = vadd.f32 %v1939, %v3764
    %v3766 = vpop.f32.mrf.mxu0
    %3767 = vdwg.mxu0
    %3768 = vmatpush.bf16.msra.mxu0 %v2020
    %3769 = vmatpush.bf16.msra.mxu0 %v2019
    %3770 = vmatpush.bf16.msra.mxu0 %v2018
    %3771 = vmatpush.bf16.msra.mxu0 %v2017
    %3772 = vmatpush.bf16.msra.mxu0 %v2016
    %3773 = vmatpush.bf16.msra.mxu0 %v2015
    %3774 = vmatpush.bf16.msra.mxu0 %v2014
    %3775 = vmatpush.bf16.msra.mxu0 %v2013
    %3776 = vmatmul.bf16.gmra.mxu0 %v3754
    %v3777 = vpop.f32.mrf.mxu0
    %v3778 = vadd.f32 %v3765, %v3777
    %v3779 = vpop.f32.mrf.mxu0
    %3780 = vdwg.mxu0
    %v3781 = vsel %vm1483, %v3778, 0.0
    %v3782 = vrot.slane %v3781, 4
    %v3783 = vadd.f32 %v3781, %v3782
    %v3784 = vrot.slane %v3783, 2
    %v3785 = vadd.f32 %v3783, %v3784
    %v3786 = vrot.slane %v3785, 1
    %v3787 = vadd.f32 %v3785, %v3786
    %v3788 = vmul.f32 %v3787, %v1504
    %v3789 = vmul.f32 %v3778, %v3778
    %v3790 = vsel %vm1483, %v3789, 0.0
    %v3791 = vrot.slane %v3790, 4
    %v3792 = vadd.f32 %v3790, %v3791
    %v3793 = vrot.slane %v3792, 2
    %v3794 = vadd.f32 %v3792, %v3793
    %v3795 = vrot.slane %v3794, 1
    %v3796 = vadd.f32 %v3794, %v3795
    %v3797 = vmul.f32 %v3796, %v1504
    %v3798 = vmul.f32 %v3788, %v3788
    %v3799 = vsub.f32 %v3797, %v3798
    %v3800 = vsub.f32 %v3778, %v3788
    %v3801 = vadd.f32 %v3799, 1e-05
    %v3802 = vrsqrt.pop %v3801
    %v3803 = vmul.f32 %v3802, %v3801
    %v3804 = vmul.f32 %v3803, %v3802
    %v3805 = vmul.f32 0.5, %v3804
    %v3806 = vsub.f32 1.5, %v3805
    %v3807 = vmul.f32 %v3802, %v3806
    %vm3808 = vweird.f32 %v3801
    %vm3809 = vweird.f32 %v3802
    %vm3810 = vmor %vm3808, %vm3809
    %v3811 = vsel %vm3810, %v3802, %v3807
    %v3812 = vmul.f32 %v3800, %v3811
    %v3813 = vmul.f32 %v3812, %v2098
    %v3814 = vadd.f32 %v3813, %v2102
    %v3815 = vmax.f32 %v3814, 0.0
    %v3816 = vpack.c.bf16 %v3815, %v3815
    %3817 = vmatpush.bf16.msra.mxu0 %v2191
    %3818 = vmatpush.bf16.msra.mxu0 %v2189
    %3819 = vmatpush.bf16.msra.mxu0 %v2187
    %3820 = vmatpush.bf16.msra.mxu0 %v2185
    %3821 = vmatpush.bf16.msra.mxu0 %v2183
    %3822 = vmatpush.bf16.msra.mxu0 %v2181
    %3823 = vmatpush.bf16.msra.mxu0 %v2179
    %3824 = vmatpush.bf16.msra.mxu0 %v2177
    %3825 = vmatmul.bf16.gmra.mxu0 %v3816
    %v3826 = vpop.f32.mrf.mxu0
    %v3827 = vadd.f32 %v2125, %v3826
    %v3828 = vpop.f32.mrf.mxu0
    %3829 = vdwg.mxu0
    %3830 = vmatpush.bf16.msra.mxu0 %v2192
    %3831 = vmatpush.bf16.msra.mxu0 %v2190
    %3832 = vmatpush.bf16.msra.mxu0 %v2188
    %3833 = vmatpush.bf16.msra.mxu0 %v2186
    %3834 = vmatpush.bf16.msra.mxu0 %v2184
    %3835 = vmatpush.bf16.msra.mxu0 %v2182
    %3836 = vmatpush.bf16.msra.mxu0 %v2180
    %3837 = vmatpush.bf16.msra.mxu0 %v2178
    %3838 = vmatmul.bf16.gmra.mxu0 %v3816
    %v3839 = vpop.f32.mrf.mxu0
    %v3840 = vadd.f32 %v2126, %v3839
    %v3841 = vpop.f32.mrf.mxu0
    %3842 = vdwg.mxu0
    %v3843 = vmul.f32 %v2219, %v2219
    %v3844 = vmul.f32 %v2232, %v2232
    %v3845 = vsel %vm1483, %v3843, 0.0
    %v3846 = vsel %vm1483, %v3844, 0.0
    %v3847 = vadd.f32 %v3845, %v3846
    %3848 = vadd.xlane.f32.xlu0 %v3847
    %v3849 = vpop.xlane.xlu0 %3848
    %v3850 = vmax.f32 %v3849, 1e-24
    %v3851 = vrsqrt.pop %v3850
    %v3852 = vmul.f32 %v3851, %v3850
    %v3853 = vmul.f32 %v3852, %v3851
    %v3854 = vmul.f32 0.5, %v3853
    %v3855 = vsub.f32 1.5, %v3854
    %v3856 = vmul.f32 %v3851, %v3855
    %vm3857 = vweird.f32 %v3850
    %vm3858 = vweird.f32 %v3851
    %vm3859 = vmor %vm3857, %vm3858
    %v3860 = vsel %vm3859, %v3851, %v3856
    %v3861 = vmul.f32 %v2219, %v3860
    %v3862 = vmul.f32 %v2232, %v3860
    %v3863 = vmul.f32 %v3751, %v3751
    %v3864 = vmul.f32 %v3752, %v3752
    %v3865 = vsel %vm1483, %v3863, 0.0
    %v3866 = vsel %vm1483, %v3864, 0.0
    %v3867 = vadd.f32 %v3865, %v3866
    %3868 = vadd.xlane.f32.xlu0 %v3867
    %v3869 = vpop.xlane.xlu0 %3868
    %v3870 = vmax.f32 %v3869, 1e-24
    %v3871 = vrsqrt.pop %v3870
    %v3872 = vmul.f32 %v3871, %v3870
    %v3873 = vmul.f32 %v3872, %v3871
    %v3874 = vmul.f32 0.5, %v3873
    %v3875 = vsub.f32 1.5, %v3874
    %v3876 = vmul.f32 %v3871, %v3875
    %vm3877 = vweird.f32 %v3870
    %vm3878 = vweird.f32 %v3871
    %vm3879 = vmor %vm3877, %vm3878
    %v3880 = vsel %vm3879, %v3871, %v3876
    %v3881 = vmul.f32 %v3751, %v3880
    %v3882 = vmul.f32 %v3752, %v3880
    %v3883 = vmul.f32 %v3861, %v3881
    %v3884 = vmul.f32 %v3862, %v3882
    %v3885 = vsel %vm1483, %v3883, 0.0
    %v3886 = vsel %vm1483, %v3884, 0.0
    %v3887 = vadd.f32 %v3885, %v3886
    %3888 = vadd.xlane.f32.xlu0 %v3887
    %v3889 = vpop.xlane.xlu0 %3888
    %v3890 = vmul.f32 %v3827, %v3827
    %v3891 = vmul.f32 %v3840, %v3840
    %v3892 = vsel %vm1483, %v3890, 0.0
    %v3893 = vsel %vm1483, %v3891, 0.0
    %v3894 = vadd.f32 %v3892, %v3893
    %3895 = vadd.xlane.f32.xlu0 %v3894
    %v3896 = vpop.xlane.xlu0 %3895
    %v3897 = vmax.f32 %v3896, 1e-24
    %v3898 = vrsqrt.pop %v3897
    %v3899 = vmul.f32 %v3898, %v3897
    %v3900 = vmul.f32 %v3899, %v3898
    %v3901 = vmul.f32 0.5, %v3900
    %v3902 = vsub.f32 1.5, %v3901
    %v3903 = vmul.f32 %v3898, %v3902
    %vm3904 = vweird.f32 %v3897
    %vm3905 = vweird.f32 %v3898
    %vm3906 = vmor %vm3904, %vm3905
    %v3907 = vsel %vm3906, %v3898, %v3903
    %v3908 = vmul.f32 %v3827, %v3907
    %v3909 = vmul.f32 %v3840, %v3907
    %v3910 = vmul.f32 %v1901, %v1901
    %v3911 = vmul.f32 %v1902, %v1902
    %v3912 = vsel %vm1483, %v3910, 0.0
    %v3913 = vsel %vm1483, %v3911, 0.0
    %v3914 = vadd.f32 %v3912, %v3913
    %3915 = vadd.xlane.f32.xlu0 %v3914
    %v3916 = vpop.xlane.xlu0 %3915
    %v3917 = vmax.f32 %v3916, 1e-24
    %v3918 = vrsqrt.pop %v3917
    %v3919 = vmul.f32 %v3918, %v3917
    %v3920 = vmul.f32 %v3919, %v3918
    %v3921 = vmul.f32 0.5, %v3920
    %v3922 = vsub.f32 1.5, %v3921
    %v3923 = vmul.f32 %v3918, %v3922
    %vm3924 = vweird.f32 %v3917
    %vm3925 = vweird.f32 %v3918
    %vm3926 = vmor %vm3924, %vm3925
    %v3927 = vsel %vm3926, %v3918, %v3923
    %v3928 = vmul.f32 %v1901, %v3927
    %v3929 = vmul.f32 %v1902, %v3927
    %v3930 = vmul.f32 %v3908, %v3928
    %v3931 = vmul.f32 %v3909, %v3929
    %v3932 = vsel %vm1483, %v3930, 0.0
    %v3933 = vsel %vm1483, %v3931, 0.0
    %v3934 = vadd.f32 %v3932, %v3933
    %3935 = vadd.xlane.f32.xlu0 %v3934
    %v3936 = vpop.xlane.xlu0 %3935
    %v3937 = vadd.f32 %v3889, %v3936
    %v3938 = vsel %vm1483, %v3937, 0.0
    %v3939 = vrot.slane %v3938, 4
    %v3940 = vadd.f32 %v3938, %v3939
    %v3941 = vrot.slane %v3940, 2
    %v3942 = vadd.f32 %v3940, %v3941
    %v3943 = vrot.slane %v3942, 1
    %v3944 = vadd.f32 %v3942, %v3943
    %v3945 = vmul.f32 %v3944, -0.25
    %vm3946 = vcmask 0
    %3947 = vst.msk [vmem:[#allocation2] sm:$0x1] %vm3946, %v3945
    // Predicated region
    $region74: #{simsiam_forward.1} parent=1 // pred_check
      _
    $region75: #{simsiam_forward.1} parent=1 // pred_check_branch
      %3949 = sbr.rel (0) target = $region77
    $region76: #{simsiam_forward.1} parent=1 // pred_region
      %3951 = vsyncadd [#allocation3], 0
      %s3953 = sshll.u32 [#allocation2], 4
      %s3954 = int_to_ptr.vmem [resolvable:$true] %s3953
      %s3955 = sshll.u32 %s18, 4
      %s3956 = int_to_ptr.hbm [resolvable:$true] %s3955
      %3958 = dma.vmem_to_hbm [thread:$0]  %s3954, 16, %s3956, [#allocation3]
    $region77: #{simsiam_forward.1} parent=1 // pred_fallthru
      _
    // Predicated region
    $region78: #{simsiam_forward.1} parent=1 // pred_check
      _
    $region79: #{simsiam_forward.1} parent=1 // pred_check_branch
      %3960 = sbr.rel (0) target = $region81
    $region80: #{simsiam_forward.1} parent=1 // pred_region
      %3962 = dma.done [#allocation3], 16
    $region81: #{simsiam_forward.1} parent=1 // pred_fallthru
      _
    %3963 = vsyncpa [#allocation3], 1

</llo_original>
